<compile_context>
chip_gen: v5e
topology: v5e:2x2
jax: 0.10.0
libtpu: 0.0.40
codegen_flags: <defaults>
</compile_context>

<pallas_src>
import functools

import jax
import jax.numpy as jnp
from jax.experimental import pallas as pl
from jax.experimental.pallas import tpu as pltpu

LN_EPS = 1e-5  # PyTorch nn.LayerNorm default


def _layer_norm(x, gamma, beta):
    mean = jnp.mean(x, axis=-1, keepdims=True)
    var = jnp.mean(jnp.square(x - mean), axis=-1, keepdims=True)
    return (x - mean) * jax.lax.rsqrt(var + LN_EPS) * gamma + beta


def _gelu_tanh(x):
    # tanh-approx GELU: single EUP tanh instead of the erf polynomial (~1e-3 max abs vs exact nn.GELU).
    c = 0.7978845608028654  # sqrt(2/pi)
    return 0.5 * x * (1.0 + jnp.tanh(c * (x + 0.044715 * x * x * x)))


def _device_kind():
    try:
        return jax.devices()[0].device_kind.lower()
    except Exception:
        return ""


def _vmem_limit_bytes(kind):
    # v7x: 64 MiB/TC physical -> request ~48 MiB so Mosaic keeps headroom for its own scratch/spill.
    # v4/v5e/v5p/v6e: 128 MiB physical -> use most of it (larger S / q_block head-room).
    if "v7" in kind:
        return 48 * 1024 * 1024
    if "v4" in kind or "v5" in kind or "v6" in kind:
        return 96 * 1024 * 1024
    return 32 * 1024 * 1024  # unknown generation: conservative


def _default_q_block(S, kind):
    # v6e (256-wide MXU, 128 MiB VMEM) benefits from TQ=256; v5e MXU is 128-wide and v7x only has 64 MiB VMEM,
    # so 128 is the default there (halves the double-buffered attention-weights output block).
    cands = (256, 128) if "v6" in kind else (128,)
    for c in cands:
        if S % c == 0:
            return c
    return S


def global_workspace_kernel(num_heads, head_dim, q_block, kv_chunk, emit_attn,
                            x_ref,
                            g1_ref, b1n_ref, g2_ref, b2n_ref,
                            wq_ref, bq_ref, wkv_ref, bkv_ref,
                            w1_ref, bf1_ref, w2_ref, bf2_ref,
                            *rest):
    if emit_attn:
        out_ref, attn_ref, xn_scr, k_scr, v_scr, ao_scr = rest
    else:
        out_ref, xn_scr, k_scr, v_scr, ao_scr = rest
        attn_ref = None

    nh, hd = num_heads, head_dim
    hidden = nh * hd
    S = k_scr.shape[0]
    qi = pl.program_id(1)

    g1 = g1_ref[...]
    b1 = b1n_ref[...]
    x_b = x_ref.at[0]  # (S, H) view of this batch element

    # ---- once per batch element (qi == 0): chunked LN1 + fused K/V projection ---------------------------
    # Writes LN1(x), K and V for the FULL sequence into persistent lane-dense (S, H) VMEM scratch that every
    # q block reuses.  Relies on the q grid axis being sequential ("arbitrary") and visiting qi==0 first.
    @pl.when(qi == 0)
    def _():
        def chunk_body(ci, carry):
            row = pl.multiple_of(ci * kv_chunk, kv_chunk)
            x_c = x_b[pl.ds(row, kv_chunk), :].astype(jnp.float32)                   # (C, H)
            xn_c = _layer_norm(x_c, g1, b1).astype(jnp.bfloat16)                     # (C, H) bf16
            xn_scr[pl.ds(row, kv_chunk), :] = xn_c
            kv = jnp.dot(xn_c, wkv_ref[...],
                         preferred_element_type=jnp.float32) + bkv_ref[...]          # (C, 2H)
            kvb = kv.astype(jnp.bfloat16)
            k_scr[pl.ds(row, kv_chunk), :] = kvb[:, :hidden]                         # lane-dense store
            v_scr[pl.ds(row, kv_chunk), :] = kvb[:, hidden:]                         # lane-dense store
            return carry

        jax.lax.fori_loop(0, S // kv_chunk, chunk_body, 0)

    # ---- per query block: Q projection (softmax scale pre-folded into wq/bq) ----------------------------
    row0 = pl.multiple_of(qi * q_block, q_block)
    xn_q = xn_scr[pl.ds(row0, q_block), :]                                           # (TQ, H) bf16 (cached LN1)
    qp = jnp.dot(xn_q, wq_ref[...], preferred_element_type=jnp.float32) + bq_ref[...]
    qpb = qp.astype(jnp.bfloat16)

    # ---- attention: per-head loop bounds the live f32 score tensor to (TQ, S) ---------------------------
    for h in range(nh):                                                              # static, small
        lo = h * hd
        q_h = qpb[:, lo:lo + hd]                                                     # (TQ, hd) bf16
        k_h = k_scr[:, lo:lo + hd]                                                   # (S, hd)  bf16
        v_h = v_scr[:, lo:lo + hd]                                                   # (S, hd)  bf16
        s = jax.lax.dot_general(q_h, k_h, (((1,), (1,)), ((), ())),
                                preferred_element_type=jnp.float32)                  # (TQ, S) = q @ k^T
        s = s - jnp.max(s, axis=-1, keepdims=True)
        p = jnp.exp(s)
        # approx reciprocal (EUP slot): emitted attention rows sum to 1 only to ~2^-12 relative accuracy.
        p = p * pl.reciprocal(jnp.sum(p, axis=-1, keepdims=True), approx=True)
        p_bf = p.astype(jnp.bfloat16)
        if attn_ref is not None:
            attn_ref[0, h] = p_bf                                                    # attention_weights output
        ao_scr[:, lo:lo + hd] = jnp.dot(p_bf, v_h, preferred_element_type=jnp.float32)
    attn_out = ao_scr[...]                                                           # (TQ, H) f32

    # ---- residual #1 (onto LN1 output, as in the PyTorch module), LN2, FF, residual #2 ------------------
    h1 = xn_q.astype(jnp.float32) + attn_out
    h1n = _layer_norm(h1, g2_ref[...], b2n_ref[...])
    f = jnp.dot(h1n.astype(jnp.bfloat16), w1_ref[...],
                preferred_element_type=jnp.float32) + bf1_ref[...]
    f = _gelu_tanh(f)
    f = jnp.dot(f.astype(jnp.bfloat16), w2_ref[...],
                preferred_element_type=jnp.float32) + bf2_ref[...]
    out_ref[0] = (h1 + f).astype(out_ref.dtype)


PARAM_ORDER = ["g1", "b1n", "g2", "b2n",
               "wq", "bq", "wkv", "bkv",
               "w1", "bf1", "w2", "bf2"]


def _weight_spec(shape, single_buffer):
    index_map = lambda b, q: (0, 0)
    if single_buffer:
        # Constant-index weights: one VMEM buffer instead of the default double-buffer.
        return pl.BlockSpec(shape, index_map, pipeline_mode=pl.Buffered(1))
    return pl.BlockSpec(shape, index_map)


def global_workspace(x, packed, *, num_heads, head_dim, q_block=None, kv_chunk=None,
                     return_attention_weights=True):
    """x: (B, S, H); packed: output of pack_params. Returns (out, attention_weights_or_None)."""
    B, S, H = x.shape
    assert H == num_heads * head_dim

    kind = _device_kind()
    if q_block is None:
        q_block = _default_q_block(S, kind)
    assert S % q_block == 0
    n_q = S // q_block

    if kv_chunk is None:
        kv_chunk = S
        for cand in (256, 128):
            if S % cand == 0:
                kv_chunk = cand
                break
    assert S % kv_chunk == 0

    x = x.astype(jnp.bfloat16)
    args = [x] + [packed[name] for name in PARAM_ORDER]

    out_shapes = [jax.ShapeDtypeStruct((B, S, H), jnp.bfloat16)]
    out_specs = [pl.BlockSpec((1, q_block, H), lambda b, q: (b, q, 0))]
    if return_attention_weights:
        out_shapes.append(jax.ShapeDtypeStruct((B, num_heads, S, S), jnp.bfloat16))
        out_specs.append(pl.BlockSpec((1, num_heads, q_block, S), lambda b, q: (b, 0, q, 0)))

    scratch_shapes = [
        pltpu.VMEM((S, H), jnp.bfloat16),        # cached LN1(x), reused by every q block
        pltpu.VMEM((S, H), jnp.bfloat16),        # K, lane-dense (per-head column slices)
        pltpu.VMEM((S, H), jnp.bfloat16),        # V, lane-dense
        pltpu.VMEM((q_block, H), jnp.float32),   # attention-output assembly
    ]

    flops = int(2 * B * S * (11 * H * H + 2 * S * H))                  # qkv + attn + ff matmuls
    transcendentals = int(B * S * (num_heads * S + 4 * H))             # exp + tanh
    bytes_accessed = int(
        x.size * 2
        + sum(int(packed[n].size) * packed[n].dtype.itemsize for n in PARAM_ORDER)
        + B * S * H * 2
        + (B * num_heads * S * S * 2 if return_attention_weights else 0))

    kernel = functools.partial(global_workspace_kernel, num_heads, head_dim,
                               q_block, kv_chunk, return_attention_weights)

    def _call(single_buffer_weights):
        in_specs = [pl.BlockSpec((1, S, H), lambda b, q: (b, 0, 0))]
        for name in PARAM_ORDER:
            in_specs.append(_weight_spec(packed[name].shape, single_buffer_weights))
        return pl.pallas_call(
            kernel,
            out_shape=tuple(out_shapes) if return_attention_weights else out_shapes[0],
            grid_spec=pltpu.PrefetchScalarGridSpec(
                num_scalar_prefetch=0,
                grid=(B, n_q),
                in_specs=in_specs,
                out_specs=tuple(out_specs) if return_attention_weights else out_specs[0],
                scratch_shapes=scratch_shapes),
            compiler_params=pltpu.CompilerParams(
                # q axis must stay "arbitrary" (sequential): K/V/LN1 scratch is filled at qi==0 per batch.
                dimension_semantics=("parallel", "arbitrary"),
                vmem_limit_bytes=_vmem_limit_bytes(kind)),
            cost_estimate=pl.CostEstimate(flops=flops,
                                          transcendentals=transcendentals,
                                          bytes_accessed=bytes_accessed),
        )(*args)

    try:
        res = _call(True)
    except Exception:
        # pipeline_mode=pl.Buffered(1) unsupported on this build: fall back to default double-buffered weights.
        res = _call(False)

    if return_attention_weights:
        out, attn = res
        return out, attn
    return res, None


# ---------------- parameter init (PyTorch __init__ shapes) + host-side packing ----------
def init_params(key, hidden_dim):
    H = hidden_dim
    ks = jax.random.split(key, 5)

    def linear(k, din, dout):
        kw, kb = jax.random.split(k)
        bound = 1.0 / (din ** 0.5)
        w = jax.random.uniform(kw, (din, dout), jnp.float32, -bound, bound)
        b = jax.random.uniform(kb, (1, dout), jnp.float32, -bound, bound)
        return w, b

    wq, bq = linear(ks[0], H, H)
    wk, bk = linear(ks[1], H, H)
    wv, bv = linear(ks[2], H, H)
    w1, bf1 = linear(ks[3], H, 4 * H)
    w2, bf2 = linear(ks[4], 4 * H, H)
    return dict(
        g1=jnp.ones((1, H), jnp.float32), b1n=jnp.zeros((1, H), jnp.float32),
        g2=jnp.ones((1, H), jnp.float32), b2n=jnp.zeros((1, H), jnp.float32),
        wq=wq, bq=bq, wk=wk, bk=bk, wv=wv, bv=bv,
        w1=w1, bf1=bf1, w2=w2, bf2=bf2,
    )


def pack_params(p, *, head_dim):
    """One-time host-side packing: fuse Wk/Wv, fold attention scale into Wq/bq, cast weights to bf16."""
    scale = float(head_dim) ** -0.5
    bf16, f32 = jnp.bfloat16, jnp.float32
    return dict(
        g1=p["g1"].astype(f32), b1n=p["b1n"].astype(f32),
        g2=p["g2"].astype(f32), b2n=p["b2n"].astype(f32),
        wq=(p["wq"] * scale).astype(bf16), bq=(p["bq"] * scale).astype(f32),
        wkv=jnp.concatenate([p["wk"], p["wv"]], axis=1).astype(bf16),
        bkv=jnp.concatenate([p["bk"], p["bv"]], axis=1).astype(f32),
        w1=p["w1"].astype(bf16), bf1=p["bf1"].astype(f32),
        w2=p["w2"].astype(bf16), bf2=p["bf2"].astype(f32),
    )


# ---------------- pure-JAX reference (mirrors the PyTorch forward, f32 math, exact GELU) -
def reference(x_bf16, pk, *, num_heads, head_dim):
    B, S, H = x_bf16.shape
    x = x_bf16.astype(jnp.float32)

    def ln(z, g, b):
        m = z.mean(-1, keepdims=True)
        v = ((z - m) ** 2).mean(-1, keepdims=True)
        return (z - m) / jnp.sqrt(v + LN_EPS) * g + b

    wq = pk["wq"].astype(jnp.float32)
    wkv = pk["wkv"].astype(jnp.float32)
    w1 = pk["w1"].astype(jnp.float32)
    w2 = pk["w2"].astype(jnp.float32)

    xn = ln(x, pk["g1"], pk["b1n"])
    q = xn @ wq + pk["bq"]                                  # scale already folded in
    kv = xn @ wkv + pk["bkv"]
    k, v = kv[..., :H], kv[..., H:]
    qh = q.reshape(B, S, num_heads, head_dim).transpose(0, 2, 1, 3)
    kh = k.reshape(B, S, num_heads, head_dim).transpose(0, 2, 1, 3)
    vh = v.reshape(B, S, num_heads, head_dim).transpose(0, 2, 1, 3)
    s = jnp.einsum("bhqd,bhkd->bhqk", qh, kh)
    w = jax.nn.softmax(s, axis=-1)
    o = jnp.einsum("bhqk,bhkd->bhqd", w, vh).transpose(0, 2, 1, 3).reshape(B, S, H)
    h1 = xn + o
    h1n = ln(h1, pk["g2"], pk["b2n"])
    f = h1n @ w1 + pk["bf1"]
    f = 0.5 * f * (1.0 + jax.scipy.special.erf(f / jnp.sqrt(2.0)))   # exact-erf GELU
    f = f @ w2 + pk["bf2"]
    return h1 + f, w


if __name__ == "__main__":
    B, S = 2, 8
    num_heads, head_dim = 4, 8
    hidden_dim = num_heads * head_dim  # 32

    key = jax.random.PRNGKey(0)
    k_x, k_p = jax.random.split(key)
    x = jax.random.normal(k_x, (B, S, hidden_dim), jnp.float32)
    params = init_params(k_p, hidden_dim)
    packed = pack_params(params, head_dim=head_dim)

    x_bf16 = x.astype(jnp.bfloat16)
    out, attn_w = global_workspace(x_bf16, packed, num_heads=num_heads, head_dim=head_dim)
    out = jax.block_until_ready(out)
    attn_w = jax.block_until_ready(attn_w)

    ref_out, ref_w = reference(x_bf16, packed, num_heads=num_heads, head_dim=head_dim)
    out_f32 = out.astype(jnp.float32)
    attn_f32 = attn_w.astype(jnp.float32)

    assert out.shape == (B, S, hidden_dim)
    assert attn_w.shape == (B, num_heads, S, S)
    # bf16 kernel math vs f32 reference (shared bf16-quantized weights): loosened tolerances.
    assert jnp.allclose(out_f32, ref_out, atol=6e-2, rtol=6e-2), \
        float(jnp.max(jnp.abs(out_f32 - ref_out)))
    assert jnp.allclose(attn_f32, ref_w, atol=2e-2, rtol=2e-2), \
        float(jnp.max(jnp.abs(attn_f32 - ref_w)))

    # Exercise the attention-weights-free path (drops the (B, nh, S, S) HBM writeback entirely).
    out2, none_w = global_workspace(x_bf16, packed, num_heads=num_heads, head_dim=head_dim,
                                    return_attention_weights=False)
    out2 = jax.block_until_ready(out2)
    assert none_w is None
    assert out2.shape == (B, S, hidden_dim)
    assert jnp.allclose(out2.astype(jnp.float32), ref_out, atol=6e-2, rtol=6e-2)

    print("KERNEL_OK")
</pallas_src>

<mosaic_0001>
module attributes {stable_mosaic.version = 11 : i64} {
  func.func @global_workspace_kernel(%arg0: i32, %arg1: i32, %arg2: memref<1x8x32xbf16, #tpu.memory_space<vmem>>, %arg3: memref<1x32xf32, #tpu.memory_space<vmem>>, %arg4: memref<1x32xf32, #tpu.memory_space<vmem>>, %arg5: memref<1x32xf32, #tpu.memory_space<vmem>>, %arg6: memref<1x32xf32, #tpu.memory_space<vmem>>, %arg7: memref<32x32xbf16, #tpu.memory_space<vmem>>, %arg8: memref<1x32xf32, #tpu.memory_space<vmem>>, %arg9: memref<32x64xbf16, #tpu.memory_space<vmem>>, %arg10: memref<1x64xf32, #tpu.memory_space<vmem>>, %arg11: memref<32x128xbf16, #tpu.memory_space<vmem>>, %arg12: memref<1x128xf32, #tpu.memory_space<vmem>>, %arg13: memref<128x32xbf16, #tpu.memory_space<vmem>>, %arg14: memref<1x32xf32, #tpu.memory_space<vmem>>, %arg15: memref<1x8x32xbf16, #tpu.memory_space<vmem>>, %arg16: memref<1x4x8x8xbf16, #tpu.memory_space<vmem>>, %arg17: memref<8x32xbf16, #tpu.memory_space<vmem>>, %arg18: memref<8x32xbf16, #tpu.memory_space<vmem>>, %arg19: memref<8x32xbf16, #tpu.memory_space<vmem>>, %arg20: memref<8x32xf32, #tpu.memory_space<vmem>>) attributes {dimension_semantics = [#tpu.dimension_semantics<parallel>, #tpu.dimension_semantics<arbitrary>], iteration_bounds = array<i64: 2, 1>, scalar_prefetch = 0 : i64, scratch_operands = 4 : i64, tpu.core_type = #tpu.core_type<tc>, window_params = [{transform_indices = @transform_0, window_bounds = array<i64: 1, 8, 32>}, {pipeline_mode = #tpu.pipeline_mode<synchronous>, transform_indices = @transform_1, window_bounds = array<i64: 1, 32>}, {pipeline_mode = #tpu.pipeline_mode<synchronous>, transform_indices = @transform_2, window_bounds = array<i64: 1, 32>}, {pipeline_mode = #tpu.pipeline_mode<synchronous>, transform_indices = @transform_3, window_bounds = array<i64: 1, 32>}, {pipeline_mode = #tpu.pipeline_mode<synchronous>, transform_indices = @transform_4, window_bounds = array<i64: 1, 32>}, {pipeline_mode = #tpu.pipeline_mode<synchronous>, transform_indices = @transform_5, window_bounds = array<i64: 32, 32>}, {pipeline_mode = #tpu.pipeline_mode<synchronous>, transform_indices = @transform_6, window_bounds = array<i64: 1, 32>}, {pipeline_mode = #tpu.pipeline_mode<synchronous>, transform_indices = @transform_7, window_bounds = array<i64: 32, 64>}, {pipeline_mode = #tpu.pipeline_mode<synchronous>, transform_indices = @transform_8, window_bounds = array<i64: 1, 64>}, {pipeline_mode = #tpu.pipeline_mode<synchronous>, transform_indices = @transform_9, window_bounds = array<i64: 32, 128>}, {pipeline_mode = #tpu.pipeline_mode<synchronous>, transform_indices = @transform_10, window_bounds = array<i64: 1, 128>}, {pipeline_mode = #tpu.pipeline_mode<synchronous>, transform_indices = @transform_11, window_bounds = array<i64: 128, 32>}, {pipeline_mode = #tpu.pipeline_mode<synchronous>, transform_indices = @transform_12, window_bounds = array<i64: 1, 32>}, {transform_indices = @transform_13, window_bounds = array<i64: 1, 8, 32>}, {transform_indices = @transform_14, window_bounds = array<i64: 1, 4, 8, 8>}]} {
    %c0 = arith.constant 0 : index
    %c0_0 = arith.constant 0 : index
    %0 = vector.load %arg3[%c0, %c0_0] : memref<1x32xf32, #tpu.memory_space<vmem>>, vector<1x32xf32>
    %c0_1 = arith.constant 0 : index
    %c0_2 = arith.constant 0 : index
    %1 = vector.load %arg4[%c0_1, %c0_2] : memref<1x32xf32, #tpu.memory_space<vmem>>, vector<1x32xf32>
    %c0_i32 = arith.constant 0 : i32
    %2 = arith.cmpi eq, %arg1, %c0_i32 : i32
    %3 = arith.extui %2 : i1 to i32
    %c0_i32_3 = arith.constant 0 : i32
    %c0_i32_4 = arith.constant 0 : i32
    %4 = arith.cmpi ne, %3, %c0_i32_4 : i32
    scf.if %4 {
      %c0_i32_88 = arith.constant 0 : i32
      %c8_i32_89 = arith.constant 8 : i32
      %152 = arith.muli %c0_i32_88, %c8_i32_89 : i32
      %153 = tpu.assume_multiple %152, 8 : i32
      %c0_i32_90 = arith.constant 0 : i32
      %c0_i32_91 = arith.constant 0 : i32
      %154 = tpu.memref_slice %arg2[%c0_i32_3, %c0_i32_90, %c0_i32_91] : memref<1x8x32xbf16, #tpu.memory_space<vmem>> -> memref<1x8x32xbf16, #tpu.memory_space<vmem>>
      %155 = tpu.memref_squeeze %154 : memref<1x8x32xbf16, #tpu.memory_space<vmem>> -> memref<8x32xbf16, #tpu.memory_space<vmem>>
      %156 = arith.index_cast %153 : i32 to index
      %c0_92 = arith.constant 0 : index
      %157 = vector.load %155[%156, %c0_92] : memref<8x32xbf16, #tpu.memory_space<vmem>>, vector<8x32xbf16>
      %158 = arith.extf %157 : vector<8x32xbf16> to vector<8x32xf32>
      %cst_93 = arith.constant dense<0.000000e+00> : vector<8xf32>
      %159 = vector.multi_reduction <add>, %158, %cst_93 [1] : vector<8x32xf32> to vector<8xf32>
      %160 = vector.shape_cast %159 : vector<8xf32> to vector<8x1xf32>
      %cst_94 = arith.constant 3.200000e+01 : f32
      %161 = vector.broadcast %cst_94 : f32 to vector<8x1xf32>
      %162 = arith.divf %160, %161 : vector<8x1xf32>
      %163 = vector.broadcast %162 : vector<8x1xf32> to vector<8x32xf32>
      %164 = arith.subf %158, %163 : vector<8x32xf32>
      %165 = arith.mulf %164, %164 : vector<8x32xf32>
      %cst_95 = arith.constant dense<0.000000e+00> : vector<8xf32>
      %166 = vector.multi_reduction <add>, %165, %cst_95 [1] : vector<8x32xf32> to vector<8xf32>
      %167 = vector.shape_cast %166 : vector<8xf32> to vector<8x1xf32>
      %cst_96 = arith.constant 3.200000e+01 : f32
      %168 = vector.broadcast %cst_96 : f32 to vector<8x1xf32>
      %169 = arith.divf %167, %168 : vector<8x1xf32>
      %170 = vector.broadcast %162 : vector<8x1xf32> to vector<8x32xf32>
      %171 = arith.subf %158, %170 : vector<8x32xf32>
      %cst_97 = arith.constant 9.99999974E-6 : f32
      %172 = vector.broadcast %cst_97 : f32 to vector<8x1xf32>
      %173 = arith.addf %169, %172 : vector<8x1xf32>
      %174 = math.rsqrt %173 : vector<8x1xf32>
      %175 = vector.broadcast %174 : vector<8x1xf32> to vector<8x32xf32>
      %176 = arith.mulf %171, %175 : vector<8x32xf32>
      %177 = vector.broadcast %0 : vector<1x32xf32> to vector<8x32xf32>
      %178 = arith.mulf %176, %177 : vector<8x32xf32>
      %179 = vector.broadcast %1 : vector<1x32xf32> to vector<8x32xf32>
      %180 = arith.addf %178, %179 : vector<8x32xf32>
      %181 = arith.truncf %180 : vector<8x32xf32> to vector<8x32xbf16>
      %182 = arith.index_cast %153 : i32 to index
      %c0_98 = arith.constant 0 : index
      %183 = vector.load %arg17[%182, %c0_98] : memref<8x32xbf16, #tpu.memory_space<vmem>>, vector<8x32xbf16>
      tpu.vector_store %arg17[%182, %c0_98], %181 {strides = array<i32>} : memref<8x32xbf16, #tpu.memory_space<vmem>>, vector<8x32xbf16>,
      %c0_99 = arith.constant 0 : index
      %c0_100 = arith.constant 0 : index
      %184 = vector.load %arg9[%c0_99, %c0_100] : memref<32x64xbf16, #tpu.memory_space<vmem>>, vector<32x64xbf16>
      %cst_101 = arith.constant dense<0.000000e+00> : vector<8x64xf32>
      %185 = tpu.matmul %181, %184, %cst_101 {dimension_numbers = #tpu.dot_dimension_numbers<[1], [0], [0], [1], [0, 0, 1, 1], [], []>} : vector<8x32xbf16>, vector<32x64xbf16>, vector<8x64xf32> -> vector<8x64xf32>
      %c0_102 = arith.constant 0 : index
      %c0_103 = arith.constant 0 : index
      %186 = vector.load %arg10[%c0_102, %c0_103] : memref<1x64xf32, #tpu.memory_space<vmem>>, vector<1x64xf32>
      %187 = vector.broadcast %186 : vector<1x64xf32> to vector<8x64xf32>
      %188 = arith.addf %185, %187 : vector<8x64xf32>
      %189 = arith.truncf %188 : vector<8x64xf32> to vector<8x64xbf16>
      %190 = vector.extract_strided_slice %189 {offsets = [0, 0], sizes = [8, 32], strides = [1, 1]} : vector<8x64xbf16> to vector<8x32xbf16>
      %191 = arith.index_cast %153 : i32 to index
      %c0_104 = arith.constant 0 : index
      %192 = vector.load %arg18[%191, %c0_104] : memref<8x32xbf16, #tpu.memory_space<vmem>>, vector<8x32xbf16>
      tpu.vector_store %arg18[%191, %c0_104], %190 {strides = array<i32>} : memref<8x32xbf16, #tpu.memory_space<vmem>>, vector<8x32xbf16>,
      %193 = vector.extract_strided_slice %189 {offsets = [0, 32], sizes = [8, 32], strides = [1, 1]} : vector<8x64xbf16> to vector<8x32xbf16>
      %194 = arith.index_cast %153 : i32 to index
      %c0_105 = arith.constant 0 : index
      %195 = vector.load %arg19[%194, %c0_105] : memref<8x32xbf16, #tpu.memory_space<vmem>>, vector<8x32xbf16>
      tpu.vector_store %arg19[%194, %c0_105], %193 {strides = array<i32>} : memref<8x32xbf16, #tpu.memory_space<vmem>>, vector<8x32xbf16>,
      %c1_i32 = arith.constant 1 : i32
    } else {
    }
    %c8_i32 = arith.constant 8 : i32
    %5 = arith.muli %arg1, %c8_i32 : i32
    %6 = tpu.assume_multiple %5, 8 : i32
    %7 = arith.index_cast %6 : i32 to index
    %c0_5 = arith.constant 0 : index
    %8 = vector.load %arg17[%7, %c0_5] : memref<8x32xbf16, #tpu.memory_space<vmem>>, vector<8x32xbf16>
    %c0_6 = arith.constant 0 : index
    %c0_7 = arith.constant 0 : index
    %9 = vector.load %arg7[%c0_6, %c0_7] : memref<32x32xbf16, #tpu.memory_space<vmem>>, vector<32x32xbf16>
    %cst = arith.constant dense<0.000000e+00> : vector<8x32xf32>
    %10 = tpu.matmul %8, %9, %cst {dimension_numbers = #tpu.dot_dimension_numbers<[1], [0], [0], [1], [0, 0, 1, 1], [], []>} : vector<8x32xbf16>, vector<32x32xbf16>, vector<8x32xf32> -> vector<8x32xf32>
    %c0_8 = arith.constant 0 : index
    %c0_9 = arith.constant 0 : index
    %11 = vector.load %arg8[%c0_8, %c0_9] : memref<1x32xf32, #tpu.memory_space<vmem>>, vector<1x32xf32>
    %12 = vector.broadcast %11 : vector<1x32xf32> to vector<8x32xf32>
    %13 = arith.addf %10, %12 : vector<8x32xf32>
    %14 = arith.truncf %13 : vector<8x32xf32> to vector<8x32xbf16>
    %15 = vector.extract_strided_slice %14 {offsets = [0, 0], sizes = [8, 8], strides = [1, 1]} : vector<8x32xbf16> to vector<8x8xbf16>
    %c0_10 = arith.constant 0 : index
    %c0_11 = arith.constant 0 : index
    %16 = vector.load %arg18[%c0_10, %c0_11] : memref<8x32xbf16, #tpu.memory_space<vmem>>, vector<8x8xbf16>
    %c0_12 = arith.constant 0 : index
    %c0_13 = arith.constant 0 : index
    %17 = vector.load %arg19[%c0_12, %c0_13] : memref<8x32xbf16, #tpu.memory_space<vmem>>, vector<8x8xbf16>
    %cst_14 = arith.constant dense<0.000000e+00> : vector<8x8xf32>
    %18 = tpu.matmul %15, %16, %cst_14 {dimension_numbers = #tpu.dot_dimension_numbers<[1], [1], [0], [0], [0, 0, 1, 0], [], []>} : vector<8x8xbf16>, vector<8x8xbf16>, vector<8x8xf32> -> vector<8x8xf32>
    %cst_15 = arith.constant dense<0xFF800000> : vector<8xf32>
    %19 = vector.multi_reduction <maximumf>, %18, %cst_15 [1] : vector<8x8xf32> to vector<8xf32>
    %20 = vector.shape_cast %19 : vector<8xf32> to vector<8x1xf32>
    %21 = vector.broadcast %20 : vector<8x1xf32> to vector<8x8xf32>
    %22 = arith.subf %18, %21 : vector<8x8xf32>
    %23 = math.exp %22 : vector<8x8xf32>
    %cst_16 = arith.constant dense<0.000000e+00> : vector<8xf32>
    %24 = vector.multi_reduction <add>, %23, %cst_16 [1] : vector<8x8xf32> to vector<8xf32>
    %25 = vector.shape_cast %24 : vector<8xf32> to vector<8x1xf32>
    %26 = tpu.reciprocal %25 {approx = true} : vector<8x1xf32> -> vector<8x1xf32>
    %27 = vector.broadcast %26 : vector<8x1xf32> to vector<8x8xf32>
    %28 = arith.mulf %23, %27 : vector<8x8xf32>
    %29 = arith.truncf %28 : vector<8x8xf32> to vector<8x8xbf16>
    %c0_17 = arith.constant 0 : index
    %c0_18 = arith.constant 0 : index
    %c0_19 = arith.constant 0 : index
    %c0_20 = arith.constant 0 : index
    %30 = vector.load %arg16[%c0_17, %c0_18, %c0_19, %c0_20] : memref<1x4x8x8xbf16, #tpu.memory_space<vmem>>, vector<1x1x8x8xbf16>
    %31 = vector.shape_cast %30 : vector<1x1x8x8xbf16> to vector<8x8xbf16>
    %32 = vector.shape_cast %29 : vector<8x8xbf16> to vector<1x1x8x8xbf16>
    tpu.vector_store %arg16[%c0_17, %c0_18, %c0_19, %c0_20], %32 {strides = array<i32>} : memref<1x4x8x8xbf16, #tpu.memory_space<vmem>>, vector<1x1x8x8xbf16>,
    %cst_21 = arith.constant dense<0.000000e+00> : vector<8x8xf32>
    %33 = tpu.matmul %29, %17, %cst_21 {dimension_numbers = #tpu.dot_dimension_numbers<[1], [0], [0], [1], [0, 0, 1, 1], [], []>} : vector<8x8xbf16>, vector<8x8xbf16>, vector<8x8xf32> -> vector<8x8xf32>
    %c0_22 = arith.constant 0 : index
    %c0_23 = arith.constant 0 : index
    %34 = vector.load %arg20[%c0_22, %c0_23] : memref<8x32xf32, #tpu.memory_space<vmem>>, vector<8x8xf32>
    tpu.vector_store %arg20[%c0_22, %c0_23], %33 {strides = array<i32>} : memref<8x32xf32, #tpu.memory_space<vmem>>, vector<8x8xf32>,
    %35 = vector.extract_strided_slice %14 {offsets = [0, 8], sizes = [8, 8], strides = [1, 1]} : vector<8x32xbf16> to vector<8x8xbf16>
    %c0_24 = arith.constant 0 : index
    %c8 = arith.constant 8 : index
    %36 = vector.load %arg18[%c0_24, %c8] : memref<8x32xbf16, #tpu.memory_space<vmem>>, vector<8x8xbf16>
    %c0_25 = arith.constant 0 : index
    %c8_26 = arith.constant 8 : index
    %37 = vector.load %arg19[%c0_25, %c8_26] : memref<8x32xbf16, #tpu.memory_space<vmem>>, vector<8x8xbf16>
    %cst_27 = arith.constant dense<0.000000e+00> : vector<8x8xf32>
    %38 = tpu.matmul %35, %36, %cst_27 {dimension_numbers = #tpu.dot_dimension_numbers<[1], [1], [0], [0], [0, 0, 1, 0], [], []>} : vector<8x8xbf16>, vector<8x8xbf16>, vector<8x8xf32> -> vector<8x8xf32>
    %cst_28 = arith.constant dense<0xFF800000> : vector<8xf32>
    %39 = vector.multi_reduction <maximumf>, %38, %cst_28 [1] : vector<8x8xf32> to vector<8xf32>
    %40 = vector.shape_cast %39 : vector<8xf32> to vector<8x1xf32>
    %41 = vector.broadcast %40 : vector<8x1xf32> to vector<8x8xf32>
    %42 = arith.subf %38, %41 : vector<8x8xf32>
    %43 = math.exp %42 : vector<8x8xf32>
    %cst_29 = arith.constant dense<0.000000e+00> : vector<8xf32>
    %44 = vector.multi_reduction <add>, %43, %cst_29 [1] : vector<8x8xf32> to vector<8xf32>
    %45 = vector.shape_cast %44 : vector<8xf32> to vector<8x1xf32>
    %46 = tpu.reciprocal %45 {approx = true} : vector<8x1xf32> -> vector<8x1xf32>
    %47 = vector.broadcast %46 : vector<8x1xf32> to vector<8x8xf32>
    %48 = arith.mulf %43, %47 : vector<8x8xf32>
    %49 = arith.truncf %48 : vector<8x8xf32> to vector<8x8xbf16>
    %c0_30 = arith.constant 0 : index
    %c1 = arith.constant 1 : index
    %c0_31 = arith.constant 0 : index
    %c0_32 = arith.constant 0 : index
    %50 = vector.load %arg16[%c0_30, %c1, %c0_31, %c0_32] : memref<1x4x8x8xbf16, #tpu.memory_space<vmem>>, vector<1x1x8x8xbf16>
    %51 = vector.shape_cast %50 : vector<1x1x8x8xbf16> to vector<8x8xbf16>
    %52 = vector.shape_cast %49 : vector<8x8xbf16> to vector<1x1x8x8xbf16>
    tpu.vector_store %arg16[%c0_30, %c1, %c0_31, %c0_32], %52 {strides = array<i32>} : memref<1x4x8x8xbf16, #tpu.memory_space<vmem>>, vector<1x1x8x8xbf16>,
    %cst_33 = arith.constant dense<0.000000e+00> : vector<8x8xf32>
    %53 = tpu.matmul %49, %37, %cst_33 {dimension_numbers = #tpu.dot_dimension_numbers<[1], [0], [0], [1], [0, 0, 1, 1], [], []>} : vector<8x8xbf16>, vector<8x8xbf16>, vector<8x8xf32> -> vector<8x8xf32>
    %c0_34 = arith.constant 0 : index
    %c8_35 = arith.constant 8 : index
    %54 = vector.load %arg20[%c0_34, %c8_35] : memref<8x32xf32, #tpu.memory_space<vmem>>, vector<8x8xf32>
    tpu.vector_store %arg20[%c0_34, %c8_35], %53 {strides = array<i32>} : memref<8x32xf32, #tpu.memory_space<vmem>>, vector<8x8xf32>,
    %55 = vector.extract_strided_slice %14 {offsets = [0, 16], sizes = [8, 8], strides = [1, 1]} : vector<8x32xbf16> to vector<8x8xbf16>
    %c0_36 = arith.constant 0 : index
    %c16 = arith.constant 16 : index
    %56 = vector.load %arg18[%c0_36, %c16] : memref<8x32xbf16, #tpu.memory_space<vmem>>, vector<8x8xbf16>
    %c0_37 = arith.constant 0 : index
    %c16_38 = arith.constant 16 : index
    %57 = vector.load %arg19[%c0_37, %c16_38] : memref<8x32xbf16, #tpu.memory_space<vmem>>, vector<8x8xbf16>
    %cst_39 = arith.constant dense<0.000000e+00> : vector<8x8xf32>
    %58 = tpu.matmul %55, %56, %cst_39 {dimension_numbers = #tpu.dot_dimension_numbers<[1], [1], [0], [0], [0, 0, 1, 0], [], []>} : vector<8x8xbf16>, vector<8x8xbf16>, vector<8x8xf32> -> vector<8x8xf32>
    %cst_40 = arith.constant dense<0xFF800000> : vector<8xf32>
    %59 = vector.multi_reduction <maximumf>, %58, %cst_40 [1] : vector<8x8xf32> to vector<8xf32>
    %60 = vector.shape_cast %59 : vector<8xf32> to vector<8x1xf32>
    %61 = vector.broadcast %60 : vector<8x1xf32> to vector<8x8xf32>
    %62 = arith.subf %58, %61 : vector<8x8xf32>
    %63 = math.exp %62 : vector<8x8xf32>
    %cst_41 = arith.constant dense<0.000000e+00> : vector<8xf32>
    %64 = vector.multi_reduction <add>, %63, %cst_41 [1] : vector<8x8xf32> to vector<8xf32>
    %65 = vector.shape_cast %64 : vector<8xf32> to vector<8x1xf32>
    %66 = tpu.reciprocal %65 {approx = true} : vector<8x1xf32> -> vector<8x1xf32>
    %67 = vector.broadcast %66 : vector<8x1xf32> to vector<8x8xf32>
    %68 = arith.mulf %63, %67 : vector<8x8xf32>
    %69 = arith.truncf %68 : vector<8x8xf32> to vector<8x8xbf16>
    %c0_42 = arith.constant 0 : index
    %c2 = arith.constant 2 : index
    %c0_43 = arith.constant 0 : index
    %c0_44 = arith.constant 0 : index
    %70 = vector.load %arg16[%c0_42, %c2, %c0_43, %c0_44] : memref<1x4x8x8xbf16, #tpu.memory_space<vmem>>, vector<1x1x8x8xbf16>
    %71 = vector.shape_cast %70 : vector<1x1x8x8xbf16> to vector<8x8xbf16>
    %72 = vector.shape_cast %69 : vector<8x8xbf16> to vector<1x1x8x8xbf16>
    tpu.vector_store %arg16[%c0_42, %c2, %c0_43, %c0_44], %72 {strides = array<i32>} : memref<1x4x8x8xbf16, #tpu.memory_space<vmem>>, vector<1x1x8x8xbf16>,
    %cst_45 = arith.constant dense<0.000000e+00> : vector<8x8xf32>
    %73 = tpu.matmul %69, %57, %cst_45 {dimension_numbers = #tpu.dot_dimension_numbers<[1], [0], [0], [1], [0, 0, 1, 1], [], []>} : vector<8x8xbf16>, vector<8x8xbf16>, vector<8x8xf32> -> vector<8x8xf32>
    %c0_46 = arith.constant 0 : index
    %c16_47 = arith.constant 16 : index
    %74 = vector.load %arg20[%c0_46, %c16_47] : memref<8x32xf32, #tpu.memory_space<vmem>>, vector<8x8xf32>
    tpu.vector_store %arg20[%c0_46, %c16_47], %73 {strides = array<i32>} : memref<8x32xf32, #tpu.memory_space<vmem>>, vector<8x8xf32>,
    %75 = vector.extract_strided_slice %14 {offsets = [0, 24], sizes = [8, 8], strides = [1, 1]} : vector<8x32xbf16> to vector<8x8xbf16>
    %c0_48 = arith.constant 0 : index
    %c24 = arith.constant 24 : index
    %76 = vector.load %arg18[%c0_48, %c24] : memref<8x32xbf16, #tpu.memory_space<vmem>>, vector<8x8xbf16>
    %c0_49 = arith.constant 0 : index
    %c24_50 = arith.constant 24 : index
    %77 = vector.load %arg19[%c0_49, %c24_50] : memref<8x32xbf16, #tpu.memory_space<vmem>>, vector<8x8xbf16>
    %cst_51 = arith.constant dense<0.000000e+00> : vector<8x8xf32>
    %78 = tpu.matmul %75, %76, %cst_51 {dimension_numbers = #tpu.dot_dimension_numbers<[1], [1], [0], [0], [0, 0, 1, 0], [], []>} : vector<8x8xbf16>, vector<8x8xbf16>, vector<8x8xf32> -> vector<8x8xf32>
    %cst_52 = arith.constant dense<0xFF800000> : vector<8xf32>
    %79 = vector.multi_reduction <maximumf>, %78, %cst_52 [1] : vector<8x8xf32> to vector<8xf32>
    %80 = vector.shape_cast %79 : vector<8xf32> to vector<8x1xf32>
    %81 = vector.broadcast %80 : vector<8x1xf32> to vector<8x8xf32>
    %82 = arith.subf %78, %81 : vector<8x8xf32>
    %83 = math.exp %82 : vector<8x8xf32>
    %cst_53 = arith.constant dense<0.000000e+00> : vector<8xf32>
    %84 = vector.multi_reduction <add>, %83, %cst_53 [1] : vector<8x8xf32> to vector<8xf32>
    %85 = vector.shape_cast %84 : vector<8xf32> to vector<8x1xf32>
    %86 = tpu.reciprocal %85 {approx = true} : vector<8x1xf32> -> vector<8x1xf32>
    %87 = vector.broadcast %86 : vector<8x1xf32> to vector<8x8xf32>
    %88 = arith.mulf %83, %87 : vector<8x8xf32>
    %89 = arith.truncf %88 : vector<8x8xf32> to vector<8x8xbf16>
    %c0_54 = arith.constant 0 : index
    %c3 = arith.constant 3 : index
    %c0_55 = arith.constant 0 : index
    %c0_56 = arith.constant 0 : index
    %90 = vector.load %arg16[%c0_54, %c3, %c0_55, %c0_56] : memref<1x4x8x8xbf16, #tpu.memory_space<vmem>>, vector<1x1x8x8xbf16>
    %91 = vector.shape_cast %90 : vector<1x1x8x8xbf16> to vector<8x8xbf16>
    %92 = vector.shape_cast %89 : vector<8x8xbf16> to vector<1x1x8x8xbf16>
    tpu.vector_store %arg16[%c0_54, %c3, %c0_55, %c0_56], %92 {strides = array<i32>} : memref<1x4x8x8xbf16, #tpu.memory_space<vmem>>, vector<1x1x8x8xbf16>,
    %cst_57 = arith.constant dense<0.000000e+00> : vector<8x8xf32>
    %93 = tpu.matmul %89, %77, %cst_57 {dimension_numbers = #tpu.dot_dimension_numbers<[1], [0], [0], [1], [0, 0, 1, 1], [], []>} : vector<8x8xbf16>, vector<8x8xbf16>, vector<8x8xf32> -> vector<8x8xf32>
    %c0_58 = arith.constant 0 : index
    %c24_59 = arith.constant 24 : index
    %94 = vector.load %arg20[%c0_58, %c24_59] : memref<8x32xf32, #tpu.memory_space<vmem>>, vector<8x8xf32>
    tpu.vector_store %arg20[%c0_58, %c24_59], %93 {strides = array<i32>} : memref<8x32xf32, #tpu.memory_space<vmem>>, vector<8x8xf32>,
    %c0_60 = arith.constant 0 : index
    %c0_61 = arith.constant 0 : index
    %95 = vector.load %arg20[%c0_60, %c0_61] : memref<8x32xf32, #tpu.memory_space<vmem>>, vector<8x32xf32>
    %96 = arith.extf %8 : vector<8x32xbf16> to vector<8x32xf32>
    %97 = arith.addf %96, %95 : vector<8x32xf32>
    %c0_62 = arith.constant 0 : index
    %c0_63 = arith.constant 0 : index
    %98 = vector.load %arg5[%c0_62, %c0_63] : memref<1x32xf32, #tpu.memory_space<vmem>>, vector<1x32xf32>
    %c0_64 = arith.constant 0 : index
    %c0_65 = arith.constant 0 : index
    %99 = vector.load %arg6[%c0_64, %c0_65] : memref<1x32xf32, #tpu.memory_space<vmem>>, vector<1x32xf32>
    %cst_66 = arith.constant dense<0.000000e+00> : vector<8xf32>
    %100 = vector.multi_reduction <add>, %97, %cst_66 [1] : vector<8x32xf32> to vector<8xf32>
    %101 = vector.shape_cast %100 : vector<8xf32> to vector<8x1xf32>
    %cst_67 = arith.constant 3.200000e+01 : f32
    %102 = vector.broadcast %cst_67 : f32 to vector<8x1xf32>
    %103 = arith.divf %101, %102 : vector<8x1xf32>
    %104 = vector.broadcast %103 : vector<8x1xf32> to vector<8x32xf32>
    %105 = arith.subf %97, %104 : vector<8x32xf32>
    %106 = arith.mulf %105, %105 : vector<8x32xf32>
    %cst_68 = arith.constant dense<0.000000e+00> : vector<8xf32>
    %107 = vector.multi_reduction <add>, %106, %cst_68 [1] : vector<8x32xf32> to vector<8xf32>
    %108 = vector.shape_cast %107 : vector<8xf32> to vector<8x1xf32>
    %cst_69 = arith.constant 3.200000e+01 : f32
    %109 = vector.broadcast %cst_69 : f32 to vector<8x1xf32>
    %110 = arith.divf %108, %109 : vector<8x1xf32>
    %111 = vector.broadcast %103 : vector<8x1xf32> to vector<8x32xf32>
    %112 = arith.subf %97, %111 : vector<8x32xf32>
    %cst_70 = arith.constant 9.99999974E-6 : f32
    %113 = vector.broadcast %cst_70 : f32 to vector<8x1xf32>
    %114 = arith.addf %110, %113 : vector<8x1xf32>
    %115 = math.rsqrt %114 : vector<8x1xf32>
    %116 = vector.broadcast %115 : vector<8x1xf32> to vector<8x32xf32>
    %117 = arith.mulf %112, %116 : vector<8x32xf32>
    %118 = vector.broadcast %98 : vector<1x32xf32> to vector<8x32xf32>
    %119 = arith.mulf %117, %118 : vector<8x32xf32>
    %120 = vector.broadcast %99 : vector<1x32xf32> to vector<8x32xf32>
    %121 = arith.addf %119, %120 : vector<8x32xf32>
    %122 = arith.truncf %121 : vector<8x32xf32> to vector<8x32xbf16>
    %c0_71 = arith.constant 0 : index
    %c0_72 = arith.constant 0 : index
    %123 = vector.load %arg11[%c0_71, %c0_72] : memref<32x128xbf16, #tpu.memory_space<vmem>>, vector<32x128xbf16>
    %cst_73 = arith.constant dense<0.000000e+00> : vector<8x128xf32>
    %124 = tpu.matmul %122, %123, %cst_73 {dimension_numbers = #tpu.dot_dimension_numbers<[1], [0], [0], [1], [0, 0, 1, 1], [], []>} : vector<8x32xbf16>, vector<32x128xbf16>, vector<8x128xf32> -> vector<8x128xf32>
    %c0_74 = arith.constant 0 : index
    %c0_75 = arith.constant 0 : index
    %125 = vector.load %arg12[%c0_74, %c0_75] : memref<1x128xf32, #tpu.memory_space<vmem>>, vector<1x128xf32>
    %126 = vector.broadcast %125 : vector<1x128xf32> to vector<8x128xf32>
    %127 = arith.addf %124, %126 : vector<8x128xf32>
    %cst_76 = arith.constant 5.000000e-01 : f32
    %128 = vector.broadcast %cst_76 : f32 to vector<8x128xf32>
    %129 = arith.mulf %128, %127 : vector<8x128xf32>
    %cst_77 = arith.constant 4.471500e-02 : f32
    %130 = vector.broadcast %cst_77 : f32 to vector<8x128xf32>
    %131 = arith.mulf %130, %127 : vector<8x128xf32>
    %132 = arith.mulf %131, %127 : vector<8x128xf32>
    %133 = arith.mulf %132, %127 : vector<8x128xf32>
    %134 = arith.addf %127, %133 : vector<8x128xf32>
    %cst_78 = arith.constant 0.797884583 : f32
    %135 = vector.broadcast %cst_78 : f32 to vector<8x128xf32>
    %136 = arith.mulf %135, %134 : vector<8x128xf32>
    %137 = math.tanh %136 : vector<8x128xf32>
    %cst_79 = arith.constant 1.000000e+00 : f32
    %138 = vector.broadcast %cst_79 : f32 to vector<8x128xf32>
    %139 = arith.addf %138, %137 : vector<8x128xf32>
    %140 = arith.mulf %129, %139 : vector<8x128xf32>
    %141 = arith.truncf %140 : vector<8x128xf32> to vector<8x128xbf16>
    %c0_80 = arith.constant 0 : index
    %c0_81 = arith.constant 0 : index
    %142 = vector.load %arg13[%c0_80, %c0_81] : memref<128x32xbf16, #tpu.memory_space<vmem>>, vector<128x32xbf16>
    %cst_82 = arith.constant dense<0.000000e+00> : vector<8x32xf32>
    %143 = tpu.matmul %141, %142, %cst_82 {dimension_numbers = #tpu.dot_dimension_numbers<[1], [0], [0], [1], [0, 0, 1, 1], [], []>} : vector<8x128xbf16>, vector<128x32xbf16>, vector<8x32xf32> -> vector<8x32xf32>
    %c0_83 = arith.constant 0 : index
    %c0_84 = arith.constant 0 : index
    %144 = vector.load %arg14[%c0_83, %c0_84] : memref<1x32xf32, #tpu.memory_space<vmem>>, vector<1x32xf32>
    %145 = vector.broadcast %144 : vector<1x32xf32> to vector<8x32xf32>
    %146 = arith.addf %143, %145 : vector<8x32xf32>
    %147 = arith.addf %97, %146 : vector<8x32xf32>
    %148 = arith.truncf %147 : vector<8x32xf32> to vector<8x32xbf16>
    %c0_85 = arith.constant 0 : index
    %c0_86 = arith.constant 0 : index
    %c0_87 = arith.constant 0 : index
    %149 = vector.load %arg15[%c0_85, %c0_86, %c0_87] : memref<1x8x32xbf16, #tpu.memory_space<vmem>>, vector<1x8x32xbf16>
    %150 = vector.shape_cast %149 : vector<1x8x32xbf16> to vector<8x32xbf16>
    %151 = vector.shape_cast %148 : vector<8x32xbf16> to vector<1x8x32xbf16>
    tpu.vector_store %arg15[%c0_85, %c0_86, %c0_87], %151 {strides = array<i32>} : memref<1x8x32xbf16, #tpu.memory_space<vmem>>, vector<1x8x32xbf16>,
    return
  }
  func.func @transform_0(%arg0: i32, %arg1: i32) -> (i32, i32, i32) {
    %c0_i32 = arith.constant 0 : i32
    %c0_i32_0 = arith.constant 0 : i32
    %c0_i32_1 = arith.constant 0 : i32
    return %arg0, %c0_i32, %c0_i32_0 : i32, i32, i32
  }
  func.func @transform_1(%arg0: i32, %arg1: i32) -> (i32, i32) {
    %c0_i32 = arith.constant 0 : i32
    %c0_i32_0 = arith.constant 0 : i32
    %c0_i32_1 = arith.constant 0 : i32
    return %c0_i32, %c0_i32_0 : i32, i32
  }
  func.func @transform_2(%arg0: i32, %arg1: i32) -> (i32, i32) {
    %c0_i32 = arith.constant 0 : i32
    %c0_i32_0 = arith.constant 0 : i32
    %c0_i32_1 = arith.constant 0 : i32
    return %c0_i32, %c0_i32_0 : i32, i32
  }
  func.func @transform_3(%arg0: i32, %arg1: i32) -> (i32, i32) {
    %c0_i32 = arith.constant 0 : i32
    %c0_i32_0 = arith.constant 0 : i32
    %c0_i32_1 = arith.constant 0 : i32
    return %c0_i32, %c0_i32_0 : i32, i32
  }
  func.func @transform_4(%arg0: i32, %arg1: i32) -> (i32, i32) {
    %c0_i32 = arith.constant 0 : i32
    %c0_i32_0 = arith.constant 0 : i32
    %c0_i32_1 = arith.constant 0 : i32
    return %c0_i32, %c0_i32_0 : i32, i32
  }
  func.func @transform_5(%arg0: i32, %arg1: i32) -> (i32, i32) {
    %c0_i32 = arith.constant 0 : i32
    %c0_i32_0 = arith.constant 0 : i32
    %c0_i32_1 = arith.constant 0 : i32
    return %c0_i32, %c0_i32_0 : i32, i32
  }
  func.func @transform_6(%arg0: i32, %arg1: i32) -> (i32, i32) {
    %c0_i32 = arith.constant 0 : i32
    %c0_i32_0 = arith.constant 0 : i32
    %c0_i32_1 = arith.constant 0 : i32
    return %c0_i32, %c0_i32_0 : i32, i32
  }
  func.func @transform_7(%arg0: i32, %arg1: i32) -> (i32, i32) {
    %c0_i32 = arith.constant 0 : i32
    %c0_i32_0 = arith.constant 0 : i32
    %c0_i32_1 = arith.constant 0 : i32
    return %c0_i32, %c0_i32_0 : i32, i32
  }
  func.func @transform_8(%arg0: i32, %arg1: i32) -> (i32, i32) {
    %c0_i32 = arith.constant 0 : i32
    %c0_i32_0 = arith.constant 0 : i32
    %c0_i32_1 = arith.constant 0 : i32
    return %c0_i32, %c0_i32_0 : i32, i32
  }
  func.func @transform_9(%arg0: i32, %arg1: i32) -> (i32, i32) {
    %c0_i32 = arith.constant 0 : i32
    %c0_i32_0 = arith.constant 0 : i32
    %c0_i32_1 = arith.constant 0 : i32
    return %c0_i32, %c0_i32_0 : i32, i32
  }
  func.func @transform_10(%arg0: i32, %arg1: i32) -> (i32, i32) {
    %c0_i32 = arith.constant 0 : i32
    %c0_i32_0 = arith.constant 0 : i32
    %c0_i32_1 = arith.constant 0 : i32
    return %c0_i32, %c0_i32_0 : i32, i32
  }
  func.func @transform_11(%arg0: i32, %arg1: i32) -> (i32, i32) {
    %c0_i32 = arith.constant 0 : i32
    %c0_i32_0 = arith.constant 0 : i32
    %c0_i32_1 = arith.constant 0 : i32
    return %c0_i32, %c0_i32_0 : i32, i32
  }
  func.func @transform_12(%arg0: i32, %arg1: i32) -> (i32, i32) {
    %c0_i32 = arith.constant 0 : i32
    %c0_i32_0 = arith.constant 0 : i32
    %c0_i32_1 = arith.constant 0 : i32
    return %c0_i32, %c0_i32_0 : i32, i32
  }
  func.func @transform_13(%arg0: i32, %arg1: i32) -> (i32, i32, i32) {
    %c0_i32 = arith.constant 0 : i32
    %c0_i32_0 = arith.constant 0 : i32
    return %arg0, %arg1, %c0_i32 : i32, i32, i32
  }
  func.func @transform_14(%arg0: i32, %arg1: i32) -> (i32, i32, i32, i32) {
    %c0_i32 = arith.constant 0 : i32
    %c0_i32_0 = arith.constant 0 : i32
    %c0_i32_1 = arith.constant 0 : i32
    return %arg0, %c0_i32, %arg1, %c0_i32_0 : i32, i32, i32, i32
  }
}

module attributes {stable_mosaic.version = 11 : i64} {
  func.func @global_workspace_kernel(%arg0: i32, %arg1: i32, %arg2: memref<1x8x32xbf16, #tpu.memory_space<vmem>>, %arg3: memref<1x32xf32, #tpu.memory_space<vmem>>, %arg4: memref<1x32xf32, #tpu.memory_space<vmem>>, %arg5: memref<1x32xf32, #tpu.memory_space<vmem>>, %arg6: memref<1x32xf32, #tpu.memory_space<vmem>>, %arg7: memref<32x32xbf16, #tpu.memory_space<vmem>>, %arg8: memref<1x32xf32, #tpu.memory_space<vmem>>, %arg9: memref<32x64xbf16, #tpu.memory_space<vmem>>, %arg10: memref<1x64xf32, #tpu.memory_space<vmem>>, %arg11: memref<32x128xbf16, #tpu.memory_space<vmem>>, %arg12: memref<1x128xf32, #tpu.memory_space<vmem>>, %arg13: memref<128x32xbf16, #tpu.memory_space<vmem>>, %arg14: memref<1x32xf32, #tpu.memory_space<vmem>>, %arg15: memref<1x8x32xbf16, #tpu.memory_space<vmem>>, %arg16: memref<1x4x8x8xbf16, #tpu.memory_space<vmem>>, %arg17: memref<8x32xbf16, #tpu.memory_space<vmem>>, %arg18: memref<8x32xbf16, #tpu.memory_space<vmem>>, %arg19: memref<8x32xbf16, #tpu.memory_space<vmem>>, %arg20: memref<8x32xf32, #tpu.memory_space<vmem>>) attributes {dimension_semantics = [#tpu.dimension_semantics<parallel>, #tpu.dimension_semantics<arbitrary>], iteration_bounds = array<i64: 2, 1>, scalar_prefetch = 0 : i64, scratch_operands = 4 : i64, tpu.core_type = #tpu.core_type<tc>, window_params = [{transform_indices = @transform_0, window_bounds = array<i64: 1, 8, 32>}, {pipeline_mode = #tpu.pipeline_mode<synchronous>, transform_indices = @transform_1, window_bounds = array<i64: 1, 32>}, {pipeline_mode = #tpu.pipeline_mode<synchronous>, transform_indices = @transform_2, window_bounds = array<i64: 1, 32>}, {pipeline_mode = #tpu.pipeline_mode<synchronous>, transform_indices = @transform_3, window_bounds = array<i64: 1, 32>}, {pipeline_mode = #tpu.pipeline_mode<synchronous>, transform_indices = @transform_4, window_bounds = array<i64: 1, 32>}, {pipeline_mode = #tpu.pipeline_mode<synchronous>, transform_indices = @transform_5, window_bounds = array<i64: 32, 32>}, {pipeline_mode = #tpu.pipeline_mode<synchronous>, transform_indices = @transform_6, window_bounds = array<i64: 1, 32>}, {pipeline_mode = #tpu.pipeline_mode<synchronous>, transform_indices = @transform_7, window_bounds = array<i64: 32, 64>}, {pipeline_mode = #tpu.pipeline_mode<synchronous>, transform_indices = @transform_8, window_bounds = array<i64: 1, 64>}, {pipeline_mode = #tpu.pipeline_mode<synchronous>, transform_indices = @transform_9, window_bounds = array<i64: 32, 128>}, {pipeline_mode = #tpu.pipeline_mode<synchronous>, transform_indices = @transform_10, window_bounds = array<i64: 1, 128>}, {pipeline_mode = #tpu.pipeline_mode<synchronous>, transform_indices = @transform_11, window_bounds = array<i64: 128, 32>}, {pipeline_mode = #tpu.pipeline_mode<synchronous>, transform_indices = @transform_12, window_bounds = array<i64: 1, 32>}, {transform_indices = @transform_13, window_bounds = array<i64: 1, 8, 32>}, {transform_indices = @transform_14, window_bounds = array<i64: 1, 4, 8, 8>}]} {
    %c0 = arith.constant 0 : index
    %c0_0 = arith.constant 0 : index
    %0 = vector.load %arg3[%c0, %c0_0] : memref<1x32xf32, #tpu.memory_space<vmem>>, vector<1x32xf32>
    %c0_1 = arith.constant 0 : index
    %c0_2 = arith.constant 0 : index
    %1 = vector.load %arg4[%c0_1, %c0_2] : memref<1x32xf32, #tpu.memory_space<vmem>>, vector<1x32xf32>
    %c0_i32 = arith.constant 0 : i32
    %2 = arith.cmpi eq, %arg1, %c0_i32 : i32
    %3 = arith.extui %2 : i1 to i32
    %c0_i32_3 = arith.constant 0 : i32
    %c0_i32_4 = arith.constant 0 : i32
    %4 = arith.cmpi ne, %3, %c0_i32_4 : i32
    scf.if %4 {
      %c0_i32_88 = arith.constant 0 : i32
      %c8_i32_89 = arith.constant 8 : i32
      %152 = arith.muli %c0_i32_88, %c8_i32_89 : i32
      %153 = tpu.assume_multiple %152, 8 : i32
      %c0_i32_90 = arith.constant 0 : i32
      %c0_i32_91 = arith.constant 0 : i32
      %154 = tpu.memref_slice %arg2[%c0_i32_3, %c0_i32_90, %c0_i32_91] : memref<1x8x32xbf16, #tpu.memory_space<vmem>> -> memref<1x8x32xbf16, #tpu.memory_space<vmem>>
      %155 = tpu.memref_squeeze %154 : memref<1x8x32xbf16, #tpu.memory_space<vmem>> -> memref<8x32xbf16, #tpu.memory_space<vmem>>
      %156 = arith.index_cast %153 : i32 to index
      %c0_92 = arith.constant 0 : index
      %157 = vector.load %155[%156, %c0_92] : memref<8x32xbf16, #tpu.memory_space<vmem>>, vector<8x32xbf16>
      %158 = arith.extf %157 : vector<8x32xbf16> to vector<8x32xf32>
      %cst_93 = arith.constant dense<0.000000e+00> : vector<8xf32>
      %159 = vector.multi_reduction <add>, %158, %cst_93 [1] : vector<8x32xf32> to vector<8xf32>
      %160 = vector.shape_cast %159 : vector<8xf32> to vector<8x1xf32>
      %cst_94 = arith.constant 3.200000e+01 : f32
      %161 = vector.broadcast %cst_94 : f32 to vector<8x1xf32>
      %162 = arith.divf %160, %161 : vector<8x1xf32>
      %163 = vector.broadcast %162 : vector<8x1xf32> to vector<8x32xf32>
      %164 = arith.subf %158, %163 : vector<8x32xf32>
      %165 = arith.mulf %164, %164 : vector<8x32xf32>
      %cst_95 = arith.constant dense<0.000000e+00> : vector<8xf32>
      %166 = vector.multi_reduction <add>, %165, %cst_95 [1] : vector<8x32xf32> to vector<8xf32>
      %167 = vector.shape_cast %166 : vector<8xf32> to vector<8x1xf32>
      %cst_96 = arith.constant 3.200000e+01 : f32
      %168 = vector.broadcast %cst_96 : f32 to vector<8x1xf32>
      %169 = arith.divf %167, %168 : vector<8x1xf32>
      %170 = vector.broadcast %162 : vector<8x1xf32> to vector<8x32xf32>
      %171 = arith.subf %158, %170 : vector<8x32xf32>
      %cst_97 = arith.constant 9.99999974E-6 : f32
      %172 = vector.broadcast %cst_97 : f32 to vector<8x1xf32>
      %173 = arith.addf %169, %172 : vector<8x1xf32>
      %174 = math.rsqrt %173 : vector<8x1xf32>
      %175 = vector.broadcast %174 : vector<8x1xf32> to vector<8x32xf32>
      %176 = arith.mulf %171, %175 : vector<8x32xf32>
      %177 = vector.broadcast %0 : vector<1x32xf32> to vector<8x32xf32>
      %178 = arith.mulf %176, %177 : vector<8x32xf32>
      %179 = vector.broadcast %1 : vector<1x32xf32> to vector<8x32xf32>
      %180 = arith.addf %178, %179 : vector<8x32xf32>
      %181 = arith.truncf %180 : vector<8x32xf32> to vector<8x32xbf16>
      %182 = arith.index_cast %153 : i32 to index
      %c0_98 = arith.constant 0 : index
      %183 = vector.load %arg17[%182, %c0_98] : memref<8x32xbf16, #tpu.memory_space<vmem>>, vector<8x32xbf16>
      tpu.vector_store %arg17[%182, %c0_98], %181 {strides = array<i32>} : memref<8x32xbf16, #tpu.memory_space<vmem>>, vector<8x32xbf16>,
      %c0_99 = arith.constant 0 : index
      %c0_100 = arith.constant 0 : index
      %184 = vector.load %arg9[%c0_99, %c0_100] : memref<32x64xbf16, #tpu.memory_space<vmem>>, vector<32x64xbf16>
      %cst_101 = arith.constant dense<0.000000e+00> : vector<8x64xf32>
      %185 = tpu.matmul %181, %184, %cst_101 {dimension_numbers = #tpu.dot_dimension_numbers<[1], [0], [0], [1], [0, 0, 1, 1], [], []>} : vector<8x32xbf16>, vector<32x64xbf16>, vector<8x64xf32> -> vector<8x64xf32>
      %c0_102 = arith.constant 0 : index
      %c0_103 = arith.constant 0 : index
      %186 = vector.load %arg10[%c0_102, %c0_103] : memref<1x64xf32, #tpu.memory_space<vmem>>, vector<1x64xf32>
      %187 = vector.broadcast %186 : vector<1x64xf32> to vector<8x64xf32>
      %188 = arith.addf %185, %187 : vector<8x64xf32>
      %189 = arith.truncf %188 : vector<8x64xf32> to vector<8x64xbf16>
      %190 = vector.extract_strided_slice %189 {offsets = [0, 0], sizes = [8, 32], strides = [1, 1]} : vector<8x64xbf16> to vector<8x32xbf16>
      %191 = arith.index_cast %153 : i32 to index
      %c0_104 = arith.constant 0 : index
      %192 = vector.load %arg18[%191, %c0_104] : memref<8x32xbf16, #tpu.memory_space<vmem>>, vector<8x32xbf16>
      tpu.vector_store %arg18[%191, %c0_104], %190 {strides = array<i32>} : memref<8x32xbf16, #tpu.memory_space<vmem>>, vector<8x32xbf16>,
      %193 = vector.extract_strided_slice %189 {offsets = [0, 32], sizes = [8, 32], strides = [1, 1]} : vector<8x64xbf16> to vector<8x32xbf16>
      %194 = arith.index_cast %153 : i32 to index
      %c0_105 = arith.constant 0 : index
      %195 = vector.load %arg19[%194, %c0_105] : memref<8x32xbf16, #tpu.memory_space<vmem>>, vector<8x32xbf16>
      tpu.vector_store %arg19[%194, %c0_105], %193 {strides = array<i32>} : memref<8x32xbf16, #tpu.memory_space<vmem>>, vector<8x32xbf16>,
      %c1_i32 = arith.constant 1 : i32
    } else {
    }
    %c8_i32 = arith.constant 8 : i32
    %5 = arith.muli %arg1, %c8_i32 : i32
    %6 = tpu.assume_multiple %5, 8 : i32
    %7 = arith.index_cast %6 : i32 to index
    %c0_5 = arith.constant 0 : index
    %8 = vector.load %arg17[%7, %c0_5] : memref<8x32xbf16, #tpu.memory_space<vmem>>, vector<8x32xbf16>
    %c0_6 = arith.constant 0 : index
    %c0_7 = arith.constant 0 : index
    %9 = vector.load %arg7[%c0_6, %c0_7] : memref<32x32xbf16, #tpu.memory_space<vmem>>, vector<32x32xbf16>
    %cst = arith.constant dense<0.000000e+00> : vector<8x32xf32>
    %10 = tpu.matmul %8, %9, %cst {dimension_numbers = #tpu.dot_dimension_numbers<[1], [0], [0], [1], [0, 0, 1, 1], [], []>} : vector<8x32xbf16>, vector<32x32xbf16>, vector<8x32xf32> -> vector<8x32xf32>
    %c0_8 = arith.constant 0 : index
    %c0_9 = arith.constant 0 : index
    %11 = vector.load %arg8[%c0_8, %c0_9] : memref<1x32xf32, #tpu.memory_space<vmem>>, vector<1x32xf32>
    %12 = vector.broadcast %11 : vector<1x32xf32> to vector<8x32xf32>
    %13 = arith.addf %10, %12 : vector<8x32xf32>
    %14 = arith.truncf %13 : vector<8x32xf32> to vector<8x32xbf16>
    %15 = vector.extract_strided_slice %14 {offsets = [0, 0], sizes = [8, 8], strides = [1, 1]} : vector<8x32xbf16> to vector<8x8xbf16>
    %c0_10 = arith.constant 0 : index
    %c0_11 = arith.constant 0 : index
    %16 = vector.load %arg18[%c0_10, %c0_11] : memref<8x32xbf16, #tpu.memory_space<vmem>>, vector<8x8xbf16>
    %c0_12 = arith.constant 0 : index
    %c0_13 = arith.constant 0 : index
    %17 = vector.load %arg19[%c0_12, %c0_13] : memref<8x32xbf16, #tpu.memory_space<vmem>>, vector<8x8xbf16>
    %cst_14 = arith.constant dense<0.000000e+00> : vector<8x8xf32>
    %18 = tpu.matmul %15, %16, %cst_14 {dimension_numbers = #tpu.dot_dimension_numbers<[1], [1], [0], [0], [0, 0, 1, 0], [], []>} : vector<8x8xbf16>, vector<8x8xbf16>, vector<8x8xf32> -> vector<8x8xf32>
    %cst_15 = arith.constant dense<0xFF800000> : vector<8xf32>
    %19 = vector.multi_reduction <maximumf>, %18, %cst_15 [1] : vector<8x8xf32> to vector<8xf32>
    %20 = vector.shape_cast %19 : vector<8xf32> to vector<8x1xf32>
    %21 = vector.broadcast %20 : vector<8x1xf32> to vector<8x8xf32>
    %22 = arith.subf %18, %21 : vector<8x8xf32>
    %23 = math.exp %22 : vector<8x8xf32>
    %cst_16 = arith.constant dense<0.000000e+00> : vector<8xf32>
    %24 = vector.multi_reduction <add>, %23, %cst_16 [1] : vector<8x8xf32> to vector<8xf32>
    %25 = vector.shape_cast %24 : vector<8xf32> to vector<8x1xf32>
    %26 = tpu.reciprocal %25 {approx = true} : vector<8x1xf32> -> vector<8x1xf32>
    %27 = vector.broadcast %26 : vector<8x1xf32> to vector<8x8xf32>
    %28 = arith.mulf %23, %27 : vector<8x8xf32>
    %29 = arith.truncf %28 : vector<8x8xf32> to vector<8x8xbf16>
    %c0_17 = arith.constant 0 : index
    %c0_18 = arith.constant 0 : index
    %c0_19 = arith.constant 0 : index
    %c0_20 = arith.constant 0 : index
    %30 = vector.load %arg16[%c0_17, %c0_18, %c0_19, %c0_20] : memref<1x4x8x8xbf16, #tpu.memory_space<vmem>>, vector<1x1x8x8xbf16>
    %31 = vector.shape_cast %30 : vector<1x1x8x8xbf16> to vector<8x8xbf16>
    %32 = vector.shape_cast %29 : vector<8x8xbf16> to vector<1x1x8x8xbf16>
    tpu.vector_store %arg16[%c0_17, %c0_18, %c0_19, %c0_20], %32 {strides = array<i32>} : memref<1x4x8x8xbf16, #tpu.memory_space<vmem>>, vector<1x1x8x8xbf16>,
    %cst_21 = arith.constant dense<0.000000e+00> : vector<8x8xf32>
    %33 = tpu.matmul %29, %17, %cst_21 {dimension_numbers = #tpu.dot_dimension_numbers<[1], [0], [0], [1], [0, 0, 1, 1], [], []>} : vector<8x8xbf16>, vector<8x8xbf16>, vector<8x8xf32> -> vector<8x8xf32>
    %c0_22 = arith.constant 0 : index
    %c0_23 = arith.constant 0 : index
    %34 = vector.load %arg20[%c0_22, %c0_23] : memref<8x32xf32, #tpu.memory_space<vmem>>, vector<8x8xf32>
    tpu.vector_store %arg20[%c0_22, %c0_23], %33 {strides = array<i32>} : memref<8x32xf32, #tpu.memory_space<vmem>>, vector<8x8xf32>,
    %35 = vector.extract_strided_slice %14 {offsets = [0, 8], sizes = [8, 8], strides = [1, 1]} : vector<8x32xbf16> to vector<8x8xbf16>
    %c0_24 = arith.constant 0 : index
    %c8 = arith.constant 8 : index
    %36 = vector.load %arg18[%c0_24, %c8] : memref<8x32xbf16, #tpu.memory_space<vmem>>, vector<8x8xbf16>
    %c0_25 = arith.constant 0 : index
    %c8_26 = arith.constant 8 : index
    %37 = vector.load %arg19[%c0_25, %c8_26] : memref<8x32xbf16, #tpu.memory_space<vmem>>, vector<8x8xbf16>
    %cst_27 = arith.constant dense<0.000000e+00> : vector<8x8xf32>
    %38 = tpu.matmul %35, %36, %cst_27 {dimension_numbers = #tpu.dot_dimension_numbers<[1], [1], [0], [0], [0, 0, 1, 0], [], []>} : vector<8x8xbf16>, vector<8x8xbf16>, vector<8x8xf32> -> vector<8x8xf32>
    %cst_28 = arith.constant dense<0xFF800000> : vector<8xf32>
    %39 = vector.multi_reduction <maximumf>, %38, %cst_28 [1] : vector<8x8xf32> to vector<8xf32>
    %40 = vector.shape_cast %39 : vector<8xf32> to vector<8x1xf32>
    %41 = vector.broadcast %40 : vector<8x1xf32> to vector<8x8xf32>
    %42 = arith.subf %38, %41 : vector<8x8xf32>
    %43 = math.exp %42 : vector<8x8xf32>
    %cst_29 = arith.constant dense<0.000000e+00> : vector<8xf32>
    %44 = vector.multi_reduction <add>, %43, %cst_29 [1] : vector<8x8xf32> to vector<8xf32>
    %45 = vector.shape_cast %44 : vector<8xf32> to vector<8x1xf32>
    %46 = tpu.reciprocal %45 {approx = true} : vector<8x1xf32> -> vector<8x1xf32>
    %47 = vector.broadcast %46 : vector<8x1xf32> to vector<8x8xf32>
    %48 = arith.mulf %43, %47 : vector<8x8xf32>
    %49 = arith.truncf %48 : vector<8x8xf32> to vector<8x8xbf16>
    %c0_30 = arith.constant 0 : index
    %c1 = arith.constant 1 : index
    %c0_31 = arith.constant 0 : index
    %c0_32 = arith.constant 0 : index
    %50 = vector.load %arg16[%c0_30, %c1, %c0_31, %c0_32] : memref<1x4x8x8xbf16, #tpu.memory_space<vmem>>, vector<1x1x8x8xbf16>
    %51 = vector.shape_cast %50 : vector<1x1x8x8xbf16> to vector<8x8xbf16>
    %52 = vector.shape_cast %49 : vector<8x8xbf16> to vector<1x1x8x8xbf16>
    tpu.vector_store %arg16[%c0_30, %c1, %c0_31, %c0_32], %52 {strides = array<i32>} : memref<1x4x8x8xbf16, #tpu.memory_space<vmem>>, vector<1x1x8x8xbf16>,
    %cst_33 = arith.constant dense<0.000000e+00> : vector<8x8xf32>
    %53 = tpu.matmul %49, %37, %cst_33 {dimension_numbers = #tpu.dot_dimension_numbers<[1], [0], [0], [1], [0, 0, 1, 1], [], []>} : vector<8x8xbf16>, vector<8x8xbf16>, vector<8x8xf32> -> vector<8x8xf32>
    %c0_34 = arith.constant 0 : index
    %c8_35 = arith.constant 8 : index
    %54 = vector.load %arg20[%c0_34, %c8_35] : memref<8x32xf32, #tpu.memory_space<vmem>>, vector<8x8xf32>
    tpu.vector_store %arg20[%c0_34, %c8_35], %53 {strides = array<i32>} : memref<8x32xf32, #tpu.memory_space<vmem>>, vector<8x8xf32>,
    %55 = vector.extract_strided_slice %14 {offsets = [0, 16], sizes = [8, 8], strides = [1, 1]} : vector<8x32xbf16> to vector<8x8xbf16>
    %c0_36 = arith.constant 0 : index
    %c16 = arith.constant 16 : index
    %56 = vector.load %arg18[%c0_36, %c16] : memref<8x32xbf16, #tpu.memory_space<vmem>>, vector<8x8xbf16>
    %c0_37 = arith.constant 0 : index
    %c16_38 = arith.constant 16 : index
    %57 = vector.load %arg19[%c0_37, %c16_38] : memref<8x32xbf16, #tpu.memory_space<vmem>>, vector<8x8xbf16>
    %cst_39 = arith.constant dense<0.000000e+00> : vector<8x8xf32>
    %58 = tpu.matmul %55, %56, %cst_39 {dimension_numbers = #tpu.dot_dimension_numbers<[1], [1], [0], [0], [0, 0, 1, 0], [], []>} : vector<8x8xbf16>, vector<8x8xbf16>, vector<8x8xf32> -> vector<8x8xf32>
    %cst_40 = arith.constant dense<0xFF800000> : vector<8xf32>
    %59 = vector.multi_reduction <maximumf>, %58, %cst_40 [1] : vector<8x8xf32> to vector<8xf32>
    %60 = vector.shape_cast %59 : vector<8xf32> to vector<8x1xf32>
    %61 = vector.broadcast %60 : vector<8x1xf32> to vector<8x8xf32>
    %62 = arith.subf %58, %61 : vector<8x8xf32>
    %63 = math.exp %62 : vector<8x8xf32>
    %cst_41 = arith.constant dense<0.000000e+00> : vector<8xf32>
    %64 = vector.multi_reduction <add>, %63, %cst_41 [1] : vector<8x8xf32> to vector<8xf32>
    %65 = vector.shape_cast %64 : vector<8xf32> to vector<8x1xf32>
    %66 = tpu.reciprocal %65 {approx = true} : vector<8x1xf32> -> vector<8x1xf32>
    %67 = vector.broadcast %66 : vector<8x1xf32> to vector<8x8xf32>
    %68 = arith.mulf %63, %67 : vector<8x8xf32>
    %69 = arith.truncf %68 : vector<8x8xf32> to vector<8x8xbf16>
    %c0_42 = arith.constant 0 : index
    %c2 = arith.constant 2 : index
    %c0_43 = arith.constant 0 : index
    %c0_44 = arith.constant 0 : index
    %70 = vector.load %arg16[%c0_42, %c2, %c0_43, %c0_44] : memref<1x4x8x8xbf16, #tpu.memory_space<vmem>>, vector<1x1x8x8xbf16>
    %71 = vector.shape_cast %70 : vector<1x1x8x8xbf16> to vector<8x8xbf16>
    %72 = vector.shape_cast %69 : vector<8x8xbf16> to vector<1x1x8x8xbf16>
    tpu.vector_store %arg16[%c0_42, %c2, %c0_43, %c0_44], %72 {strides = array<i32>} : memref<1x4x8x8xbf16, #tpu.memory_space<vmem>>, vector<1x1x8x8xbf16>,
    %cst_45 = arith.constant dense<0.000000e+00> : vector<8x8xf32>
    %73 = tpu.matmul %69, %57, %cst_45 {dimension_numbers = #tpu.dot_dimension_numbers<[1], [0], [0], [1], [0, 0, 1, 1], [], []>} : vector<8x8xbf16>, vector<8x8xbf16>, vector<8x8xf32> -> vector<8x8xf32>
    %c0_46 = arith.constant 0 : index
    %c16_47 = arith.constant 16 : index
    %74 = vector.load %arg20[%c0_46, %c16_47] : memref<8x32xf32, #tpu.memory_space<vmem>>, vector<8x8xf32>
    tpu.vector_store %arg20[%c0_46, %c16_47], %73 {strides = array<i32>} : memref<8x32xf32, #tpu.memory_space<vmem>>, vector<8x8xf32>,
    %75 = vector.extract_strided_slice %14 {offsets = [0, 24], sizes = [8, 8], strides = [1, 1]} : vector<8x32xbf16> to vector<8x8xbf16>
    %c0_48 = arith.constant 0 : index
    %c24 = arith.constant 24 : index
    %76 = vector.load %arg18[%c0_48, %c24] : memref<8x32xbf16, #tpu.memory_space<vmem>>, vector<8x8xbf16>
    %c0_49 = arith.constant 0 : index
    %c24_50 = arith.constant 24 : index
    %77 = vector.load %arg19[%c0_49, %c24_50] : memref<8x32xbf16, #tpu.memory_space<vmem>>, vector<8x8xbf16>
    %cst_51 = arith.constant dense<0.000000e+00> : vector<8x8xf32>
    %78 = tpu.matmul %75, %76, %cst_51 {dimension_numbers = #tpu.dot_dimension_numbers<[1], [1], [0], [0], [0, 0, 1, 0], [], []>} : vector<8x8xbf16>, vector<8x8xbf16>, vector<8x8xf32> -> vector<8x8xf32>
    %cst_52 = arith.constant dense<0xFF800000> : vector<8xf32>
    %79 = vector.multi_reduction <maximumf>, %78, %cst_52 [1] : vector<8x8xf32> to vector<8xf32>
    %80 = vector.shape_cast %79 : vector<8xf32> to vector<8x1xf32>
    %81 = vector.broadcast %80 : vector<8x1xf32> to vector<8x8xf32>
    %82 = arith.subf %78, %81 : vector<8x8xf32>
    %83 = math.exp %82 : vector<8x8xf32>
    %cst_53 = arith.constant dense<0.000000e+00> : vector<8xf32>
    %84 = vector.multi_reduction <add>, %83, %cst_53 [1] : vector<8x8xf32> to vector<8xf32>
    %85 = vector.shape_cast %84 : vector<8xf32> to vector<8x1xf32>
    %86 = tpu.reciprocal %85 {approx = true} : vector<8x1xf32> -> vector<8x1xf32>
    %87 = vector.broadcast %86 : vector<8x1xf32> to vector<8x8xf32>
    %88 = arith.mulf %83, %87 : vector<8x8xf32>
    %89 = arith.truncf %88 : vector<8x8xf32> to vector<8x8xbf16>
    %c0_54 = arith.constant 0 : index
    %c3 = arith.constant 3 : index
    %c0_55 = arith.constant 0 : index
    %c0_56 = arith.constant 0 : index
    %90 = vector.load %arg16[%c0_54, %c3, %c0_55, %c0_56] : memref<1x4x8x8xbf16, #tpu.memory_space<vmem>>, vector<1x1x8x8xbf16>
    %91 = vector.shape_cast %90 : vector<1x1x8x8xbf16> to vector<8x8xbf16>
    %92 = vector.shape_cast %89 : vector<8x8xbf16> to vector<1x1x8x8xbf16>
    tpu.vector_store %arg16[%c0_54, %c3, %c0_55, %c0_56], %92 {strides = array<i32>} : memref<1x4x8x8xbf16, #tpu.memory_space<vmem>>, vector<1x1x8x8xbf16>,
    %cst_57 = arith.constant dense<0.000000e+00> : vector<8x8xf32>
    %93 = tpu.matmul %89, %77, %cst_57 {dimension_numbers = #tpu.dot_dimension_numbers<[1], [0], [0], [1], [0, 0, 1, 1], [], []>} : vector<8x8xbf16>, vector<8x8xbf16>, vector<8x8xf32> -> vector<8x8xf32>
    %c0_58 = arith.constant 0 : index
    %c24_59 = arith.constant 24 : index
    %94 = vector.load %arg20[%c0_58, %c24_59] : memref<8x32xf32, #tpu.memory_space<vmem>>, vector<8x8xf32>
    tpu.vector_store %arg20[%c0_58, %c24_59], %93 {strides = array<i32>} : memref<8x32xf32, #tpu.memory_space<vmem>>, vector<8x8xf32>,
    %c0_60 = arith.constant 0 : index
    %c0_61 = arith.constant 0 : index
    %95 = vector.load %arg20[%c0_60, %c0_61] : memref<8x32xf32, #tpu.memory_space<vmem>>, vector<8x32xf32>
    %96 = arith.extf %8 : vector<8x32xbf16> to vector<8x32xf32>
    %97 = arith.addf %96, %95 : vector<8x32xf32>
    %c0_62 = arith.constant 0 : index
    %c0_63 = arith.constant 0 : index
    %98 = vector.load %arg5[%c0_62, %c0_63] : memref<1x32xf32, #tpu.memory_space<vmem>>, vector<1x32xf32>
    %c0_64 = arith.constant 0 : index
    %c0_65 = arith.constant 0 : index
    %99 = vector.load %arg6[%c0_64, %c0_65] : memref<1x32xf32, #tpu.memory_space<vmem>>, vector<1x32xf32>
    %cst_66 = arith.constant dense<0.000000e+00> : vector<8xf32>
    %100 = vector.multi_reduction <add>, %97, %cst_66 [1] : vector<8x32xf32> to vector<8xf32>
    %101 = vector.shape_cast %100 : vector<8xf32> to vector<8x1xf32>
    %cst_67 = arith.constant 3.200000e+01 : f32
    %102 = vector.broadcast %cst_67 : f32 to vector<8x1xf32>
    %103 = arith.divf %101, %102 : vector<8x1xf32>
    %104 = vector.broadcast %103 : vector<8x1xf32> to vector<8x32xf32>
    %105 = arith.subf %97, %104 : vector<8x32xf32>
    %106 = arith.mulf %105, %105 : vector<8x32xf32>
    %cst_68 = arith.constant dense<0.000000e+00> : vector<8xf32>
    %107 = vector.multi_reduction <add>, %106, %cst_68 [1] : vector<8x32xf32> to vector<8xf32>
    %108 = vector.shape_cast %107 : vector<8xf32> to vector<8x1xf32>
    %cst_69 = arith.constant 3.200000e+01 : f32
    %109 = vector.broadcast %cst_69 : f32 to vector<8x1xf32>
    %110 = arith.divf %108, %109 : vector<8x1xf32>
    %111 = vector.broadcast %103 : vector<8x1xf32> to vector<8x32xf32>
    %112 = arith.subf %97, %111 : vector<8x32xf32>
    %cst_70 = arith.constant 9.99999974E-6 : f32
    %113 = vector.broadcast %cst_70 : f32 to vector<8x1xf32>
    %114 = arith.addf %110, %113 : vector<8x1xf32>
    %115 = math.rsqrt %114 : vector<8x1xf32>
    %116 = vector.broadcast %115 : vector<8x1xf32> to vector<8x32xf32>
    %117 = arith.mulf %112, %116 : vector<8x32xf32>
    %118 = vector.broadcast %98 : vector<1x32xf32> to vector<8x32xf32>
    %119 = arith.mulf %117, %118 : vector<8x32xf32>
    %120 = vector.broadcast %99 : vector<1x32xf32> to vector<8x32xf32>
    %121 = arith.addf %119, %120 : vector<8x32xf32>
    %122 = arith.truncf %121 : vector<8x32xf32> to vector<8x32xbf16>
    %c0_71 = arith.constant 0 : index
    %c0_72 = arith.constant 0 : index
    %123 = vector.load %arg11[%c0_71, %c0_72] : memref<32x128xbf16, #tpu.memory_space<vmem>>, vector<32x128xbf16>
    %cst_73 = arith.constant dense<0.000000e+00> : vector<8x128xf32>
    %124 = tpu.matmul %122, %123, %cst_73 {dimension_numbers = #tpu.dot_dimension_numbers<[1], [0], [0], [1], [0, 0, 1, 1], [], []>} : vector<8x32xbf16>, vector<32x128xbf16>, vector<8x128xf32> -> vector<8x128xf32>
    %c0_74 = arith.constant 0 : index
    %c0_75 = arith.constant 0 : index
    %125 = vector.load %arg12[%c0_74, %c0_75] : memref<1x128xf32, #tpu.memory_space<vmem>>, vector<1x128xf32>
    %126 = vector.broadcast %125 : vector<1x128xf32> to vector<8x128xf32>
    %127 = arith.addf %124, %126 : vector<8x128xf32>
    %cst_76 = arith.constant 5.000000e-01 : f32
    %128 = vector.broadcast %cst_76 : f32 to vector<8x128xf32>
    %129 = arith.mulf %128, %127 : vector<8x128xf32>
    %cst_77 = arith.constant 4.471500e-02 : f32
    %130 = vector.broadcast %cst_77 : f32 to vector<8x128xf32>
    %131 = arith.mulf %130, %127 : vector<8x128xf32>
    %132 = arith.mulf %131, %127 : vector<8x128xf32>
    %133 = arith.mulf %132, %127 : vector<8x128xf32>
    %134 = arith.addf %127, %133 : vector<8x128xf32>
    %cst_78 = arith.constant 0.797884583 : f32
    %135 = vector.broadcast %cst_78 : f32 to vector<8x128xf32>
    %136 = arith.mulf %135, %134 : vector<8x128xf32>
    %137 = math.tanh %136 : vector<8x128xf32>
    %cst_79 = arith.constant 1.000000e+00 : f32
    %138 = vector.broadcast %cst_79 : f32 to vector<8x128xf32>
    %139 = arith.addf %138, %137 : vector<8x128xf32>
    %140 = arith.mulf %129, %139 : vector<8x128xf32>
    %141 = arith.truncf %140 : vector<8x128xf32> to vector<8x128xbf16>
    %c0_80 = arith.constant 0 : index
    %c0_81 = arith.constant 0 : index
    %142 = vector.load %arg13[%c0_80, %c0_81] : memref<128x32xbf16, #tpu.memory_space<vmem>>, vector<128x32xbf16>
    %cst_82 = arith.constant dense<0.000000e+00> : vector<8x32xf32>
    %143 = tpu.matmul %141, %142, %cst_82 {dimension_numbers = #tpu.dot_dimension_numbers<[1], [0], [0], [1], [0, 0, 1, 1], [], []>} : vector<8x128xbf16>, vector<128x32xbf16>, vector<8x32xf32> -> vector<8x32xf32>
    %c0_83 = arith.constant 0 : index
    %c0_84 = arith.constant 0 : index
    %144 = vector.load %arg14[%c0_83, %c0_84] : memref<1x32xf32, #tpu.memory_space<vmem>>, vector<1x32xf32>
    %145 = vector.broadcast %144 : vector<1x32xf32> to vector<8x32xf32>
    %146 = arith.addf %143, %145 : vector<8x32xf32>
    %147 = arith.addf %97, %146 : vector<8x32xf32>
    %148 = arith.truncf %147 : vector<8x32xf32> to vector<8x32xbf16>
    %c0_85 = arith.constant 0 : index
    %c0_86 = arith.constant 0 : index
    %c0_87 = arith.constant 0 : index
    %149 = vector.load %arg15[%c0_85, %c0_86, %c0_87] : memref<1x8x32xbf16, #tpu.memory_space<vmem>>, vector<1x8x32xbf16>
    %150 = vector.shape_cast %149 : vector<1x8x32xbf16> to vector<8x32xbf16>
    %151 = vector.shape_cast %148 : vector<8x32xbf16> to vector<1x8x32xbf16>
    tpu.vector_store %arg15[%c0_85, %c0_86, %c0_87], %151 {strides = array<i32>} : memref<1x8x32xbf16, #tpu.memory_space<vmem>>, vector<1x8x32xbf16>,
    return
  }
  func.func @transform_0(%arg0: i32, %arg1: i32) -> (i32, i32, i32) {
    %c0_i32 = arith.constant 0 : i32
    %c0_i32_0 = arith.constant 0 : i32
    %c0_i32_1 = arith.constant 0 : i32
    return %arg0, %c0_i32, %c0_i32_0 : i32, i32, i32
  }
  func.func @transform_1(%arg0: i32, %arg1: i32) -> (i32, i32) {
    %c0_i32 = arith.constant 0 : i32
    %c0_i32_0 = arith.constant 0 : i32
    %c0_i32_1 = arith.constant 0 : i32
    return %c0_i32, %c0_i32_0 : i32, i32
  }
  func.func @transform_2(%arg0: i32, %arg1: i32) -> (i32, i32) {
    %c0_i32 = arith.constant 0 : i32
    %c0_i32_0 = arith.constant 0 : i32
    %c0_i32_1 = arith.constant 0 : i32
    return %c0_i32, %c0_i32_0 : i32, i32
  }
  func.func @transform_3(%arg0: i32, %arg1: i32) -> (i32, i32) {
    %c0_i32 = arith.constant 0 : i32
    %c0_i32_0 = arith.constant 0 : i32
    %c0_i32_1 = arith.constant 0 : i32
    return %c0_i32, %c0_i32_0 : i32, i32
  }
  func.func @transform_4(%arg0: i32, %arg1: i32) -> (i32, i32) {
    %c0_i32 = arith.constant 0 : i32
    %c0_i32_0 = arith.constant 0 : i32
    %c0_i32_1 = arith.constant 0 : i32
    return %c0_i32, %c0_i32_0 : i32, i32
  }
  func.func @transform_5(%arg0: i32, %arg1: i32) -> (i32, i32) {
    %c0_i32 = arith.constant 0 : i32
    %c0_i32_0 = arith.constant 0 : i32
    %c0_i32_1 = arith.constant 0 : i32
    return %c0_i32, %c0_i32_0 : i32, i32
  }
  func.func @transform_6(%arg0: i32, %arg1: i32) -> (i32, i32) {
    %c0_i32 = arith.constant 0 : i32
    %c0_i32_0 = arith.constant 0 : i32
    %c0_i32_1 = arith.constant 0 : i32
    return %c0_i32, %c0_i32_0 : i32, i32
  }
  func.func @transform_7(%arg0: i32, %arg1: i32) -> (i32, i32) {
    %c0_i32 = arith.constant 0 : i32
    %c0_i32_0 = arith.constant 0 : i32
    %c0_i32_1 = arith.constant 0 : i32
    return %c0_i32, %c0_i32_0 : i32, i32
  }
  func.func @transform_8(%arg0: i32, %arg1: i32) -> (i32, i32) {
    %c0_i32 = arith.constant 0 : i32
    %c0_i32_0 = arith.constant 0 : i32
    %c0_i32_1 = arith.constant 0 : i32
    return %c0_i32, %c0_i32_0 : i32, i32
  }
  func.func @transform_9(%arg0: i32, %arg1: i32) -> (i32, i32) {
    %c0_i32 = arith.constant 0 : i32
    %c0_i32_0 = arith.constant 0 : i32
    %c0_i32_1 = arith.constant 0 : i32
    return %c0_i32, %c0_i32_0 : i32, i32
  }
  func.func @transform_10(%arg0: i32, %arg1: i32) -> (i32, i32) {
    %c0_i32 = arith.constant 0 : i32
    %c0_i32_0 = arith.constant 0 : i32
    %c0_i32_1 = arith.constant 0 : i32
    return %c0_i32, %c0_i32_0 : i32, i32
  }
  func.func @transform_11(%arg0: i32, %arg1: i32) -> (i32, i32) {
    %c0_i32 = arith.constant 0 : i32
    %c0_i32_0 = arith.constant 0 : i32
    %c0_i32_1 = arith.constant 0 : i32
    return %c0_i32, %c0_i32_0 : i32, i32
  }
  func.func @transform_12(%arg0: i32, %arg1: i32) -> (i32, i32) {
    %c0_i32 = arith.constant 0 : i32
    %c0_i32_0 = arith.constant 0 : i32
    %c0_i32_1 = arith.constant 0 : i32
    return %c0_i32, %c0_i32_0 : i32, i32
  }
  func.func @transform_13(%arg0: i32, %arg1: i32) -> (i32, i32, i32) {
    %c0_i32 = arith.constant 0 : i32
    %c0_i32_0 = arith.constant 0 : i32
    return %arg0, %arg1, %c0_i32 : i32, i32, i32
  }
  func.func @transform_14(%arg0: i32, %arg1: i32) -> (i32, i32, i32, i32) {
    %c0_i32 = arith.constant 0 : i32
    %c0_i32_0 = arith.constant 0 : i32
    %c0_i32_1 = arith.constant 0 : i32
    return %arg0, %c0_i32, %arg1, %c0_i32_0 : i32, i32, i32, i32
  }
}

</mosaic_0001>

<llo_original>
// kernel: tpu_custom_call.1
$region0: #{tpu_custom_call.1}
  #allocation0 [shape = 'u32[]', space=smem, size = 0x4, offset = 0x4, fixed_abs, tag = 'smem constant byte address 0x4 - core index']
  #allocation1 [shape = 'u32[72,128]{1,0:T(1,128)}', space=vmem, size = 0x9000, scoped, tag = 'internal scratch']
  #allocation2 [shape = 'bf16[8,32]{1,0:T(8,128)(2,1)}', space=vmem, size = 0x800, scoped, tag = 'scratch operand']
  #allocation3 [shape = 'bf16[8,32]{1,0:T(8,128)(2,1)}', space=vmem, size = 0x800, scoped, tag = 'scratch operand']
  #allocation4 [shape = 'bf16[8,32]{1,0:T(8,128)(2,1)}', space=vmem, size = 0x800, scoped, tag = 'scratch operand']
  #allocation5 [shape = 'f32[8,32]{1,0:T(8,128)}', space=vmem, size = 0x1000, scoped, tag = 'scratch operand']
  %s0 = inlined_call_operand.vmem [shape: bf16[2,8,32], index: 0, kind: input, shape index: {}]
  %s1 = inlined_call_operand.vmem [shape: f32[1,32], index: 1, kind: input, shape index: {}]
  %s2 = inlined_call_operand.vmem [shape: f32[1,32], index: 2, kind: input, shape index: {}]
  %s3 = inlined_call_operand.vmem [shape: f32[1,32], index: 3, kind: input, shape index: {}]
  %s4 = inlined_call_operand.vmem [shape: f32[1,32], index: 4, kind: input, shape index: {}]
  %s5 = inlined_call_operand.vmem [shape: bf16[32,32], index: 5, kind: input, shape index: {}]
  %s6 = inlined_call_operand.vmem [shape: f32[1,32], index: 6, kind: input, shape index: {}]
  %s7 = inlined_call_operand.vmem [shape: bf16[32,64], index: 7, kind: input, shape index: {}]
  %s8 = inlined_call_operand.vmem [shape: f32[1,64], index: 8, kind: input, shape index: {}]
  %s9 = inlined_call_operand.vmem [shape: bf16[32,128], index: 9, kind: input, shape index: {}]
  %s10 = inlined_call_operand.vmem [shape: f32[1,128], index: 10, kind: input, shape index: {}]
  %s11 = inlined_call_operand.vmem [shape: bf16[128,32], index: 11, kind: input, shape index: {}]
  %s12 = inlined_call_operand.vmem [shape: f32[1,32], index: 12, kind: input, shape index: {}]
  %s13 = inlined_call_operand.hbm [shape: bf16[2,8,32], index: 13, kind: output, shape index: {0}]
  %s14 = inlined_call_operand.hbm [shape: bf16[2,4,8,8], index: 14, kind: output, shape index: {1}]
  %15 = xla_tuple %s13, %s14
  %s16 = sld [smem:[#allocation0]]
  $region97: #{tpu_custom_call.1} parent=0
    _
  %s18 = ssub.s32 1, %s16
  %s19 = scalar_select 0, %s18, %s16
  $region1: #{tpu_custom_call.1} parent=0
    #allocation6 [shape = 'u8[4096]{0}', space=vmem, size = 0x1000, scoped, tag = 'output window, operand 0']
    #allocation7 [shape = 's32[2]{0}', space=sflag, size = 0x8, scoped, tag = 'scoped memory for tpu_custom_call.1']
    #allocation8 [shape = 'u8[16384]{0}', space=vmem, size = 0x4000, scoped, tag = 'output window, operand 1']
    #allocation9 [shape = 's32[2]{0}', space=sflag, size = 0x8, scoped, tag = 'scoped memory for tpu_custom_call.1']
    %20 = vsyncpa [#allocation7], 0
    %s21 = scalar_lea.sflag [#allocation7], 1
    %22 = vsyncpa %s21, 0
    %23 = vsyncpa [#allocation9], 0
    %s24 = scalar_lea.sflag [#allocation9], 1
    %25 = vsyncpa %s24, 0
    loop: start=0, step=1, limit=4
    $region2: #{tpu_custom_call.1} parent=1 // loop_pre_header
      _
    $region3: #{tpu_custom_call.1} parent=1 // loop_header
      %s27 = sphi 0, %s31
      %p28 = scmp.ge.s32.totalorder %s27, 4
      %s34 = sphi 0, %s46
      %s35 = sphi 0, %s42
      %s36 = sphi 0, %s34
      %s37 = sphi 0, %s35
      %s38 = sphi 0, %s36
      %s39 = sphi 0, %s37
      %s49 = sphi 0, %s51
      %s52 = sphi 0, %s49
      %s53 = sphi 0, %s52
      %s69 = sphi 0, %s53
      %s73 = sphi 0, %s73
      %s75 = sphi 0, %s73
      %s76 = sphi 0, %s75
      %s90 = sphi 0, %s76
      %s94 = sphi 0, %s94
      %s96 = sphi 0, %s94
      %s97 = sphi 0, %s96
      %s111 = sphi 0, %s97
      %s115 = sphi 0, %s115
      %s117 = sphi 0, %s115
      %s118 = sphi 0, %s117
      %s132 = sphi 0, %s118
      %s136 = sphi 0, %s136
      %s138 = sphi 0, %s136
      %s139 = sphi 0, %s138
      %s153 = sphi 0, %s139
      %s157 = sphi 0, %s157
      %s159 = sphi 0, %s157
      %s160 = sphi 0, %s159
      %s174 = sphi 0, %s160
      %s178 = sphi 0, %s178
      %s180 = sphi 0, %s178
      %s181 = sphi 0, %s180
      %s195 = sphi 0, %s181
      %s199 = sphi 0, %s199
      %s201 = sphi 0, %s199
      %s202 = sphi 0, %s201
      %s216 = sphi 0, %s202
      %s220 = sphi 0, %s220
      %s222 = sphi 0, %s220
      %s223 = sphi 0, %s222
      %s237 = sphi 0, %s223
      %s241 = sphi 0, %s241
      %s243 = sphi 0, %s241
      %s244 = sphi 0, %s243
      %s258 = sphi 0, %s244
      %s262 = sphi 0, %s262
      %s264 = sphi 0, %s262
      %s265 = sphi 0, %s264
      %s279 = sphi 0, %s265
      %s283 = sphi 0, %s283
      %s285 = sphi 0, %s283
      %s286 = sphi 0, %s285
      %s300 = sphi 0, %s286
      %s304 = sphi 0, %s304
      %s306 = sphi 0, %s304
      %s307 = sphi 0, %s306
      %s321 = sphi 0, %s307
      %s329 = sphi 0, %s331
      %s332 = sphi 0, %s329
      %s333 = sphi 0, %s332
      %s349 = sphi 0, %s333
      %s357 = sphi 0, %s359
      %s360 = sphi 0, %s357
      %s361 = sphi 0, %s360
      %s377 = sphi 0, %s361
    $region4: #{tpu_custom_call.1} parent=1 // loop_header_branch
      %30 = sbr.rel (%p28) target = $region8
    $region5: #{tpu_custom_call.1} parent=1 // loop_body
      %s32 = ssub.s32 %s27, 1
      %s33 = ssub.s32 %s27, 2
      %s40 = sadd.s32 1, %s35
      %p41 = scmp.ge.s32.totalorder %s40, 1
      %s42 = scalar_select %p41, 0, %s40
      %s43 = sadd.s32 1, %s34
      %s44 = scalar_select %p41, %s43, %s34
      %p45 = scmp.ge.s32.totalorder %s44, 2
      %s46 = scalar_select %p45, 0, %s44
      %s47 = ssub.s32 %s34, %s46
      %p48 = scmp.eq.s32.totalorder %s47, 0
      %s50 = sadd.s32 %s49, 1
      %s51 = scalar_select %p48, %s49, %s50
      %p54 = pneg %p48
      %p55 = scmp.eq.s32.totalorder %s27, 1
      %p56 = por %p54, %p55
      %p57 = scmp.ne.s32.totalorder %s49, %s52
      %p58 = scmp.eq.s32.totalorder %s27, 0
      %p59 = por %p57, %p58
      %p60 = scmp.ne.s32.totalorder %s49, %s52
      %p61 = scmp.eq.s32.totalorder %s32, 1
      %p62 = por %p60, %p61
      %p63 = scmp.ne.s32.totalorder %s52, %s53
      %p64 = scmp.eq.s32.totalorder %s32, 0
      %p65 = por %p63, %p64
      %p66 = scmp.ne.s32.totalorder %s52, %s53
      %p67 = scmp.eq.s32.totalorder %s33, 1
      %p68 = por %p66, %p67
      %p70 = scmp.ne.s32.totalorder %s53, %s69
      %p71 = scmp.eq.s32.totalorder %s33, 0
      %p72 = por %p70, %p71
      %s74 = sadd.s32 %s73, 1
      %p77 = scmp.eq.s32.totalorder %s27, 1
      %p78 = scmp.ne.s32.totalorder %s73, %s75
      %p79 = scmp.eq.s32.totalorder %s27, 0
      %p80 = por %p78, %p79
      %p81 = scmp.ne.s32.totalorder %s73, %s75
      %p82 = scmp.eq.s32.totalorder %s32, 1
      %p83 = por %p81, %p82
      %p84 = scmp.ne.s32.totalorder %s75, %s76
      %p85 = scmp.eq.s32.totalorder %s32, 0
      %p86 = por %p84, %p85
      %p87 = scmp.ne.s32.totalorder %s75, %s76
      %p88 = scmp.eq.s32.totalorder %s33, 1
      %p89 = por %p87, %p88
      %p91 = scmp.ne.s32.totalorder %s76, %s90
      %p92 = scmp.eq.s32.totalorder %s33, 0
      %p93 = por %p91, %p92
      %s95 = sadd.s32 %s94, 1
      %p98 = scmp.eq.s32.totalorder %s27, 1
      %p99 = scmp.ne.s32.totalorder %s94, %s96
      %p100 = scmp.eq.s32.totalorder %s27, 0
      %p101 = por %p99, %p100
      %p102 = scmp.ne.s32.totalorder %s94, %s96
      %p103 = scmp.eq.s32.totalorder %s32, 1
      %p104 = por %p102, %p103
      %p105 = scmp.ne.s32.totalorder %s96, %s97
      %p106 = scmp.eq.s32.totalorder %s32, 0
      %p107 = por %p105, %p106
      %p108 = scmp.ne.s32.totalorder %s96, %s97
      %p109 = scmp.eq.s32.totalorder %s33, 1
      %p110 = por %p108, %p109
      %p112 = scmp.ne.s32.totalorder %s97, %s111
      %p113 = scmp.eq.s32.totalorder %s33, 0
      %p114 = por %p112, %p113
      %s116 = sadd.s32 %s115, 1
      %p119 = scmp.eq.s32.totalorder %s27, 1
      %p120 = scmp.ne.s32.totalorder %s115, %s117
      %p121 = scmp.eq.s32.totalorder %s27, 0
      %p122 = por %p120, %p121
      %p123 = scmp.ne.s32.totalorder %s115, %s117
      %p124 = scmp.eq.s32.totalorder %s32, 1
      %p125 = por %p123, %p124
      %p126 = scmp.ne.s32.totalorder %s117, %s118
      %p127 = scmp.eq.s32.totalorder %s32, 0
      %p128 = por %p126, %p127
      %p129 = scmp.ne.s32.totalorder %s117, %s118
      %p130 = scmp.eq.s32.totalorder %s33, 1
      %p131 = por %p129, %p130
      %p133 = scmp.ne.s32.totalorder %s118, %s132
      %p134 = scmp.eq.s32.totalorder %s33, 0
      %p135 = por %p133, %p134
      %s137 = sadd.s32 %s136, 1
      %p140 = scmp.eq.s32.totalorder %s27, 1
      %p141 = scmp.ne.s32.totalorder %s136, %s138
      %p142 = scmp.eq.s32.totalorder %s27, 0
      %p143 = por %p141, %p142
      %p144 = scmp.ne.s32.totalorder %s136, %s138
      %p145 = scmp.eq.s32.totalorder %s32, 1
      %p146 = por %p144, %p145
      %p147 = scmp.ne.s32.totalorder %s138, %s139
      %p148 = scmp.eq.s32.totalorder %s32, 0
      %p149 = por %p147, %p148
      %p150 = scmp.ne.s32.totalorder %s138, %s139
      %p151 = scmp.eq.s32.totalorder %s33, 1
      %p152 = por %p150, %p151
      %p154 = scmp.ne.s32.totalorder %s139, %s153
      %p155 = scmp.eq.s32.totalorder %s33, 0
      %p156 = por %p154, %p155
      %s158 = sadd.s32 %s157, 1
      %p161 = scmp.eq.s32.totalorder %s27, 1
      %p162 = scmp.ne.s32.totalorder %s157, %s159
      %p163 = scmp.eq.s32.totalorder %s27, 0
      %p164 = por %p162, %p163
      %p165 = scmp.ne.s32.totalorder %s157, %s159
      %p166 = scmp.eq.s32.totalorder %s32, 1
      %p167 = por %p165, %p166
      %p168 = scmp.ne.s32.totalorder %s159, %s160
      %p169 = scmp.eq.s32.totalorder %s32, 0
      %p170 = por %p168, %p169
      %p171 = scmp.ne.s32.totalorder %s159, %s160
      %p172 = scmp.eq.s32.totalorder %s33, 1
      %p173 = por %p171, %p172
      %p175 = scmp.ne.s32.totalorder %s160, %s174
      %p176 = scmp.eq.s32.totalorder %s33, 0
      %p177 = por %p175, %p176
      %s179 = sadd.s32 %s178, 1
      %p182 = scmp.eq.s32.totalorder %s27, 1
      %p183 = scmp.ne.s32.totalorder %s178, %s180
      %p184 = scmp.eq.s32.totalorder %s27, 0
      %p185 = por %p183, %p184
      %p186 = scmp.ne.s32.totalorder %s178, %s180
      %p187 = scmp.eq.s32.totalorder %s32, 1
      %p188 = por %p186, %p187
      %p189 = scmp.ne.s32.totalorder %s180, %s181
      %p190 = scmp.eq.s32.totalorder %s32, 0
      %p191 = por %p189, %p190
      %p192 = scmp.ne.s32.totalorder %s180, %s181
      %p193 = scmp.eq.s32.totalorder %s33, 1
      %p194 = por %p192, %p193
      %p196 = scmp.ne.s32.totalorder %s181, %s195
      %p197 = scmp.eq.s32.totalorder %s33, 0
      %p198 = por %p196, %p197
      %s200 = sadd.s32 %s199, 1
      %p203 = scmp.eq.s32.totalorder %s27, 1
      %p204 = scmp.ne.s32.totalorder %s199, %s201
      %p205 = scmp.eq.s32.totalorder %s27, 0
      %p206 = por %p204, %p205
      %p207 = scmp.ne.s32.totalorder %s199, %s201
      %p208 = scmp.eq.s32.totalorder %s32, 1
      %p209 = por %p207, %p208
      %p210 = scmp.ne.s32.totalorder %s201, %s202
      %p211 = scmp.eq.s32.totalorder %s32, 0
      %p212 = por %p210, %p211
      %p213 = scmp.ne.s32.totalorder %s201, %s202
      %p214 = scmp.eq.s32.totalorder %s33, 1
      %p215 = por %p213, %p214
      %p217 = scmp.ne.s32.totalorder %s202, %s216
      %p218 = scmp.eq.s32.totalorder %s33, 0
      %p219 = por %p217, %p218
      %s221 = sadd.s32 %s220, 1
      %p224 = scmp.eq.s32.totalorder %s27, 1
      %p225 = scmp.ne.s32.totalorder %s220, %s222
      %p226 = scmp.eq.s32.totalorder %s27, 0
      %p227 = por %p225, %p226
      %p228 = scmp.ne.s32.totalorder %s220, %s222
      %p229 = scmp.eq.s32.totalorder %s32, 1
      %p230 = por %p228, %p229
      %p231 = scmp.ne.s32.totalorder %s222, %s223
      %p232 = scmp.eq.s32.totalorder %s32, 0
      %p233 = por %p231, %p232
      %p234 = scmp.ne.s32.totalorder %s222, %s223
      %p235 = scmp.eq.s32.totalorder %s33, 1
      %p236 = por %p234, %p235
      %p238 = scmp.ne.s32.totalorder %s223, %s237
      %p239 = scmp.eq.s32.totalorder %s33, 0
      %p240 = por %p238, %p239
      %s242 = sadd.s32 %s241, 1
      %p245 = scmp.eq.s32.totalorder %s27, 1
      %p246 = scmp.ne.s32.totalorder %s241, %s243
      %p247 = scmp.eq.s32.totalorder %s27, 0
      %p248 = por %p246, %p247
      %p249 = scmp.ne.s32.totalorder %s241, %s243
      %p250 = scmp.eq.s32.totalorder %s32, 1
      %p251 = por %p249, %p250
      %p252 = scmp.ne.s32.totalorder %s243, %s244
      %p253 = scmp.eq.s32.totalorder %s32, 0
      %p254 = por %p252, %p253
      %p255 = scmp.ne.s32.totalorder %s243, %s244
      %p256 = scmp.eq.s32.totalorder %s33, 1
      %p257 = por %p255, %p256
      %p259 = scmp.ne.s32.totalorder %s244, %s258
      %p260 = scmp.eq.s32.totalorder %s33, 0
      %p261 = por %p259, %p260
      %s263 = sadd.s32 %s262, 1
      %p266 = scmp.eq.s32.totalorder %s27, 1
      %p267 = scmp.ne.s32.totalorder %s262, %s264
      %p268 = scmp.eq.s32.totalorder %s27, 0
      %p269 = por %p267, %p268
      %p270 = scmp.ne.s32.totalorder %s262, %s264
      %p271 = scmp.eq.s32.totalorder %s32, 1
      %p272 = por %p270, %p271
      %p273 = scmp.ne.s32.totalorder %s264, %s265
      %p274 = scmp.eq.s32.totalorder %s32, 0
      %p275 = por %p273, %p274
      %p276 = scmp.ne.s32.totalorder %s264, %s265
      %p277 = scmp.eq.s32.totalorder %s33, 1
      %p278 = por %p276, %p277
      %p280 = scmp.ne.s32.totalorder %s265, %s279
      %p281 = scmp.eq.s32.totalorder %s33, 0
      %p282 = por %p280, %p281
      %s284 = sadd.s32 %s283, 1
      %p287 = scmp.eq.s32.totalorder %s27, 1
      %p288 = scmp.ne.s32.totalorder %s283, %s285
      %p289 = scmp.eq.s32.totalorder %s27, 0
      %p290 = por %p288, %p289
      %p291 = scmp.ne.s32.totalorder %s283, %s285
      %p292 = scmp.eq.s32.totalorder %s32, 1
      %p293 = por %p291, %p292
      %p294 = scmp.ne.s32.totalorder %s285, %s286
      %p295 = scmp.eq.s32.totalorder %s32, 0
      %p296 = por %p294, %p295
      %p297 = scmp.ne.s32.totalorder %s285, %s286
      %p298 = scmp.eq.s32.totalorder %s33, 1
      %p299 = por %p297, %p298
      %p301 = scmp.ne.s32.totalorder %s286, %s300
      %p302 = scmp.eq.s32.totalorder %s33, 0
      %p303 = por %p301, %p302
      %s305 = sadd.s32 %s304, 1
      %p308 = scmp.eq.s32.totalorder %s27, 1
      %p309 = scmp.ne.s32.totalorder %s304, %s306
      %p310 = scmp.eq.s32.totalorder %s27, 0
      %p311 = por %p309, %p310
      %p312 = scmp.ne.s32.totalorder %s304, %s306
      %p313 = scmp.eq.s32.totalorder %s32, 1
      %p314 = por %p312, %p313
      %p315 = scmp.ne.s32.totalorder %s306, %s307
      %p316 = scmp.eq.s32.totalorder %s32, 0
      %p317 = por %p315, %p316
      %p318 = scmp.ne.s32.totalorder %s306, %s307
      %p319 = scmp.eq.s32.totalorder %s33, 1
      %p320 = por %p318, %p319
      %p322 = scmp.ne.s32.totalorder %s307, %s321
      %p323 = scmp.eq.s32.totalorder %s33, 0
      %p324 = por %p322, %p323
      %s325 = ssub.s32 %s34, %s46
      %s326 = ssub.s32 %s35, %s42
      %s327 = sor.u32 %s325, %s326
      %p328 = scmp.eq.s32.totalorder %s327, 0
      %s330 = sadd.s32 %s329, 1
      %s331 = scalar_select %p328, %s329, %s330
      %p334 = pneg %p328
      %p335 = scmp.eq.s32.totalorder %s27, 1
      %p336 = por %p334, %p335
      %p337 = scmp.ne.s32.totalorder %s329, %s332
      %p338 = scmp.eq.s32.totalorder %s27, 0
      %p339 = por %p337, %p338
      %p340 = scmp.ne.s32.totalorder %s329, %s332
      %p341 = scmp.eq.s32.totalorder %s32, 1
      %p342 = por %p340, %p341
      %p343 = scmp.ne.s32.totalorder %s332, %s333
      %p344 = scmp.eq.s32.totalorder %s32, 0
      %p345 = por %p343, %p344
      %p346 = scmp.ne.s32.totalorder %s332, %s333
      %p347 = scmp.eq.s32.totalorder %s33, 1
      %p348 = por %p346, %p347
      %p350 = scmp.ne.s32.totalorder %s333, %s349
      %p351 = scmp.eq.s32.totalorder %s33, 0
      %p352 = por %p350, %p351
      %s353 = ssub.s32 %s34, %s46
      %s354 = ssub.s32 %s35, %s42
      %s355 = sor.u32 %s353, %s354
      %p356 = scmp.eq.s32.totalorder %s355, 0
      %s358 = sadd.s32 %s357, 1
      %s359 = scalar_select %p356, %s357, %s358
      %p362 = pneg %p356
      %p363 = scmp.eq.s32.totalorder %s27, 1
      %p364 = por %p362, %p363
      %p365 = scmp.ne.s32.totalorder %s357, %s360
      %p366 = scmp.eq.s32.totalorder %s27, 0
      %p367 = por %p365, %p366
      %p368 = scmp.ne.s32.totalorder %s357, %s360
      %p369 = scmp.eq.s32.totalorder %s32, 1
      %p370 = por %p368, %p369
      %p371 = scmp.ne.s32.totalorder %s360, %s361
      %p372 = scmp.eq.s32.totalorder %s32, 0
      %p373 = por %p371, %p372
      %p374 = scmp.ne.s32.totalorder %s360, %s361
      %p375 = scmp.eq.s32.totalorder %s33, 1
      %p376 = por %p374, %p375
      %p378 = scmp.ne.s32.totalorder %s361, %s377
      %p379 = scmp.eq.s32.totalorder %s33, 0
      %p380 = por %p378, %p379
      %p381 = scmp.le.s32.totalorder 1, %s27
      %p382 = scmp.lt.s32.totalorder %s27, 3
      %p383 = pnand %p381, %p382
      %p384 = pneg %p383
      // Predicated region
      $region9: #{tpu_custom_call.1} parent=5 // pred_check
        _
      $region10: #{tpu_custom_call.1} parent=5 // pred_check_branch
        %386 = sbr.rel (%p383) target = $region12
      $region11: #{tpu_custom_call.1} parent=5 // pred_region
        %s387 = ssub.s32 %s27, 1
        // Predicated region
        $region13: #{tpu_custom_call.1} parent=11 // pred_check
          %p388 = pneg %p86
        $region14: #{tpu_custom_call.1} parent=11 // pred_check_branch
          %390 = sbr.rel (%p388) target = $region16
        $region15: #{tpu_custom_call.1} parent=11 // pred_region
          _
        $region16: #{tpu_custom_call.1} parent=11 // pred_fallthru
          _
        // Predicated region
        $region17: #{tpu_custom_call.1} parent=11 // pred_check
          %p391 = pneg %p107
        $region18: #{tpu_custom_call.1} parent=11 // pred_check_branch
          %393 = sbr.rel (%p391) target = $region20
        $region19: #{tpu_custom_call.1} parent=11 // pred_region
          _
        $region20: #{tpu_custom_call.1} parent=11 // pred_fallthru
          _
        // Predicated region
        $region21: #{tpu_custom_call.1} parent=11 // pred_check
          %p394 = pneg %p128
        $region22: #{tpu_custom_call.1} parent=11 // pred_check_branch
          %396 = sbr.rel (%p394) target = $region24
        $region23: #{tpu_custom_call.1} parent=11 // pred_region
          _
        $region24: #{tpu_custom_call.1} parent=11 // pred_fallthru
          _
        // Predicated region
        $region25: #{tpu_custom_call.1} parent=11 // pred_check
          %p397 = pneg %p149
        $region26: #{tpu_custom_call.1} parent=11 // pred_check_branch
          %399 = sbr.rel (%p397) target = $region28
        $region27: #{tpu_custom_call.1} parent=11 // pred_region
          _
        $region28: #{tpu_custom_call.1} parent=11 // pred_fallthru
          _
        // Predicated region
        $region29: #{tpu_custom_call.1} parent=11 // pred_check
          %p400 = pneg %p170
        $region30: #{tpu_custom_call.1} parent=11 // pred_check_branch
          %402 = sbr.rel (%p400) target = $region32
        $region31: #{tpu_custom_call.1} parent=11 // pred_region
          _
        $region32: #{tpu_custom_call.1} parent=11 // pred_fallthru
          _
        // Predicated region
        $region33: #{tpu_custom_call.1} parent=11 // pred_check
          %p403 = pneg %p191
        $region34: #{tpu_custom_call.1} parent=11 // pred_check_branch
          %405 = sbr.rel (%p403) target = $region36
        $region35: #{tpu_custom_call.1} parent=11 // pred_region
          _
        $region36: #{tpu_custom_call.1} parent=11 // pred_fallthru
          _
        // Predicated region
        $region37: #{tpu_custom_call.1} parent=11 // pred_check
          %p406 = pneg %p212
        $region38: #{tpu_custom_call.1} parent=11 // pred_check_branch
          %408 = sbr.rel (%p406) target = $region40
        $region39: #{tpu_custom_call.1} parent=11 // pred_region
          _
        $region40: #{tpu_custom_call.1} parent=11 // pred_fallthru
          _
        // Predicated region
        $region41: #{tpu_custom_call.1} parent=11 // pred_check
          %p409 = pneg %p233
        $region42: #{tpu_custom_call.1} parent=11 // pred_check_branch
          %411 = sbr.rel (%p409) target = $region44
        $region43: #{tpu_custom_call.1} parent=11 // pred_region
          _
        $region44: #{tpu_custom_call.1} parent=11 // pred_fallthru
          _
        // Predicated region
        $region45: #{tpu_custom_call.1} parent=11 // pred_check
          %p412 = pneg %p254
        $region46: #{tpu_custom_call.1} parent=11 // pred_check_branch
          %414 = sbr.rel (%p412) target = $region48
        $region47: #{tpu_custom_call.1} parent=11 // pred_region
          _
        $region48: #{tpu_custom_call.1} parent=11 // pred_fallthru
          _
        // Predicated region
        $region49: #{tpu_custom_call.1} parent=11 // pred_check
          %p415 = pneg %p275
        $region50: #{tpu_custom_call.1} parent=11 // pred_check_branch
          %417 = sbr.rel (%p415) target = $region52
        $region51: #{tpu_custom_call.1} parent=11 // pred_region
          _
        $region52: #{tpu_custom_call.1} parent=11 // pred_fallthru
          _
        // Predicated region
        $region53: #{tpu_custom_call.1} parent=11 // pred_check
          %p418 = pneg %p296
        $region54: #{tpu_custom_call.1} parent=11 // pred_check_branch
          %420 = sbr.rel (%p418) target = $region56
        $region55: #{tpu_custom_call.1} parent=11 // pred_region
          _
        $region56: #{tpu_custom_call.1} parent=11 // pred_fallthru
          _
        // Predicated region
        $region57: #{tpu_custom_call.1} parent=11 // pred_check
          %p421 = pneg %p317
        $region58: #{tpu_custom_call.1} parent=11 // pred_check_branch
          %423 = sbr.rel (%p421) target = $region60
        $region59: #{tpu_custom_call.1} parent=11 // pred_region
          _
        $region60: #{tpu_custom_call.1} parent=11 // pred_fallthru
          _
      $region12: #{tpu_custom_call.1} parent=5 // pred_fallthru
        _
      %p424 = scmp.lt.s32.totalorder %s27, 2
      // Predicated region
      $region61: #{tpu_custom_call.1} parent=5 // pred_check
        %p425 = pneg %p424
      $region62: #{tpu_custom_call.1} parent=5 // pred_check_branch
        %427 = sbr.rel (%p425) target = $region64
      $region63: #{tpu_custom_call.1} parent=5 // pred_region
        // Predicated region
        $region65: #{tpu_custom_call.1} parent=63 // pred_check
          %p428 = pneg %p59
        $region66: #{tpu_custom_call.1} parent=63 // pred_check_branch
          %430 = sbr.rel (%p428) target = $region68
        $region67: #{tpu_custom_call.1} parent=63 // pred_region
          %p431 = scmp.lt.s32.totalorder %s34, 1
          %s432 = scalar_select %p431, %s34, 1
          %s433 = smul.addr %s432, 4
          %s434 = scalar_lea.vmem %s0, %s433
        $region68: #{tpu_custom_call.1} parent=63 // pred_fallthru
          _
      $region64: #{tpu_custom_call.1} parent=5 // pred_fallthru
        _
      %p435 = scmp.le.s32.totalorder 1, %s27
      %p436 = scmp.lt.s32.totalorder %s27, 3
      %p437 = pnand %p435, %p436
      %p438 = pneg %p437
      // Predicated region
      $region69: #{tpu_custom_call.1} parent=5 // pred_check
        _
      $region70: #{tpu_custom_call.1} parent=5 // pred_check_branch
        %440 = sbr.rel (%p437) target = $region72
      $region71: #{tpu_custom_call.1} parent=5 // pred_region
        %s441 = ssub.s32 %s27, 1
        %p442 = scmp.lt.s32.totalorder %s36, 1
        %s443 = scalar_select %p442, %s36, 1
        %s444 = smul.addr %s443, 4
        %s445 = scalar_lea.vmem %s0, %s444
        %p446 = pneg %p65
        %p447 = pneg %p62
        %p448 = pneg %p86
        %p449 = pneg %p83
        %p450 = pneg %p107
        %p451 = pneg %p104
        %p452 = pneg %p128
        %p453 = pneg %p125
        %p454 = pneg %p149
        %p455 = pneg %p146
        %p456 = pneg %p170
        %p457 = pneg %p167
        %p458 = pneg %p191
        %p459 = pneg %p188
        %p460 = pneg %p212
        %p461 = pneg %p209
        %p462 = pneg %p233
        %p463 = pneg %p230
        %p464 = pneg %p254
        %p465 = pneg %p251
        %p466 = pneg %p275
        %p467 = pneg %p272
        %p468 = pneg %p296
        %p469 = pneg %p293
        %p470 = pneg %p317
        %p471 = pneg %p314
        %p472 = pneg %p345
        %p473 = pneg %p342
        %s474 = sand.u32 %s332, 1
        %s475 = scalar_lea.sflag [#allocation7], %s474
        %s476 = sand.u32 %s332, 1
        %s477 = smul.addr %s476, 4
        %s478 = scalar_lea.vmem [#allocation6], %s477
        %p479 = pneg %p373
        %p480 = pneg %p370
        %s481 = sand.u32 %s360, 1
        %s482 = scalar_lea.sflag [#allocation9], %s481
        %s483 = sand.u32 %s360, 1
        %s484 = smul.addr %s483, 16
        %s485 = scalar_lea.vmem [#allocation8], %s484
        %p486 = scmp.lt.s32.totalorder %s36, 1
        %s487 = scalar_select %p486, %s36, 1
        %s488 = smul.addr %s487, 4
        %s489 = scalar_lea.vmem %s0, %s488
        %v491 = vld [vmem:[%s1] sm:$0x1]
        %v492 = vld [vmem:[%s2] sm:$0x1]
        %p493 = scmp.eq.s32.totalorder %s37, 0
        // Predicated region
        $region73: #{tpu_custom_call.1} parent=71 // pred_check
          %p494 = pneg %p493
        $region74: #{tpu_custom_call.1} parent=71 // pred_check_branch
          %496 = sbr.rel (%p494) target = $region76
        $region75: #{tpu_custom_call.1} parent=71 // pred_region
          %v497 = vld [vmem:[%s489] sm:$0xf]
          %v498 = vunpack.c.l.bf16 %v497
          %vm499 = vcmask 261120
          %v500 = vsel %vm499, %v498, 0.0
          %501 = vadd.xlane.f32.xlu0 %v500
          %v502 = vpop.xlane.xlu0 %501
          %v503 = vrcp.pop 32.0
          %v504 = vmul.f32 32.0, %v503
          %v505 = vsub.f32 1.0, %v504
          %v506 = vmul.f32 %v503, %v505
          %v507 = vadd.f32 %v503, %v506
          %vm508 = vweird.f32 %v503
          %v509 = vsel %vm508, %v503, %v507
          %v510 = vmul.f32 %v502, %v509
          %v511 = vsub.f32 %v498, %v510
          %v512 = vmul.f32 %v511, %v511
          %v513 = vsel %vm499, %v512, 0.0
          %514 = vadd.xlane.f32.xlu0 %v513
          %v515 = vpop.xlane.xlu0 %514
          %v516 = vmul.f32 %v515, %v509
          %v517 = vadd.f32 %v516, 1e-05
          %v518 = vrsqrt.pop %v517
          %v519 = vmul.f32 %v518, %v517
          %v520 = vmul.f32 %v519, %v518
          %v521 = vmul.f32 0.5, %v520
          %v522 = vsub.f32 1.5, %v521
          %v523 = vmul.f32 %v518, %v522
          %vm524 = vweird.f32 %v517
          %vm525 = vweird.f32 %v518
          %vm526 = vmor %vm524, %vm525
          %v527 = vsel %vm526, %v518, %v523
          %v528 = vmul.f32 %v511, %v527
          %v530 = vperm.slane %v491, 0
          %v532 = vmul.f32 %v528, %v530
          %v534 = vperm.slane %v492, 0
          %v536 = vadd.f32 %v532, %v534
          %v537 = vpack.c.bf16 %v536, %v536
          %vm538 = vcmask 257024
          %539 = vst.msk [vmem:[#allocation2] sm:$0xf] %vm538, %v537
          %v540 = vld [vmem:[%s7] sm:$0xf]
          %v541 = vld [vmem:[%s7 + $0x4] sm:$0xf]
          %v542 = vld [vmem:[%s7 + $0x8] sm:$0xf]
          %v543 = vld [vmem:[%s7 + $0xc] sm:$0xf]
          %v544 = vld [vmem:[%s8] sm:$0x1]
          %v546 = vperm.slane %v544, 0
          %v552 = vunpack.c.l.b16 %v540
          %v553 = vunpack.c.l.b16 %v541
          %v554 = vunpack.c.l.b16 %v542
          %v555 = vunpack.c.l.b16 %v543
          %v556 = vpack.c.b16 %v553, %v552
          %v557 = vpack.c.b16 %v555, %v554
          %v561 = vsel %vm499, %v537, 0
          %563 = vmatpush.bf16.msra.mxu0 0
          %564 = vmatpush.bf16.msra.mxu0 0
          %565 = vmatpush.bf16.msra.mxu0 0
          %566 = vmatpush.bf16.msra.mxu0 0
          %567 = vmatpush.bf16.msra.mxu0 0
          %568 = vmatpush.bf16.msra.mxu0 0
          %569 = vmatpush.bf16.msra.mxu0 %v557
          %570 = vmatpush.bf16.msra.mxu0 %v556
          %571 = vmatmul.bf16.gmra.mxu0 %v561
          %v572 = vpop.f32.mrf.mxu0
          %v573 = vadd.f32 %v546, %v572
          %v574 = vpop.f32.mrf.mxu0
          %575 = vdwg.mxu0
          %v576 = vpack.c.bf16 %v573, %v573
          %577 = vst.msk [vmem:[#allocation3] sm:$0xf] %vm538, %v576
          %579 = vrot.lane.b32.xlu0 %v576, 96
          %v580 = vpop.permute.xlu0 %579
          %582 = vst.msk [vmem:[#allocation4] sm:$0xf] %vm538, %v580
        $region76: #{tpu_custom_call.1} parent=71 // pred_fallthru
          _
        %s583 = smul.u32 %s37, 8
        %s584 = sshra.s32 %s583, 3
        %s585 = sand.u32 %s583, 7
        %s586 = smul.addr %s584, 4
        %s587 = scalar_lea.vmem [#allocation2], %s586
        %v588 = vld [vmem:[%s587] sm:$0xf]
        %v589 = vld [vmem:[%s5] sm:$0xf]
        %v590 = vld [vmem:[%s5 + $0x4] sm:$0xf]
        %v591 = vld [vmem:[%s5 + $0x8] sm:$0xf]
        %v592 = vld [vmem:[%s5 + $0xc] sm:$0xf]
        %v593 = vld [vmem:[%s6] sm:$0x1]
        %v595 = vperm.slane %v593, 0
        %v601 = vunpack.c.l.b16 %v589
        %v602 = vunpack.c.l.b16 %v590
        %v603 = vunpack.c.l.b16 %v591
        %v604 = vunpack.c.l.b16 %v592
        %v605 = vpack.c.b16 %v602, %v601
        %v606 = vpack.c.b16 %v604, %v603
        %vm609 = vcmask 261120
        %v611 = vsel %vm609, %v588, 0
        %613 = vmatpush.bf16.msra.mxu0 0
        %614 = vmatpush.bf16.msra.mxu0 0
        %615 = vmatpush.bf16.msra.mxu0 0
        %616 = vmatpush.bf16.msra.mxu0 0
        %617 = vmatpush.bf16.msra.mxu0 0
        %618 = vmatpush.bf16.msra.mxu0 0
        %619 = vmatpush.bf16.msra.mxu0 %v606
        %620 = vmatpush.bf16.msra.mxu0 %v605
        %621 = vmatmul.bf16.gmra.mxu0 %v611
        %v622 = vpop.f32.mrf.mxu0
        %v623 = vadd.f32 %v595, %v622
        %v624 = vpop.f32.mrf.mxu0
        %625 = vdwg.mxu0
        %v626 = vpack.c.bf16 %v623, %v623
        %v627 = vld [vmem:[#allocation3] sm:$0xf]
        %v628 = vld [vmem:[#allocation4] sm:$0xf]
        %vm629 = vcmask 64512
        %v631 = vsel %vm629, %v626, 0
        %v634 = vsel %vm629, %v627, 0
        %636 = vmatpush.bf16.xpose.msra.mxu0 0
        %637 = vmatpush.bf16.xpose.msra.mxu0 0
        %638 = vmatpush.bf16.xpose.msra.mxu0 0
        %639 = vmatpush.bf16.xpose.msra.mxu0 0
        %640 = vmatpush.bf16.xpose.msra.mxu0 0
        %641 = vmatpush.bf16.xpose.msra.mxu0 0
        %642 = vmatpush.bf16.xpose.msra.mxu0 0
        %643 = vmatpush.bf16.xpose.msra.mxu0 %v634
        %644 = vmatmul.bf16.gmra.mxu0 %v631
        %v645 = vpop.f32.mrf.mxu0
        %v646 = vadd.f32 0.0, %v645
        %v647 = vpop.f32.mrf.mxu0
        %648 = vdwg.mxu0
        %v649 = vsel %vm629, %v646, -inf
        %650 = vmax.xlane.f32.xlu0 %v649
        %v651 = vpop.xlane.xlu0 %650
        %v652 = vsub.f32 %v646, %v651
        %v653 = vmul.f32 %v652, 1.442695
        %v654 = vpow.pop %v653
        %v655 = vsel %vm629, %v654, 0.0
        %656 = vadd.xlane.f32.xlu0 %v655
        %v657 = vpop.xlane.xlu0 %656
        %v658 = vrcp.pop %v657
        %v659 = vmul.f32 %v654, %v658
        %v660 = vpack.c.bf16 %v659, %v659
        %vm661 = vcmask 60416
        %662 = vst.msk [vmem:[%s485] sm:$0xf] %vm661, %v660
        %v664 = vsel %vm629, %v660, 0
        %vm666 = vcmask 1043456
        %v668 = vsel %vm666, %v628, 0
        %670 = vmatpush.bf16.msra.mxu0 0
        %671 = vmatpush.bf16.msra.mxu0 0
        %672 = vmatpush.bf16.msra.mxu0 0
        %673 = vmatpush.bf16.msra.mxu0 0
        %674 = vmatpush.bf16.msra.mxu0 0
        %675 = vmatpush.bf16.msra.mxu0 0
        %676 = vmatpush.bf16.msra.mxu0 0
        %677 = vmatpush.bf16.msra.mxu0 %v668
        %678 = vmatmul.bf16.gmra.mxu0 %v664
        %v679 = vpop.f32.mrf.mxu0
        %v680 = vadd.f32 0.0, %v679
        %v681 = vpop.f32.mrf.mxu0
        %682 = vdwg.mxu0
        %683 = vst.msk [vmem:[#allocation5] sm:$0xff] %vm629, %v680
        %v684 = vld [vmem:[#allocation3] sm:$0xf]
        %v685 = vld [vmem:[#allocation4] sm:$0xf]
        %v687 = vunpack.c.l.b16 %v626
        %v688 = vpack.c.b16 %v687, %v687
        %689 = vrot.lane.b32.xlu0 %v688, 120
        %v690 = vpop.permute.xlu0 %689
        %v692 = vunpack.c.l.b16 %v684
        %v693 = vpack.c.b16 %v692, %v692
        %694 = vrot.lane.b32.xlu0 %v693, 120
        %v695 = vpop.permute.xlu0 %694
        %v697 = vsel %vm629, %v690, 0
        %v700 = vsel %vm629, %v695, 0
        %702 = vmatpush.bf16.xpose.msra.mxu0 0
        %703 = vmatpush.bf16.xpose.msra.mxu0 0
        %704 = vmatpush.bf16.xpose.msra.mxu0 0
        %705 = vmatpush.bf16.xpose.msra.mxu0 0
        %706 = vmatpush.bf16.xpose.msra.mxu0 0
        %707 = vmatpush.bf16.xpose.msra.mxu0 0
        %708 = vmatpush.bf16.xpose.msra.mxu0 0
        %709 = vmatpush.bf16.xpose.msra.mxu0 %v700
        %710 = vmatmul.bf16.gmra.mxu0 %v697
        %v711 = vpop.f32.mrf.mxu0
        %v712 = vadd.f32 0.0, %v711
        %v713 = vpop.f32.mrf.mxu0
        %714 = vdwg.mxu0
        %v715 = vsel %vm629, %v712, -inf
        %716 = vmax.xlane.f32.xlu0 %v715
        %v717 = vpop.xlane.xlu0 %716
        %v718 = vsub.f32 %v712, %v717
        %v719 = vmul.f32 %v718, 1.442695
        %v720 = vpow.pop %v719
        %v721 = vsel %vm629, %v720, 0.0
        %722 = vadd.xlane.f32.xlu0 %v721
        %v723 = vpop.xlane.xlu0 %722
        %v724 = vrcp.pop %v723
        %v725 = vmul.f32 %v720, %v724
        %v726 = vpack.c.bf16 %v725, %v725
        %s727 = scalar_lea.vmem %s485, 4 [#allocation8]
        %728 = vst.msk [vmem:[%s727] sm:$0xf] %vm661, %v726
        %v730 = vunpack.c.l.b16 %v685
        %v731 = vpack.c.b16 %v730, %v730
        %732 = vrot.lane.b32.xlu0 %v731, 120
        %v733 = vpop.permute.xlu0 %732
        %v735 = vsel %vm629, %v726, 0
        %v738 = vsel %vm666, %v733, 0
        %740 = vmatpush.bf16.msra.mxu0 0
        %741 = vmatpush.bf16.msra.mxu0 0
        %742 = vmatpush.bf16.msra.mxu0 0
        %743 = vmatpush.bf16.msra.mxu0 0
        %744 = vmatpush.bf16.msra.mxu0 0
        %745 = vmatpush.bf16.msra.mxu0 0
        %746 = vmatpush.bf16.msra.mxu0 0
        %747 = vmatpush.bf16.msra.mxu0 %v738
        %748 = vmatmul.bf16.gmra.mxu0 %v735
        %v749 = vpop.f32.mrf.mxu0
        %v750 = vadd.f32 0.0, %v749
        %v751 = vpop.f32.mrf.mxu0
        %752 = vdwg.mxu0
        %754 = vrot.lane.b32.xlu0 %v750, 8
        %v755 = vpop.permute.xlu0 %754
        %vm757 = vcmask 130112
        %758 = vst.msk [vmem:[#allocation5] sm:$0xff] %vm757, %v755
        %v759 = vld [vmem:[#allocation3] sm:$0xf]
        %v760 = vld [vmem:[#allocation4] sm:$0xf]
        %761 = vrot.lane.b32.xlu0 %v688, 112
        %v762 = vpop.permute.xlu0 %761
        %v764 = vunpack.c.l.b16 %v759
        %v765 = vpack.c.b16 %v764, %v764
        %766 = vrot.lane.b32.xlu0 %v765, 112
        %v767 = vpop.permute.xlu0 %766
        %v769 = vsel %vm629, %v762, 0
        %v772 = vsel %vm629, %v767, 0
        %774 = vmatpush.bf16.xpose.msra.mxu0 0
        %775 = vmatpush.bf16.xpose.msra.mxu0 0
        %776 = vmatpush.bf16.xpose.msra.mxu0 0
        %777 = vmatpush.bf16.xpose.msra.mxu0 0
        %778 = vmatpush.bf16.xpose.msra.mxu0 0
        %779 = vmatpush.bf16.xpose.msra.mxu0 0
        %780 = vmatpush.bf16.xpose.msra.mxu0 0
        %781 = vmatpush.bf16.xpose.msra.mxu0 %v772
        %782 = vmatmul.bf16.gmra.mxu0 %v769
        %v783 = vpop.f32.mrf.mxu0
        %v784 = vadd.f32 0.0, %v783
        %v785 = vpop.f32.mrf.mxu0
        %786 = vdwg.mxu0
        %v787 = vsel %vm629, %v784, -inf
        %788 = vmax.xlane.f32.xlu0 %v787
        %v789 = vpop.xlane.xlu0 %788
        %v790 = vsub.f32 %v784, %v789
        %v791 = vmul.f32 %v790, 1.442695
        %v792 = vpow.pop %v791
        %v793 = vsel %vm629, %v792, 0.0
        %794 = vadd.xlane.f32.xlu0 %v793
        %v795 = vpop.xlane.xlu0 %794
        %v796 = vrcp.pop %v795
        %v797 = vmul.f32 %v792, %v796
        %v798 = vpack.c.bf16 %v797, %v797
        %s799 = scalar_lea.vmem %s485, 8 [#allocation8]
        %800 = vst.msk [vmem:[%s799] sm:$0xf] %vm661, %v798
        %v802 = vunpack.c.l.b16 %v760
        %v803 = vpack.c.b16 %v802, %v802
        %804 = vrot.lane.b32.xlu0 %v803, 112
        %v805 = vpop.permute.xlu0 %804
        %v807 = vsel %vm629, %v798, 0
        %v810 = vsel %vm666, %v805, 0
        %812 = vmatpush.bf16.msra.mxu0 0
        %813 = vmatpush.bf16.msra.mxu0 0
        %814 = vmatpush.bf16.msra.mxu0 0
        %815 = vmatpush.bf16.msra.mxu0 0
        %816 = vmatpush.bf16.msra.mxu0 0
        %817 = vmatpush.bf16.msra.mxu0 0
        %818 = vmatpush.bf16.msra.mxu0 0
        %819 = vmatpush.bf16.msra.mxu0 %v810
        %820 = vmatmul.bf16.gmra.mxu0 %v807
        %v821 = vpop.f32.mrf.mxu0
        %v822 = vadd.f32 0.0, %v821
        %v823 = vpop.f32.mrf.mxu0
        %824 = vdwg.mxu0
        %826 = vrot.lane.b32.xlu0 %v822, 16
        %v827 = vpop.permute.xlu0 %826
        %vm829 = vcmask 195712
        %830 = vst.msk [vmem:[#allocation5] sm:$0xff] %vm829, %v827
        %v831 = vld [vmem:[#allocation3] sm:$0xf]
        %v832 = vld [vmem:[#allocation4] sm:$0xf]
        %833 = vrot.lane.b32.xlu0 %v688, 104
        %v834 = vpop.permute.xlu0 %833
        %v836 = vunpack.c.l.b16 %v831
        %v837 = vpack.c.b16 %v836, %v836
        %838 = vrot.lane.b32.xlu0 %v837, 104
        %v839 = vpop.permute.xlu0 %838
        %v841 = vsel %vm629, %v834, 0
        %v844 = vsel %vm629, %v839, 0
        %846 = vmatpush.bf16.xpose.msra.mxu0 0
        %847 = vmatpush.bf16.xpose.msra.mxu0 0
        %848 = vmatpush.bf16.xpose.msra.mxu0 0
        %849 = vmatpush.bf16.xpose.msra.mxu0 0
        %850 = vmatpush.bf16.xpose.msra.mxu0 0
        %851 = vmatpush.bf16.xpose.msra.mxu0 0
        %852 = vmatpush.bf16.xpose.msra.mxu0 0
        %853 = vmatpush.bf16.xpose.msra.mxu0 %v844
        %854 = vmatmul.bf16.gmra.mxu0 %v841
        %v855 = vpop.f32.mrf.mxu0
        %v856 = vadd.f32 0.0, %v855
        %v857 = vpop.f32.mrf.mxu0
        %858 = vdwg.mxu0
        %v859 = vsel %vm629, %v856, -inf
        %860 = vmax.xlane.f32.xlu0 %v859
        %v861 = vpop.xlane.xlu0 %860
        %v862 = vsub.f32 %v856, %v861
        %v863 = vmul.f32 %v862, 1.442695
        %v864 = vpow.pop %v863
        %v865 = vsel %vm629, %v864, 0.0
        %866 = vadd.xlane.f32.xlu0 %v865
        %v867 = vpop.xlane.xlu0 %866
        %v868 = vrcp.pop %v867
        %v869 = vmul.f32 %v864, %v868
        %v870 = vpack.c.bf16 %v869, %v869
        %s871 = scalar_lea.vmem %s485, 12 [#allocation8]
        %872 = vst.msk [vmem:[%s871] sm:$0xf] %vm661, %v870
        %v874 = vunpack.c.l.b16 %v832
        %v875 = vpack.c.b16 %v874, %v874
        %876 = vrot.lane.b32.xlu0 %v875, 104
        %v877 = vpop.permute.xlu0 %876
        %v879 = vsel %vm629, %v870, 0
        %v882 = vsel %vm666, %v877, 0
        %884 = vmatpush.bf16.msra.mxu0 0
        %885 = vmatpush.bf16.msra.mxu0 0
        %886 = vmatpush.bf16.msra.mxu0 0
        %887 = vmatpush.bf16.msra.mxu0 0
        %888 = vmatpush.bf16.msra.mxu0 0
        %889 = vmatpush.bf16.msra.mxu0 0
        %890 = vmatpush.bf16.msra.mxu0 0
        %891 = vmatpush.bf16.msra.mxu0 %v882
        %892 = vmatmul.bf16.gmra.mxu0 %v879
        %v893 = vpop.f32.mrf.mxu0
        %v894 = vadd.f32 0.0, %v893
        %v895 = vpop.f32.mrf.mxu0
        %896 = vdwg.mxu0
        %898 = vrot.lane.b32.xlu0 %v894, 24
        %v899 = vpop.permute.xlu0 %898
        %vm901 = vcmask 261312
        %902 = vst.msk [vmem:[#allocation5] sm:$0xff] %vm901, %v899
        %v903 = vld [vmem:[#allocation5] sm:$0xff]
        %v904 = vunpack.c.l.bf16 %v588
        %v905 = vadd.f32 %v904, %v903
        %v906 = vld [vmem:[%s3] sm:$0x1]
        %v907 = vld [vmem:[%s4] sm:$0x1]
        %v908 = vsel %vm609, %v905, 0.0
        %909 = vadd.xlane.f32.xlu0 %v908
        %v910 = vpop.xlane.xlu0 %909
        %v911 = vrcp.pop 32.0
        %v912 = vmul.f32 32.0, %v911
        %v913 = vsub.f32 1.0, %v912
        %v914 = vmul.f32 %v911, %v913
        %v915 = vadd.f32 %v911, %v914
        %vm916 = vweird.f32 %v911
        %v917 = vsel %vm916, %v911, %v915
        %v918 = vmul.f32 %v910, %v917
        %v919 = vsub.f32 %v905, %v918
        %v920 = vmul.f32 %v919, %v919
        %v921 = vsel %vm609, %v920, 0.0
        %922 = vadd.xlane.f32.xlu0 %v921
        %v923 = vpop.xlane.xlu0 %922
        %v924 = vmul.f32 %v923, %v917
        %v925 = vadd.f32 %v924, 1e-05
        %v926 = vrsqrt.pop %v925
        %v927 = vmul.f32 %v926, %v925
        %v928 = vmul.f32 %v927, %v926
        %v929 = vmul.f32 0.5, %v928
        %v930 = vsub.f32 1.5, %v929
        %v931 = vmul.f32 %v926, %v930
        %vm932 = vweird.f32 %v925
        %vm933 = vweird.f32 %v926
        %vm934 = vmor %vm932, %vm933
        %v935 = vsel %vm934, %v926, %v931
        %v936 = vmul.f32 %v919, %v935
        %v938 = vperm.slane %v906, 0
        %v940 = vmul.f32 %v936, %v938
        %v942 = vperm.slane %v907, 0
        %v944 = vadd.f32 %v940, %v942
        %v945 = vpack.c.bf16 %v944, %v944
        %v946 = vld [vmem:[%s9] sm:$0xf]
        %v947 = vld [vmem:[%s9 + $0x4] sm:$0xf]
        %v948 = vld [vmem:[%s9 + $0x8] sm:$0xf]
        %v949 = vld [vmem:[%s9 + $0xc] sm:$0xf]
        %v950 = vld [vmem:[%s10] sm:$0x1]
        %v952 = vperm.slane %v950, 0
        %v958 = vunpack.c.l.b16 %v946
        %v959 = vunpack.c.l.b16 %v947
        %v960 = vunpack.c.l.b16 %v948
        %v961 = vunpack.c.l.b16 %v949
        %v962 = vpack.c.b16 %v959, %v958
        %v963 = vpack.c.b16 %v961, %v960
        %v967 = vsel %vm609, %v945, 0
        %969 = vmatpush.bf16.msra.mxu0 0
        %970 = vmatpush.bf16.msra.mxu0 0
        %971 = vmatpush.bf16.msra.mxu0 0
        %972 = vmatpush.bf16.msra.mxu0 0
        %973 = vmatpush.bf16.msra.mxu0 0
        %974 = vmatpush.bf16.msra.mxu0 0
        %975 = vmatpush.bf16.msra.mxu0 %v963
        %976 = vmatpush.bf16.msra.mxu0 %v962
        %977 = vmatmul.bf16.gmra.mxu0 %v967
        %v978 = vpop.f32.mrf.mxu0
        %v979 = vadd.f32 %v952, %v978
        %v980 = vpop.f32.mrf.mxu0
        %981 = vdwg.mxu0
        %v982 = vmul.f32 %v979, 0.5
        %v983 = vmul.f32 %v979, 0.044715
        %v984 = vmul.f32 %v983, %v979
        %v985 = vmul.f32 %v984, %v979
        %v986 = vadd.f32 %v979, %v985
        %v987 = vmul.f32 %v986, 0.7978846
        %v988 = vtanh.pop %v987
        %v989 = vadd.f32 %v988, 1.0
        %v990 = vmul.f32 %v982, %v989
        %v991 = vpack.c.bf16 %v990, %v990
        %v992 = vld [vmem:[%s11] sm:$0xf]
        %v993 = vld [vmem:[%s11 + $0x4] sm:$0xf]
        %v994 = vld [vmem:[%s11 + $0x8] sm:$0xf]
        %v995 = vld [vmem:[%s11 + $0xc] sm:$0xf]
        %v996 = vld [vmem:[%s11 + $0x10] sm:$0xf]
        %v997 = vld [vmem:[%s11 + $0x14] sm:$0xf]
        %v998 = vld [vmem:[%s11 + $0x18] sm:$0xf]
        %v999 = vld [vmem:[%s11 + $0x1c] sm:$0xf]
        %v1000 = vld [vmem:[%s11 + $0x20] sm:$0xf]
        %v1001 = vld [vmem:[%s11 + $0x24] sm:$0xf]
        %v1002 = vld [vmem:[%s11 + $0x28] sm:$0xf]
        %v1003 = vld [vmem:[%s11 + $0x2c] sm:$0xf]
        %v1004 = vld [vmem:[%s11 + $0x30] sm:$0xf]
        %v1005 = vld [vmem:[%s11 + $0x34] sm:$0xf]
        %v1006 = vld [vmem:[%s11 + $0x38] sm:$0xf]
        %v1007 = vld [vmem:[%s11 + $0x3c] sm:$0xf]
        %v1008 = vld [vmem:[%s12] sm:$0x1]
        %v1010 = vperm.slane %v1008, 0
        %v1028 = vunpack.c.l.b16 %v992
        %v1029 = vunpack.c.l.b16 %v993
        %v1030 = vunpack.c.l.b16 %v994
        %v1031 = vunpack.c.l.b16 %v995
        %v1032 = vunpack.c.l.b16 %v996
        %v1033 = vunpack.c.l.b16 %v997
        %v1034 = vunpack.c.l.b16 %v998
        %v1035 = vunpack.c.l.b16 %v999
        %v1036 = vunpack.c.l.b16 %v1000
        %v1037 = vunpack.c.l.b16 %v1001
        %v1038 = vunpack.c.l.b16 %v1002
        %v1039 = vunpack.c.l.b16 %v1003
        %v1040 = vunpack.c.l.b16 %v1004
        %v1041 = vunpack.c.l.b16 %v1005
        %v1042 = vunpack.c.l.b16 %v1006
        %v1043 = vunpack.c.l.b16 %v1007
        %v1044 = vpack.c.b16 %v1029, %v1028
        %v1045 = vpack.c.b16 %v1031, %v1030
        %v1046 = vpack.c.b16 %v1033, %v1032
        %v1047 = vpack.c.b16 %v1035, %v1034
        %v1048 = vpack.c.b16 %v1037, %v1036
        %v1049 = vpack.c.b16 %v1039, %v1038
        %v1050 = vpack.c.b16 %v1041, %v1040
        %v1051 = vpack.c.b16 %v1043, %v1042
        %1060 = vmatpush.bf16.msra.mxu0 %v1051
        %1061 = vmatpush.bf16.msra.mxu0 %v1050
        %1062 = vmatpush.bf16.msra.mxu0 %v1049
        %1063 = vmatpush.bf16.msra.mxu0 %v1048
        %1064 = vmatpush.bf16.msra.mxu0 %v1047
        %1065 = vmatpush.bf16.msra.mxu0 %v1046
        %1066 = vmatpush.bf16.msra.mxu0 %v1045
        %1067 = vmatpush.bf16.msra.mxu0 %v1044
        %1068 = vmatmul.bf16.gmra.mxu0 %v991
        %v1069 = vpop.f32.mrf.mxu0
        %v1070 = vadd.f32 %v1010, %v1069
        %v1071 = vpop.f32.mrf.mxu0
        %1072 = vdwg.mxu0
        %v1073 = vadd.f32 %v905, %v1070
        %v1074 = vpack.c.bf16 %v1073, %v1073
        %vm1075 = vcmask 257024
        %1076 = vst.msk [vmem:[%s478] sm:$0xf] %vm1075, %v1074
        %s1077 = sand.u32 %s332, 1
        %s1078 = scalar_lea.sflag [#allocation7], %s1077
        %s1079 = sand.u32 %s332, 1
        %s1080 = smul.addr %s1079, 4
        %s1081 = scalar_lea.vmem [#allocation6], %s1080
        %s1082 = sand.u32 %s360, 1
        %s1083 = scalar_lea.sflag [#allocation9], %s1082
        %s1084 = sand.u32 %s360, 1
        %s1085 = smul.addr %s1084, 16
        %s1086 = scalar_lea.vmem [#allocation8], %s1085
        // Predicated region
        $region77: #{tpu_custom_call.1} parent=71 // pred_check
          %p1087 = pneg %p342
        $region78: #{tpu_custom_call.1} parent=71 // pred_check_branch
          %1089 = sbr.rel (%p1087) target = $region80
        $region79: #{tpu_custom_call.1} parent=71 // pred_region
          %1091 = vsyncadd %s1078, 0
          %s1092 = sadd.s32 %s37, %s36
          %s1093 = smul.addr %s1092, 4
          %s1094 = scalar_lea.hbm %s13, %s1093
          %s1096 = sshll.u32 %s1081, 4
          %s1097 = int_to_ptr.vmem [resolvable:$true] %s1096
          %s1098 = sshll.u32 %s1094, 4
          %s1099 = int_to_ptr.hbm [resolvable:$true] %s1098
          %1101 = dma.vmem_to_hbm [thread:$0]  %s1097, 64, %s1099, %s1078
        $region80: #{tpu_custom_call.1} parent=71 // pred_fallthru
          _
        // Predicated region
        $region81: #{tpu_custom_call.1} parent=71 // pred_check
          %p1102 = pneg %p370
        $region82: #{tpu_custom_call.1} parent=71 // pred_check_branch
          %1104 = sbr.rel (%p1102) target = $region84
        $region83: #{tpu_custom_call.1} parent=71 // pred_region
          %1106 = vsyncadd %s1083, 0
          %s1107 = smul.addr %s36, 4
          %s1108 = sadd.s32 %s37, %s1107
          %s1109 = smul.addr %s1108, 4
          %s1110 = scalar_lea.hbm %s14, %s1109
          %s1111 = sshll.u32 %s1086, 4
          %s1112 = int_to_ptr.vmem [resolvable:$true] %s1111
          %s1113 = sshll.u32 %s1110, 4
          %s1114 = int_to_ptr.hbm [resolvable:$true] %s1113
          %1119 = dma.vmem_to_hbm [thread:$0]  %s1112, 256, %s1114, %s1083, 64, 64, 4
        $region84: #{tpu_custom_call.1} parent=71 // pred_fallthru
          _
      $region72: #{tpu_custom_call.1} parent=5 // pred_fallthru
        _
      %p1120 = scmp.le.s32.totalorder 2, %s27
      // Predicated region
      $region85: #{tpu_custom_call.1} parent=5 // pred_check
        %p1121 = pneg %p1120
      $region86: #{tpu_custom_call.1} parent=5 // pred_check_branch
        %1123 = sbr.rel (%p1121) target = $region88
      $region87: #{tpu_custom_call.1} parent=5 // pred_region
        %s1124 = ssub.s32 %s27, 2
        // Predicated region
        $region89: #{tpu_custom_call.1} parent=87 // pred_check
          %p1125 = pneg %p348
        $region90: #{tpu_custom_call.1} parent=87 // pred_check_branch
          %1127 = sbr.rel (%p1125) target = $region92
        $region91: #{tpu_custom_call.1} parent=87 // pred_region
          %s1128 = sand.u32 %s333, 1
          %s1129 = scalar_lea.sflag [#allocation7], %s1128
          %s1130 = sand.u32 %s333, 1
          %s1131 = smul.addr %s1130, 4
          %s1132 = scalar_lea.vmem [#allocation6], %s1131
          %1134 = dma.done %s1129, 64
        $region92: #{tpu_custom_call.1} parent=87 // pred_fallthru
          _
        // Predicated region
        $region93: #{tpu_custom_call.1} parent=87 // pred_check
          %p1135 = pneg %p376
        $region94: #{tpu_custom_call.1} parent=87 // pred_check_branch
          %1137 = sbr.rel (%p1135) target = $region96
        $region95: #{tpu_custom_call.1} parent=87 // pred_region
          %s1138 = sand.u32 %s361, 1
          %s1139 = scalar_lea.sflag [#allocation9], %s1138
          %s1140 = sand.u32 %s361, 1
          %s1141 = smul.addr %s1140, 16
          %s1142 = scalar_lea.vmem [#allocation8], %s1141
          %1144 = dma.done %s1139, 256
        $region96: #{tpu_custom_call.1} parent=87 // pred_fallthru
          _
      $region88: #{tpu_custom_call.1} parent=5 // pred_fallthru
        _
    $region6: #{tpu_custom_call.1} parent=1 // loop_footer
      %s31 = sadd.s32 1, %s27
    $region7: #{tpu_custom_call.1} parent=1 // loop_footer_branch
      %26 = sbr.rel target = $region3
    $region8: #{tpu_custom_call.1} parent=1 // loop_exit
      _
    %1145 = vsyncpa [#allocation7], 1
    %s1146 = scalar_lea.sflag [#allocation7], 1
    %1147 = vsyncpa %s1146, 1
    %1148 = vsyncpa [#allocation9], 1
    %s1149 = scalar_lea.sflag [#allocation9], 1
    %1150 = vsyncpa %s1149, 1

// kernel: tpu_custom_call.1
$region0: #{tpu_custom_call.1}
  #allocation0 [shape = 'u32[]', space=smem, size = 0x4, offset = 0x4, fixed_abs, tag = 'smem constant byte address 0x4 - core index']
  #allocation1 [shape = 'u32[72,128]{1,0:T(1,128)}', space=vmem, size = 0x9000, scoped, tag = 'internal scratch']
  #allocation2 [shape = 'bf16[8,32]{1,0:T(8,128)(2,1)}', space=vmem, size = 0x800, scoped, tag = 'scratch operand']
  #allocation3 [shape = 'bf16[8,32]{1,0:T(8,128)(2,1)}', space=vmem, size = 0x800, scoped, tag = 'scratch operand']
  #allocation4 [shape = 'bf16[8,32]{1,0:T(8,128)(2,1)}', space=vmem, size = 0x800, scoped, tag = 'scratch operand']
  #allocation5 [shape = 'f32[8,32]{1,0:T(8,128)}', space=vmem, size = 0x1000, scoped, tag = 'scratch operand']
  %s0 = inlined_call_operand.vmem [shape: bf16[2,8,32], index: 0, kind: input, shape index: {}]
  %s1 = inlined_call_operand.vmem [shape: f32[1,32], index: 1, kind: input, shape index: {}]
  %s2 = inlined_call_operand.vmem [shape: f32[1,32], index: 2, kind: input, shape index: {}]
  %s3 = inlined_call_operand.vmem [shape: f32[1,32], index: 3, kind: input, shape index: {}]
  %s4 = inlined_call_operand.vmem [shape: f32[1,32], index: 4, kind: input, shape index: {}]
  %s5 = inlined_call_operand.vmem [shape: bf16[32,32], index: 5, kind: input, shape index: {}]
  %s6 = inlined_call_operand.vmem [shape: f32[1,32], index: 6, kind: input, shape index: {}]
  %s7 = inlined_call_operand.vmem [shape: bf16[32,64], index: 7, kind: input, shape index: {}]
  %s8 = inlined_call_operand.vmem [shape: f32[1,64], index: 8, kind: input, shape index: {}]
  %s9 = inlined_call_operand.vmem [shape: bf16[32,128], index: 9, kind: input, shape index: {}]
  %s10 = inlined_call_operand.vmem [shape: f32[1,128], index: 10, kind: input, shape index: {}]
  %s11 = inlined_call_operand.vmem [shape: bf16[128,32], index: 11, kind: input, shape index: {}]
  %s12 = inlined_call_operand.vmem [shape: f32[1,32], index: 12, kind: input, shape index: {}]
  %s13 = inlined_call_operand.hbm [shape: bf16[2,8,32], index: 13, kind: output, shape index: {0}]
  %s14 = inlined_call_operand.hbm [shape: bf16[2,4,8,8], index: 14, kind: output, shape index: {1}]
  %15 = xla_tuple %s13, %s14
  %s16 = sld [smem:[#allocation0]]
  $region97: #{tpu_custom_call.1} parent=0
    _
  %s18 = ssub.s32 1, %s16
  %s19 = scalar_select 0, %s18, %s16
  $region1: #{tpu_custom_call.1} parent=0
    #allocation6 [shape = 'u8[4096]{0}', space=vmem, size = 0x1000, scoped, tag = 'output window, operand 0']
    #allocation7 [shape = 's32[2]{0}', space=sflag, size = 0x8, scoped, tag = 'scoped memory for tpu_custom_call.1']
    #allocation8 [shape = 'u8[16384]{0}', space=vmem, size = 0x4000, scoped, tag = 'output window, operand 1']
    #allocation9 [shape = 's32[2]{0}', space=sflag, size = 0x8, scoped, tag = 'scoped memory for tpu_custom_call.1']
    %20 = vsyncpa [#allocation7], 0
    %s21 = scalar_lea.sflag [#allocation7], 1
    %22 = vsyncpa %s21, 0
    %23 = vsyncpa [#allocation9], 0
    %s24 = scalar_lea.sflag [#allocation9], 1
    %25 = vsyncpa %s24, 0
    loop: start=0, step=1, limit=4
    $region2: #{tpu_custom_call.1} parent=1 // loop_pre_header
      _
    $region3: #{tpu_custom_call.1} parent=1 // loop_header
      %s27 = sphi 0, %s31
      %p28 = scmp.ge.s32.totalorder %s27, 4
      %s34 = sphi 0, %s46
      %s35 = sphi 0, %s42
      %s36 = sphi 0, %s34
      %s37 = sphi 0, %s35
      %s38 = sphi 0, %s36
      %s39 = sphi 0, %s37
      %s49 = sphi 0, %s51
      %s52 = sphi 0, %s49
      %s53 = sphi 0, %s52
      %s69 = sphi 0, %s53
      %s73 = sphi 0, %s73
      %s75 = sphi 0, %s73
      %s76 = sphi 0, %s75
      %s90 = sphi 0, %s76
      %s94 = sphi 0, %s94
      %s96 = sphi 0, %s94
      %s97 = sphi 0, %s96
      %s111 = sphi 0, %s97
      %s115 = sphi 0, %s115
      %s117 = sphi 0, %s115
      %s118 = sphi 0, %s117
      %s132 = sphi 0, %s118
      %s136 = sphi 0, %s136
      %s138 = sphi 0, %s136
      %s139 = sphi 0, %s138
      %s153 = sphi 0, %s139
      %s157 = sphi 0, %s157
      %s159 = sphi 0, %s157
      %s160 = sphi 0, %s159
      %s174 = sphi 0, %s160
      %s178 = sphi 0, %s178
      %s180 = sphi 0, %s178
      %s181 = sphi 0, %s180
      %s195 = sphi 0, %s181
      %s199 = sphi 0, %s199
      %s201 = sphi 0, %s199
      %s202 = sphi 0, %s201
      %s216 = sphi 0, %s202
      %s220 = sphi 0, %s220
      %s222 = sphi 0, %s220
      %s223 = sphi 0, %s222
      %s237 = sphi 0, %s223
      %s241 = sphi 0, %s241
      %s243 = sphi 0, %s241
      %s244 = sphi 0, %s243
      %s258 = sphi 0, %s244
      %s262 = sphi 0, %s262
      %s264 = sphi 0, %s262
      %s265 = sphi 0, %s264
      %s279 = sphi 0, %s265
      %s283 = sphi 0, %s283
      %s285 = sphi 0, %s283
      %s286 = sphi 0, %s285
      %s300 = sphi 0, %s286
      %s304 = sphi 0, %s304
      %s306 = sphi 0, %s304
      %s307 = sphi 0, %s306
      %s321 = sphi 0, %s307
      %s329 = sphi 0, %s331
      %s332 = sphi 0, %s329
      %s333 = sphi 0, %s332
      %s349 = sphi 0, %s333
      %s357 = sphi 0, %s359
      %s360 = sphi 0, %s357
      %s361 = sphi 0, %s360
      %s377 = sphi 0, %s361
    $region4: #{tpu_custom_call.1} parent=1 // loop_header_branch
      %30 = sbr.rel (%p28) target = $region8
    $region5: #{tpu_custom_call.1} parent=1 // loop_body
      %s32 = ssub.s32 %s27, 1
      %s33 = ssub.s32 %s27, 2
      %s40 = sadd.s32 1, %s35
      %p41 = scmp.ge.s32.totalorder %s40, 1
      %s42 = scalar_select %p41, 0, %s40
      %s43 = sadd.s32 1, %s34
      %s44 = scalar_select %p41, %s43, %s34
      %p45 = scmp.ge.s32.totalorder %s44, 2
      %s46 = scalar_select %p45, 0, %s44
      %s47 = ssub.s32 %s34, %s46
      %p48 = scmp.eq.s32.totalorder %s47, 0
      %s50 = sadd.s32 %s49, 1
      %s51 = scalar_select %p48, %s49, %s50
      %p54 = pneg %p48
      %p55 = scmp.eq.s32.totalorder %s27, 1
      %p56 = por %p54, %p55
      %p57 = scmp.ne.s32.totalorder %s49, %s52
      %p58 = scmp.eq.s32.totalorder %s27, 0
      %p59 = por %p57, %p58
      %p60 = scmp.ne.s32.totalorder %s49, %s52
      %p61 = scmp.eq.s32.totalorder %s32, 1
      %p62 = por %p60, %p61
      %p63 = scmp.ne.s32.totalorder %s52, %s53
      %p64 = scmp.eq.s32.totalorder %s32, 0
      %p65 = por %p63, %p64
      %p66 = scmp.ne.s32.totalorder %s52, %s53
      %p67 = scmp.eq.s32.totalorder %s33, 1
      %p68 = por %p66, %p67
      %p70 = scmp.ne.s32.totalorder %s53, %s69
      %p71 = scmp.eq.s32.totalorder %s33, 0
      %p72 = por %p70, %p71
      %s74 = sadd.s32 %s73, 1
      %p77 = scmp.eq.s32.totalorder %s27, 1
      %p78 = scmp.ne.s32.totalorder %s73, %s75
      %p79 = scmp.eq.s32.totalorder %s27, 0
      %p80 = por %p78, %p79
      %p81 = scmp.ne.s32.totalorder %s73, %s75
      %p82 = scmp.eq.s32.totalorder %s32, 1
      %p83 = por %p81, %p82
      %p84 = scmp.ne.s32.totalorder %s75, %s76
      %p85 = scmp.eq.s32.totalorder %s32, 0
      %p86 = por %p84, %p85
      %p87 = scmp.ne.s32.totalorder %s75, %s76
      %p88 = scmp.eq.s32.totalorder %s33, 1
      %p89 = por %p87, %p88
      %p91 = scmp.ne.s32.totalorder %s76, %s90
      %p92 = scmp.eq.s32.totalorder %s33, 0
      %p93 = por %p91, %p92
      %s95 = sadd.s32 %s94, 1
      %p98 = scmp.eq.s32.totalorder %s27, 1
      %p99 = scmp.ne.s32.totalorder %s94, %s96
      %p100 = scmp.eq.s32.totalorder %s27, 0
      %p101 = por %p99, %p100
      %p102 = scmp.ne.s32.totalorder %s94, %s96
      %p103 = scmp.eq.s32.totalorder %s32, 1
      %p104 = por %p102, %p103
      %p105 = scmp.ne.s32.totalorder %s96, %s97
      %p106 = scmp.eq.s32.totalorder %s32, 0
      %p107 = por %p105, %p106
      %p108 = scmp.ne.s32.totalorder %s96, %s97
      %p109 = scmp.eq.s32.totalorder %s33, 1
      %p110 = por %p108, %p109
      %p112 = scmp.ne.s32.totalorder %s97, %s111
      %p113 = scmp.eq.s32.totalorder %s33, 0
      %p114 = por %p112, %p113
      %s116 = sadd.s32 %s115, 1
      %p119 = scmp.eq.s32.totalorder %s27, 1
      %p120 = scmp.ne.s32.totalorder %s115, %s117
      %p121 = scmp.eq.s32.totalorder %s27, 0
      %p122 = por %p120, %p121
      %p123 = scmp.ne.s32.totalorder %s115, %s117
      %p124 = scmp.eq.s32.totalorder %s32, 1
      %p125 = por %p123, %p124
      %p126 = scmp.ne.s32.totalorder %s117, %s118
      %p127 = scmp.eq.s32.totalorder %s32, 0
      %p128 = por %p126, %p127
      %p129 = scmp.ne.s32.totalorder %s117, %s118
      %p130 = scmp.eq.s32.totalorder %s33, 1
      %p131 = por %p129, %p130
      %p133 = scmp.ne.s32.totalorder %s118, %s132
      %p134 = scmp.eq.s32.totalorder %s33, 0
      %p135 = por %p133, %p134
      %s137 = sadd.s32 %s136, 1
      %p140 = scmp.eq.s32.totalorder %s27, 1
      %p141 = scmp.ne.s32.totalorder %s136, %s138
      %p142 = scmp.eq.s32.totalorder %s27, 0
      %p143 = por %p141, %p142
      %p144 = scmp.ne.s32.totalorder %s136, %s138
      %p145 = scmp.eq.s32.totalorder %s32, 1
      %p146 = por %p144, %p145
      %p147 = scmp.ne.s32.totalorder %s138, %s139
      %p148 = scmp.eq.s32.totalorder %s32, 0
      %p149 = por %p147, %p148
      %p150 = scmp.ne.s32.totalorder %s138, %s139
      %p151 = scmp.eq.s32.totalorder %s33, 1
      %p152 = por %p150, %p151
      %p154 = scmp.ne.s32.totalorder %s139, %s153
      %p155 = scmp.eq.s32.totalorder %s33, 0
      %p156 = por %p154, %p155
      %s158 = sadd.s32 %s157, 1
      %p161 = scmp.eq.s32.totalorder %s27, 1
      %p162 = scmp.ne.s32.totalorder %s157, %s159
      %p163 = scmp.eq.s32.totalorder %s27, 0
      %p164 = por %p162, %p163
      %p165 = scmp.ne.s32.totalorder %s157, %s159
      %p166 = scmp.eq.s32.totalorder %s32, 1
      %p167 = por %p165, %p166
      %p168 = scmp.ne.s32.totalorder %s159, %s160
      %p169 = scmp.eq.s32.totalorder %s32, 0
      %p170 = por %p168, %p169
      %p171 = scmp.ne.s32.totalorder %s159, %s160
      %p172 = scmp.eq.s32.totalorder %s33, 1
      %p173 = por %p171, %p172
      %p175 = scmp.ne.s32.totalorder %s160, %s174
      %p176 = scmp.eq.s32.totalorder %s33, 0
      %p177 = por %p175, %p176
      %s179 = sadd.s32 %s178, 1
      %p182 = scmp.eq.s32.totalorder %s27, 1
      %p183 = scmp.ne.s32.totalorder %s178, %s180
      %p184 = scmp.eq.s32.totalorder %s27, 0
      %p185 = por %p183, %p184
      %p186 = scmp.ne.s32.totalorder %s178, %s180
      %p187 = scmp.eq.s32.totalorder %s32, 1
      %p188 = por %p186, %p187
      %p189 = scmp.ne.s32.totalorder %s180, %s181
      %p190 = scmp.eq.s32.totalorder %s32, 0
      %p191 = por %p189, %p190
      %p192 = scmp.ne.s32.totalorder %s180, %s181
      %p193 = scmp.eq.s32.totalorder %s33, 1
      %p194 = por %p192, %p193
      %p196 = scmp.ne.s32.totalorder %s181, %s195
      %p197 = scmp.eq.s32.totalorder %s33, 0
      %p198 = por %p196, %p197
      %s200 = sadd.s32 %s199, 1
      %p203 = scmp.eq.s32.totalorder %s27, 1
      %p204 = scmp.ne.s32.totalorder %s199, %s201
      %p205 = scmp.eq.s32.totalorder %s27, 0
      %p206 = por %p204, %p205
      %p207 = scmp.ne.s32.totalorder %s199, %s201
      %p208 = scmp.eq.s32.totalorder %s32, 1
      %p209 = por %p207, %p208
      %p210 = scmp.ne.s32.totalorder %s201, %s202
      %p211 = scmp.eq.s32.totalorder %s32, 0
      %p212 = por %p210, %p211
      %p213 = scmp.ne.s32.totalorder %s201, %s202
      %p214 = scmp.eq.s32.totalorder %s33, 1
      %p215 = por %p213, %p214
      %p217 = scmp.ne.s32.totalorder %s202, %s216
      %p218 = scmp.eq.s32.totalorder %s33, 0
      %p219 = por %p217, %p218
      %s221 = sadd.s32 %s220, 1
      %p224 = scmp.eq.s32.totalorder %s27, 1
      %p225 = scmp.ne.s32.totalorder %s220, %s222
      %p226 = scmp.eq.s32.totalorder %s27, 0
      %p227 = por %p225, %p226
      %p228 = scmp.ne.s32.totalorder %s220, %s222
      %p229 = scmp.eq.s32.totalorder %s32, 1
      %p230 = por %p228, %p229
      %p231 = scmp.ne.s32.totalorder %s222, %s223
      %p232 = scmp.eq.s32.totalorder %s32, 0
      %p233 = por %p231, %p232
      %p234 = scmp.ne.s32.totalorder %s222, %s223
      %p235 = scmp.eq.s32.totalorder %s33, 1
      %p236 = por %p234, %p235
      %p238 = scmp.ne.s32.totalorder %s223, %s237
      %p239 = scmp.eq.s32.totalorder %s33, 0
      %p240 = por %p238, %p239
      %s242 = sadd.s32 %s241, 1
      %p245 = scmp.eq.s32.totalorder %s27, 1
      %p246 = scmp.ne.s32.totalorder %s241, %s243
      %p247 = scmp.eq.s32.totalorder %s27, 0
      %p248 = por %p246, %p247
      %p249 = scmp.ne.s32.totalorder %s241, %s243
      %p250 = scmp.eq.s32.totalorder %s32, 1
      %p251 = por %p249, %p250
      %p252 = scmp.ne.s32.totalorder %s243, %s244
      %p253 = scmp.eq.s32.totalorder %s32, 0
      %p254 = por %p252, %p253
      %p255 = scmp.ne.s32.totalorder %s243, %s244
      %p256 = scmp.eq.s32.totalorder %s33, 1
      %p257 = por %p255, %p256
      %p259 = scmp.ne.s32.totalorder %s244, %s258
      %p260 = scmp.eq.s32.totalorder %s33, 0
      %p261 = por %p259, %p260
      %s263 = sadd.s32 %s262, 1
      %p266 = scmp.eq.s32.totalorder %s27, 1
      %p267 = scmp.ne.s32.totalorder %s262, %s264
      %p268 = scmp.eq.s32.totalorder %s27, 0
      %p269 = por %p267, %p268
      %p270 = scmp.ne.s32.totalorder %s262, %s264
      %p271 = scmp.eq.s32.totalorder %s32, 1
      %p272 = por %p270, %p271
      %p273 = scmp.ne.s32.totalorder %s264, %s265
      %p274 = scmp.eq.s32.totalorder %s32, 0
      %p275 = por %p273, %p274
      %p276 = scmp.ne.s32.totalorder %s264, %s265
      %p277 = scmp.eq.s32.totalorder %s33, 1
      %p278 = por %p276, %p277
      %p280 = scmp.ne.s32.totalorder %s265, %s279
      %p281 = scmp.eq.s32.totalorder %s33, 0
      %p282 = por %p280, %p281
      %s284 = sadd.s32 %s283, 1
      %p287 = scmp.eq.s32.totalorder %s27, 1
      %p288 = scmp.ne.s32.totalorder %s283, %s285
      %p289 = scmp.eq.s32.totalorder %s27, 0
      %p290 = por %p288, %p289
      %p291 = scmp.ne.s32.totalorder %s283, %s285
      %p292 = scmp.eq.s32.totalorder %s32, 1
      %p293 = por %p291, %p292
      %p294 = scmp.ne.s32.totalorder %s285, %s286
      %p295 = scmp.eq.s32.totalorder %s32, 0
      %p296 = por %p294, %p295
      %p297 = scmp.ne.s32.totalorder %s285, %s286
      %p298 = scmp.eq.s32.totalorder %s33, 1
      %p299 = por %p297, %p298
      %p301 = scmp.ne.s32.totalorder %s286, %s300
      %p302 = scmp.eq.s32.totalorder %s33, 0
      %p303 = por %p301, %p302
      %s305 = sadd.s32 %s304, 1
      %p308 = scmp.eq.s32.totalorder %s27, 1
      %p309 = scmp.ne.s32.totalorder %s304, %s306
      %p310 = scmp.eq.s32.totalorder %s27, 0
      %p311 = por %p309, %p310
      %p312 = scmp.ne.s32.totalorder %s304, %s306
      %p313 = scmp.eq.s32.totalorder %s32, 1
      %p314 = por %p312, %p313
      %p315 = scmp.ne.s32.totalorder %s306, %s307
      %p316 = scmp.eq.s32.totalorder %s32, 0
      %p317 = por %p315, %p316
      %p318 = scmp.ne.s32.totalorder %s306, %s307
      %p319 = scmp.eq.s32.totalorder %s33, 1
      %p320 = por %p318, %p319
      %p322 = scmp.ne.s32.totalorder %s307, %s321
      %p323 = scmp.eq.s32.totalorder %s33, 0
      %p324 = por %p322, %p323
      %s325 = ssub.s32 %s34, %s46
      %s326 = ssub.s32 %s35, %s42
      %s327 = sor.u32 %s325, %s326
      %p328 = scmp.eq.s32.totalorder %s327, 0
      %s330 = sadd.s32 %s329, 1
      %s331 = scalar_select %p328, %s329, %s330
      %p334 = pneg %p328
      %p335 = scmp.eq.s32.totalorder %s27, 1
      %p336 = por %p334, %p335
      %p337 = scmp.ne.s32.totalorder %s329, %s332
      %p338 = scmp.eq.s32.totalorder %s27, 0
      %p339 = por %p337, %p338
      %p340 = scmp.ne.s32.totalorder %s329, %s332
      %p341 = scmp.eq.s32.totalorder %s32, 1
      %p342 = por %p340, %p341
      %p343 = scmp.ne.s32.totalorder %s332, %s333
      %p344 = scmp.eq.s32.totalorder %s32, 0
      %p345 = por %p343, %p344
      %p346 = scmp.ne.s32.totalorder %s332, %s333
      %p347 = scmp.eq.s32.totalorder %s33, 1
      %p348 = por %p346, %p347
      %p350 = scmp.ne.s32.totalorder %s333, %s349
      %p351 = scmp.eq.s32.totalorder %s33, 0
      %p352 = por %p350, %p351
      %s353 = ssub.s32 %s34, %s46
      %s354 = ssub.s32 %s35, %s42
      %s355 = sor.u32 %s353, %s354
      %p356 = scmp.eq.s32.totalorder %s355, 0
      %s358 = sadd.s32 %s357, 1
      %s359 = scalar_select %p356, %s357, %s358
      %p362 = pneg %p356
      %p363 = scmp.eq.s32.totalorder %s27, 1
      %p364 = por %p362, %p363
      %p365 = scmp.ne.s32.totalorder %s357, %s360
      %p366 = scmp.eq.s32.totalorder %s27, 0
      %p367 = por %p365, %p366
      %p368 = scmp.ne.s32.totalorder %s357, %s360
      %p369 = scmp.eq.s32.totalorder %s32, 1
      %p370 = por %p368, %p369
      %p371 = scmp.ne.s32.totalorder %s360, %s361
      %p372 = scmp.eq.s32.totalorder %s32, 0
      %p373 = por %p371, %p372
      %p374 = scmp.ne.s32.totalorder %s360, %s361
      %p375 = scmp.eq.s32.totalorder %s33, 1
      %p376 = por %p374, %p375
      %p378 = scmp.ne.s32.totalorder %s361, %s377
      %p379 = scmp.eq.s32.totalorder %s33, 0
      %p380 = por %p378, %p379
      %p381 = scmp.le.s32.totalorder 1, %s27
      %p382 = scmp.lt.s32.totalorder %s27, 3
      %p383 = pnand %p381, %p382
      %p384 = pneg %p383
      // Predicated region
      $region9: #{tpu_custom_call.1} parent=5 // pred_check
        _
      $region10: #{tpu_custom_call.1} parent=5 // pred_check_branch
        %386 = sbr.rel (%p383) target = $region12
      $region11: #{tpu_custom_call.1} parent=5 // pred_region
        %s387 = ssub.s32 %s27, 1
        // Predicated region
        $region13: #{tpu_custom_call.1} parent=11 // pred_check
          %p388 = pneg %p86
        $region14: #{tpu_custom_call.1} parent=11 // pred_check_branch
          %390 = sbr.rel (%p388) target = $region16
        $region15: #{tpu_custom_call.1} parent=11 // pred_region
          _
        $region16: #{tpu_custom_call.1} parent=11 // pred_fallthru
          _
        // Predicated region
        $region17: #{tpu_custom_call.1} parent=11 // pred_check
          %p391 = pneg %p107
        $region18: #{tpu_custom_call.1} parent=11 // pred_check_branch
          %393 = sbr.rel (%p391) target = $region20
        $region19: #{tpu_custom_call.1} parent=11 // pred_region
          _
        $region20: #{tpu_custom_call.1} parent=11 // pred_fallthru
          _
        // Predicated region
        $region21: #{tpu_custom_call.1} parent=11 // pred_check
          %p394 = pneg %p128
        $region22: #{tpu_custom_call.1} parent=11 // pred_check_branch
          %396 = sbr.rel (%p394) target = $region24
        $region23: #{tpu_custom_call.1} parent=11 // pred_region
          _
        $region24: #{tpu_custom_call.1} parent=11 // pred_fallthru
          _
        // Predicated region
        $region25: #{tpu_custom_call.1} parent=11 // pred_check
          %p397 = pneg %p149
        $region26: #{tpu_custom_call.1} parent=11 // pred_check_branch
          %399 = sbr.rel (%p397) target = $region28
        $region27: #{tpu_custom_call.1} parent=11 // pred_region
          _
        $region28: #{tpu_custom_call.1} parent=11 // pred_fallthru
          _
        // Predicated region
        $region29: #{tpu_custom_call.1} parent=11 // pred_check
          %p400 = pneg %p170
        $region30: #{tpu_custom_call.1} parent=11 // pred_check_branch
          %402 = sbr.rel (%p400) target = $region32
        $region31: #{tpu_custom_call.1} parent=11 // pred_region
          _
        $region32: #{tpu_custom_call.1} parent=11 // pred_fallthru
          _
        // Predicated region
        $region33: #{tpu_custom_call.1} parent=11 // pred_check
          %p403 = pneg %p191
        $region34: #{tpu_custom_call.1} parent=11 // pred_check_branch
          %405 = sbr.rel (%p403) target = $region36
        $region35: #{tpu_custom_call.1} parent=11 // pred_region
          _
        $region36: #{tpu_custom_call.1} parent=11 // pred_fallthru
          _
        // Predicated region
        $region37: #{tpu_custom_call.1} parent=11 // pred_check
          %p406 = pneg %p212
        $region38: #{tpu_custom_call.1} parent=11 // pred_check_branch
          %408 = sbr.rel (%p406) target = $region40
        $region39: #{tpu_custom_call.1} parent=11 // pred_region
          _
        $region40: #{tpu_custom_call.1} parent=11 // pred_fallthru
          _
        // Predicated region
        $region41: #{tpu_custom_call.1} parent=11 // pred_check
          %p409 = pneg %p233
        $region42: #{tpu_custom_call.1} parent=11 // pred_check_branch
          %411 = sbr.rel (%p409) target = $region44
        $region43: #{tpu_custom_call.1} parent=11 // pred_region
          _
        $region44: #{tpu_custom_call.1} parent=11 // pred_fallthru
          _
        // Predicated region
        $region45: #{tpu_custom_call.1} parent=11 // pred_check
          %p412 = pneg %p254
        $region46: #{tpu_custom_call.1} parent=11 // pred_check_branch
          %414 = sbr.rel (%p412) target = $region48
        $region47: #{tpu_custom_call.1} parent=11 // pred_region
          _
        $region48: #{tpu_custom_call.1} parent=11 // pred_fallthru
          _
        // Predicated region
        $region49: #{tpu_custom_call.1} parent=11 // pred_check
          %p415 = pneg %p275
        $region50: #{tpu_custom_call.1} parent=11 // pred_check_branch
          %417 = sbr.rel (%p415) target = $region52
        $region51: #{tpu_custom_call.1} parent=11 // pred_region
          _
        $region52: #{tpu_custom_call.1} parent=11 // pred_fallthru
          _
        // Predicated region
        $region53: #{tpu_custom_call.1} parent=11 // pred_check
          %p418 = pneg %p296
        $region54: #{tpu_custom_call.1} parent=11 // pred_check_branch
          %420 = sbr.rel (%p418) target = $region56
        $region55: #{tpu_custom_call.1} parent=11 // pred_region
          _
        $region56: #{tpu_custom_call.1} parent=11 // pred_fallthru
          _
        // Predicated region
        $region57: #{tpu_custom_call.1} parent=11 // pred_check
          %p421 = pneg %p317
        $region58: #{tpu_custom_call.1} parent=11 // pred_check_branch
          %423 = sbr.rel (%p421) target = $region60
        $region59: #{tpu_custom_call.1} parent=11 // pred_region
          _
        $region60: #{tpu_custom_call.1} parent=11 // pred_fallthru
          _
      $region12: #{tpu_custom_call.1} parent=5 // pred_fallthru
        _
      %p424 = scmp.lt.s32.totalorder %s27, 2
      // Predicated region
      $region61: #{tpu_custom_call.1} parent=5 // pred_check
        %p425 = pneg %p424
      $region62: #{tpu_custom_call.1} parent=5 // pred_check_branch
        %427 = sbr.rel (%p425) target = $region64
      $region63: #{tpu_custom_call.1} parent=5 // pred_region
        // Predicated region
        $region65: #{tpu_custom_call.1} parent=63 // pred_check
          %p428 = pneg %p59
        $region66: #{tpu_custom_call.1} parent=63 // pred_check_branch
          %430 = sbr.rel (%p428) target = $region68
        $region67: #{tpu_custom_call.1} parent=63 // pred_region
          %p431 = scmp.lt.s32.totalorder %s34, 1
          %s432 = scalar_select %p431, %s34, 1
          %s433 = smul.addr %s432, 4
          %s434 = scalar_lea.vmem %s0, %s433
        $region68: #{tpu_custom_call.1} parent=63 // pred_fallthru
          _
      $region64: #{tpu_custom_call.1} parent=5 // pred_fallthru
        _
      %p435 = scmp.le.s32.totalorder 1, %s27
      %p436 = scmp.lt.s32.totalorder %s27, 3
      %p437 = pnand %p435, %p436
      %p438 = pneg %p437
      // Predicated region
      $region69: #{tpu_custom_call.1} parent=5 // pred_check
        _
      $region70: #{tpu_custom_call.1} parent=5 // pred_check_branch
        %440 = sbr.rel (%p437) target = $region72
      $region71: #{tpu_custom_call.1} parent=5 // pred_region
        %s441 = ssub.s32 %s27, 1
        %p442 = scmp.lt.s32.totalorder %s36, 1
        %s443 = scalar_select %p442, %s36, 1
        %s444 = smul.addr %s443, 4
        %s445 = scalar_lea.vmem %s0, %s444
        %p446 = pneg %p65
        %p447 = pneg %p62
        %p448 = pneg %p86
        %p449 = pneg %p83
        %p450 = pneg %p107
        %p451 = pneg %p104
        %p452 = pneg %p128
        %p453 = pneg %p125
        %p454 = pneg %p149
        %p455 = pneg %p146
        %p456 = pneg %p170
        %p457 = pneg %p167
        %p458 = pneg %p191
        %p459 = pneg %p188
        %p460 = pneg %p212
        %p461 = pneg %p209
        %p462 = pneg %p233
        %p463 = pneg %p230
        %p464 = pneg %p254
        %p465 = pneg %p251
        %p466 = pneg %p275
        %p467 = pneg %p272
        %p468 = pneg %p296
        %p469 = pneg %p293
        %p470 = pneg %p317
        %p471 = pneg %p314
        %p472 = pneg %p345
        %p473 = pneg %p342
        %s474 = sand.u32 %s332, 1
        %s475 = scalar_lea.sflag [#allocation7], %s474
        %s476 = sand.u32 %s332, 1
        %s477 = smul.addr %s476, 4
        %s478 = scalar_lea.vmem [#allocation6], %s477
        %p479 = pneg %p373
        %p480 = pneg %p370
        %s481 = sand.u32 %s360, 1
        %s482 = scalar_lea.sflag [#allocation9], %s481
        %s483 = sand.u32 %s360, 1
        %s484 = smul.addr %s483, 16
        %s485 = scalar_lea.vmem [#allocation8], %s484
        %p486 = scmp.lt.s32.totalorder %s36, 1
        %s487 = scalar_select %p486, %s36, 1
        %s488 = smul.addr %s487, 4
        %s489 = scalar_lea.vmem %s0, %s488
        %v491 = vld [vmem:[%s1] sm:$0x1]
        %v492 = vld [vmem:[%s2] sm:$0x1]
        %p493 = scmp.eq.s32.totalorder %s37, 0
        // Predicated region
        $region73: #{tpu_custom_call.1} parent=71 // pred_check
          %p494 = pneg %p493
        $region74: #{tpu_custom_call.1} parent=71 // pred_check_branch
          %496 = sbr.rel (%p494) target = $region76
        $region75: #{tpu_custom_call.1} parent=71 // pred_region
          %v497 = vld [vmem:[%s489] sm:$0xf]
          %v498 = vunpack.c.l.bf16 %v497
          %vm499 = vcmask 261120
          %v500 = vsel %vm499, %v498, 0.0
          %501 = vadd.xlane.f32.xlu0 %v500
          %v502 = vpop.xlane.xlu0 %501
          %v503 = vrcp.pop 32.0
          %v504 = vmul.f32 32.0, %v503
          %v505 = vsub.f32 1.0, %v504
          %v506 = vmul.f32 %v503, %v505
          %v507 = vadd.f32 %v503, %v506
          %vm508 = vweird.f32 %v503
          %v509 = vsel %vm508, %v503, %v507
          %v510 = vmul.f32 %v502, %v509
          %v511 = vsub.f32 %v498, %v510
          %v512 = vmul.f32 %v511, %v511
          %v513 = vsel %vm499, %v512, 0.0
          %514 = vadd.xlane.f32.xlu0 %v513
          %v515 = vpop.xlane.xlu0 %514
          %v516 = vmul.f32 %v515, %v509
          %v517 = vadd.f32 %v516, 1e-05
          %v518 = vrsqrt.pop %v517
          %v519 = vmul.f32 %v518, %v517
          %v520 = vmul.f32 %v519, %v518
          %v521 = vmul.f32 0.5, %v520
          %v522 = vsub.f32 1.5, %v521
          %v523 = vmul.f32 %v518, %v522
          %vm524 = vweird.f32 %v517
          %vm525 = vweird.f32 %v518
          %vm526 = vmor %vm524, %vm525
          %v527 = vsel %vm526, %v518, %v523
          %v528 = vmul.f32 %v511, %v527
          %v530 = vperm.slane %v491, 0
          %v532 = vmul.f32 %v528, %v530
          %v534 = vperm.slane %v492, 0
          %v536 = vadd.f32 %v532, %v534
          %v537 = vpack.c.bf16 %v536, %v536
          %vm538 = vcmask 257024
          %539 = vst.msk [vmem:[#allocation2] sm:$0xf] %vm538, %v537
          %v540 = vld [vmem:[%s7] sm:$0xf]
          %v541 = vld [vmem:[%s7 + $0x4] sm:$0xf]
          %v542 = vld [vmem:[%s7 + $0x8] sm:$0xf]
          %v543 = vld [vmem:[%s7 + $0xc] sm:$0xf]
          %v544 = vld [vmem:[%s8] sm:$0x1]
          %v546 = vperm.slane %v544, 0
          %v552 = vunpack.c.l.b16 %v540
          %v553 = vunpack.c.l.b16 %v541
          %v554 = vunpack.c.l.b16 %v542
          %v555 = vunpack.c.l.b16 %v543
          %v556 = vpack.c.b16 %v553, %v552
          %v557 = vpack.c.b16 %v555, %v554
          %v561 = vsel %vm499, %v537, 0
          %563 = vmatpush.bf16.msra.mxu0 0
          %564 = vmatpush.bf16.msra.mxu0 0
          %565 = vmatpush.bf16.msra.mxu0 0
          %566 = vmatpush.bf16.msra.mxu0 0
          %567 = vmatpush.bf16.msra.mxu0 0
          %568 = vmatpush.bf16.msra.mxu0 0
          %569 = vmatpush.bf16.msra.mxu0 %v557
          %570 = vmatpush.bf16.msra.mxu0 %v556
          %571 = vmatmul.bf16.gmra.mxu0 %v561
          %v572 = vpop.f32.mrf.mxu0
          %v573 = vadd.f32 %v546, %v572
          %v574 = vpop.f32.mrf.mxu0
          %575 = vdwg.mxu0
          %v576 = vpack.c.bf16 %v573, %v573
          %577 = vst.msk [vmem:[#allocation3] sm:$0xf] %vm538, %v576
          %579 = vrot.lane.b32.xlu0 %v576, 96
          %v580 = vpop.permute.xlu0 %579
          %582 = vst.msk [vmem:[#allocation4] sm:$0xf] %vm538, %v580
        $region76: #{tpu_custom_call.1} parent=71 // pred_fallthru
          _
        %s583 = smul.u32 %s37, 8
        %s584 = sshra.s32 %s583, 3
        %s585 = sand.u32 %s583, 7
        %s586 = smul.addr %s584, 4
        %s587 = scalar_lea.vmem [#allocation2], %s586
        %v588 = vld [vmem:[%s587] sm:$0xf]
        %v589 = vld [vmem:[%s5] sm:$0xf]
        %v590 = vld [vmem:[%s5 + $0x4] sm:$0xf]
        %v591 = vld [vmem:[%s5 + $0x8] sm:$0xf]
        %v592 = vld [vmem:[%s5 + $0xc] sm:$0xf]
        %v593 = vld [vmem:[%s6] sm:$0x1]
        %v595 = vperm.slane %v593, 0
        %v601 = vunpack.c.l.b16 %v589
        %v602 = vunpack.c.l.b16 %v590
        %v603 = vunpack.c.l.b16 %v591
        %v604 = vunpack.c.l.b16 %v592
        %v605 = vpack.c.b16 %v602, %v601
        %v606 = vpack.c.b16 %v604, %v603
        %vm609 = vcmask 261120
        %v611 = vsel %vm609, %v588, 0
        %613 = vmatpush.bf16.msra.mxu0 0
        %614 = vmatpush.bf16.msra.mxu0 0
        %615 = vmatpush.bf16.msra.mxu0 0
        %616 = vmatpush.bf16.msra.mxu0 0
        %617 = vmatpush.bf16.msra.mxu0 0
        %618 = vmatpush.bf16.msra.mxu0 0
        %619 = vmatpush.bf16.msra.mxu0 %v606
        %620 = vmatpush.bf16.msra.mxu0 %v605
        %621 = vmatmul.bf16.gmra.mxu0 %v611
        %v622 = vpop.f32.mrf.mxu0
        %v623 = vadd.f32 %v595, %v622
        %v624 = vpop.f32.mrf.mxu0
        %625 = vdwg.mxu0
        %v626 = vpack.c.bf16 %v623, %v623
        %v627 = vld [vmem:[#allocation3] sm:$0xf]
        %v628 = vld [vmem:[#allocation4] sm:$0xf]
        %vm629 = vcmask 64512
        %v631 = vsel %vm629, %v626, 0
        %v634 = vsel %vm629, %v627, 0
        %636 = vmatpush.bf16.xpose.msra.mxu0 0
        %637 = vmatpush.bf16.xpose.msra.mxu0 0
        %638 = vmatpush.bf16.xpose.msra.mxu0 0
        %639 = vmatpush.bf16.xpose.msra.mxu0 0
        %640 = vmatpush.bf16.xpose.msra.mxu0 0
        %641 = vmatpush.bf16.xpose.msra.mxu0 0
        %642 = vmatpush.bf16.xpose.msra.mxu0 0
        %643 = vmatpush.bf16.xpose.msra.mxu0 %v634
        %644 = vmatmul.bf16.gmra.mxu0 %v631
        %v645 = vpop.f32.mrf.mxu0
        %v646 = vadd.f32 0.0, %v645
        %v647 = vpop.f32.mrf.mxu0
        %648 = vdwg.mxu0
        %v649 = vsel %vm629, %v646, -inf
        %650 = vmax.xlane.f32.xlu0 %v649
        %v651 = vpop.xlane.xlu0 %650
        %v652 = vsub.f32 %v646, %v651
        %v653 = vmul.f32 %v652, 1.442695
        %v654 = vpow.pop %v653
        %v655 = vsel %vm629, %v654, 0.0
        %656 = vadd.xlane.f32.xlu0 %v655
        %v657 = vpop.xlane.xlu0 %656
        %v658 = vrcp.pop %v657
        %v659 = vmul.f32 %v654, %v658
        %v660 = vpack.c.bf16 %v659, %v659
        %vm661 = vcmask 60416
        %662 = vst.msk [vmem:[%s485] sm:$0xf] %vm661, %v660
        %v664 = vsel %vm629, %v660, 0
        %vm666 = vcmask 1043456
        %v668 = vsel %vm666, %v628, 0
        %670 = vmatpush.bf16.msra.mxu0 0
        %671 = vmatpush.bf16.msra.mxu0 0
        %672 = vmatpush.bf16.msra.mxu0 0
        %673 = vmatpush.bf16.msra.mxu0 0
        %674 = vmatpush.bf16.msra.mxu0 0
        %675 = vmatpush.bf16.msra.mxu0 0
        %676 = vmatpush.bf16.msra.mxu0 0
        %677 = vmatpush.bf16.msra.mxu0 %v668
        %678 = vmatmul.bf16.gmra.mxu0 %v664
        %v679 = vpop.f32.mrf.mxu0
        %v680 = vadd.f32 0.0, %v679
        %v681 = vpop.f32.mrf.mxu0
        %682 = vdwg.mxu0
        %683 = vst.msk [vmem:[#allocation5] sm:$0xff] %vm629, %v680
        %v684 = vld [vmem:[#allocation3] sm:$0xf]
        %v685 = vld [vmem:[#allocation4] sm:$0xf]
        %v687 = vunpack.c.l.b16 %v626
        %v688 = vpack.c.b16 %v687, %v687
        %689 = vrot.lane.b32.xlu0 %v688, 120
        %v690 = vpop.permute.xlu0 %689
        %v692 = vunpack.c.l.b16 %v684
        %v693 = vpack.c.b16 %v692, %v692
        %694 = vrot.lane.b32.xlu0 %v693, 120
        %v695 = vpop.permute.xlu0 %694
        %v697 = vsel %vm629, %v690, 0
        %v700 = vsel %vm629, %v695, 0
        %702 = vmatpush.bf16.xpose.msra.mxu0 0
        %703 = vmatpush.bf16.xpose.msra.mxu0 0
        %704 = vmatpush.bf16.xpose.msra.mxu0 0
        %705 = vmatpush.bf16.xpose.msra.mxu0 0
        %706 = vmatpush.bf16.xpose.msra.mxu0 0
        %707 = vmatpush.bf16.xpose.msra.mxu0 0
        %708 = vmatpush.bf16.xpose.msra.mxu0 0
        %709 = vmatpush.bf16.xpose.msra.mxu0 %v700
        %710 = vmatmul.bf16.gmra.mxu0 %v697
        %v711 = vpop.f32.mrf.mxu0
        %v712 = vadd.f32 0.0, %v711
        %v713 = vpop.f32.mrf.mxu0
        %714 = vdwg.mxu0
        %v715 = vsel %vm629, %v712, -inf
        %716 = vmax.xlane.f32.xlu0 %v715
        %v717 = vpop.xlane.xlu0 %716
        %v718 = vsub.f32 %v712, %v717
        %v719 = vmul.f32 %v718, 1.442695
        %v720 = vpow.pop %v719
        %v721 = vsel %vm629, %v720, 0.0
        %722 = vadd.xlane.f32.xlu0 %v721
        %v723 = vpop.xlane.xlu0 %722
        %v724 = vrcp.pop %v723
        %v725 = vmul.f32 %v720, %v724
        %v726 = vpack.c.bf16 %v725, %v725
        %s727 = scalar_lea.vmem %s485, 4 [#allocation8]
        %728 = vst.msk [vmem:[%s727] sm:$0xf] %vm661, %v726
        %v730 = vunpack.c.l.b16 %v685
        %v731 = vpack.c.b16 %v730, %v730
        %732 = vrot.lane.b32.xlu0 %v731, 120
        %v733 = vpop.permute.xlu0 %732
        %v735 = vsel %vm629, %v726, 0
        %v738 = vsel %vm666, %v733, 0
        %740 = vmatpush.bf16.msra.mxu0 0
        %741 = vmatpush.bf16.msra.mxu0 0
        %742 = vmatpush.bf16.msra.mxu0 0
        %743 = vmatpush.bf16.msra.mxu0 0
        %744 = vmatpush.bf16.msra.mxu0 0
        %745 = vmatpush.bf16.msra.mxu0 0
        %746 = vmatpush.bf16.msra.mxu0 0
        %747 = vmatpush.bf16.msra.mxu0 %v738
        %748 = vmatmul.bf16.gmra.mxu0 %v735
        %v749 = vpop.f32.mrf.mxu0
        %v750 = vadd.f32 0.0, %v749
        %v751 = vpop.f32.mrf.mxu0
        %752 = vdwg.mxu0
        %754 = vrot.lane.b32.xlu0 %v750, 8
        %v755 = vpop.permute.xlu0 %754
        %vm757 = vcmask 130112
        %758 = vst.msk [vmem:[#allocation5] sm:$0xff] %vm757, %v755
        %v759 = vld [vmem:[#allocation3] sm:$0xf]
        %v760 = vld [vmem:[#allocation4] sm:$0xf]
        %761 = vrot.lane.b32.xlu0 %v688, 112
        %v762 = vpop.permute.xlu0 %761
        %v764 = vunpack.c.l.b16 %v759
        %v765 = vpack.c.b16 %v764, %v764
        %766 = vrot.lane.b32.xlu0 %v765, 112
        %v767 = vpop.permute.xlu0 %766
        %v769 = vsel %vm629, %v762, 0
        %v772 = vsel %vm629, %v767, 0
        %774 = vmatpush.bf16.xpose.msra.mxu0 0
        %775 = vmatpush.bf16.xpose.msra.mxu0 0
        %776 = vmatpush.bf16.xpose.msra.mxu0 0
        %777 = vmatpush.bf16.xpose.msra.mxu0 0
        %778 = vmatpush.bf16.xpose.msra.mxu0 0
        %779 = vmatpush.bf16.xpose.msra.mxu0 0
        %780 = vmatpush.bf16.xpose.msra.mxu0 0
        %781 = vmatpush.bf16.xpose.msra.mxu0 %v772
        %782 = vmatmul.bf16.gmra.mxu0 %v769
        %v783 = vpop.f32.mrf.mxu0
        %v784 = vadd.f32 0.0, %v783
        %v785 = vpop.f32.mrf.mxu0
        %786 = vdwg.mxu0
        %v787 = vsel %vm629, %v784, -inf
        %788 = vmax.xlane.f32.xlu0 %v787
        %v789 = vpop.xlane.xlu0 %788
        %v790 = vsub.f32 %v784, %v789
        %v791 = vmul.f32 %v790, 1.442695
        %v792 = vpow.pop %v791
        %v793 = vsel %vm629, %v792, 0.0
        %794 = vadd.xlane.f32.xlu0 %v793
        %v795 = vpop.xlane.xlu0 %794
        %v796 = vrcp.pop %v795
        %v797 = vmul.f32 %v792, %v796
        %v798 = vpack.c.bf16 %v797, %v797
        %s799 = scalar_lea.vmem %s485, 8 [#allocation8]
        %800 = vst.msk [vmem:[%s799] sm:$0xf] %vm661, %v798
        %v802 = vunpack.c.l.b16 %v760
        %v803 = vpack.c.b16 %v802, %v802
        %804 = vrot.lane.b32.xlu0 %v803, 112
        %v805 = vpop.permute.xlu0 %804
        %v807 = vsel %vm629, %v798, 0
        %v810 = vsel %vm666, %v805, 0
        %812 = vmatpush.bf16.msra.mxu0 0
        %813 = vmatpush.bf16.msra.mxu0 0
        %814 = vmatpush.bf16.msra.mxu0 0
        %815 = vmatpush.bf16.msra.mxu0 0
        %816 = vmatpush.bf16.msra.mxu0 0
        %817 = vmatpush.bf16.msra.mxu0 0
        %818 = vmatpush.bf16.msra.mxu0 0
        %819 = vmatpush.bf16.msra.mxu0 %v810
        %820 = vmatmul.bf16.gmra.mxu0 %v807
        %v821 = vpop.f32.mrf.mxu0
        %v822 = vadd.f32 0.0, %v821
        %v823 = vpop.f32.mrf.mxu0
        %824 = vdwg.mxu0
        %826 = vrot.lane.b32.xlu0 %v822, 16
        %v827 = vpop.permute.xlu0 %826
        %vm829 = vcmask 195712
        %830 = vst.msk [vmem:[#allocation5] sm:$0xff] %vm829, %v827
        %v831 = vld [vmem:[#allocation3] sm:$0xf]
        %v832 = vld [vmem:[#allocation4] sm:$0xf]
        %833 = vrot.lane.b32.xlu0 %v688, 104
        %v834 = vpop.permute.xlu0 %833
        %v836 = vunpack.c.l.b16 %v831
        %v837 = vpack.c.b16 %v836, %v836
        %838 = vrot.lane.b32.xlu0 %v837, 104
        %v839 = vpop.permute.xlu0 %838
        %v841 = vsel %vm629, %v834, 0
        %v844 = vsel %vm629, %v839, 0
        %846 = vmatpush.bf16.xpose.msra.mxu0 0
        %847 = vmatpush.bf16.xpose.msra.mxu0 0
        %848 = vmatpush.bf16.xpose.msra.mxu0 0
        %849 = vmatpush.bf16.xpose.msra.mxu0 0
        %850 = vmatpush.bf16.xpose.msra.mxu0 0
        %851 = vmatpush.bf16.xpose.msra.mxu0 0
        %852 = vmatpush.bf16.xpose.msra.mxu0 0
        %853 = vmatpush.bf16.xpose.msra.mxu0 %v844
        %854 = vmatmul.bf16.gmra.mxu0 %v841
        %v855 = vpop.f32.mrf.mxu0
        %v856 = vadd.f32 0.0, %v855
        %v857 = vpop.f32.mrf.mxu0
        %858 = vdwg.mxu0
        %v859 = vsel %vm629, %v856, -inf
        %860 = vmax.xlane.f32.xlu0 %v859
        %v861 = vpop.xlane.xlu0 %860
        %v862 = vsub.f32 %v856, %v861
        %v863 = vmul.f32 %v862, 1.442695
        %v864 = vpow.pop %v863
        %v865 = vsel %vm629, %v864, 0.0
        %866 = vadd.xlane.f32.xlu0 %v865
        %v867 = vpop.xlane.xlu0 %866
        %v868 = vrcp.pop %v867
        %v869 = vmul.f32 %v864, %v868
        %v870 = vpack.c.bf16 %v869, %v869
        %s871 = scalar_lea.vmem %s485, 12 [#allocation8]
        %872 = vst.msk [vmem:[%s871] sm:$0xf] %vm661, %v870
        %v874 = vunpack.c.l.b16 %v832
        %v875 = vpack.c.b16 %v874, %v874
        %876 = vrot.lane.b32.xlu0 %v875, 104
        %v877 = vpop.permute.xlu0 %876
        %v879 = vsel %vm629, %v870, 0
        %v882 = vsel %vm666, %v877, 0
        %884 = vmatpush.bf16.msra.mxu0 0
        %885 = vmatpush.bf16.msra.mxu0 0
        %886 = vmatpush.bf16.msra.mxu0 0
        %887 = vmatpush.bf16.msra.mxu0 0
        %888 = vmatpush.bf16.msra.mxu0 0
        %889 = vmatpush.bf16.msra.mxu0 0
        %890 = vmatpush.bf16.msra.mxu0 0
        %891 = vmatpush.bf16.msra.mxu0 %v882
        %892 = vmatmul.bf16.gmra.mxu0 %v879
        %v893 = vpop.f32.mrf.mxu0
        %v894 = vadd.f32 0.0, %v893
        %v895 = vpop.f32.mrf.mxu0
        %896 = vdwg.mxu0
        %898 = vrot.lane.b32.xlu0 %v894, 24
        %v899 = vpop.permute.xlu0 %898
        %vm901 = vcmask 261312
        %902 = vst.msk [vmem:[#allocation5] sm:$0xff] %vm901, %v899
        %v903 = vld [vmem:[#allocation5] sm:$0xff]
        %v904 = vunpack.c.l.bf16 %v588
        %v905 = vadd.f32 %v904, %v903
        %v906 = vld [vmem:[%s3] sm:$0x1]
        %v907 = vld [vmem:[%s4] sm:$0x1]
        %v908 = vsel %vm609, %v905, 0.0
        %909 = vadd.xlane.f32.xlu0 %v908
        %v910 = vpop.xlane.xlu0 %909
        %v911 = vrcp.pop 32.0
        %v912 = vmul.f32 32.0, %v911
        %v913 = vsub.f32 1.0, %v912
        %v914 = vmul.f32 %v911, %v913
        %v915 = vadd.f32 %v911, %v914
        %vm916 = vweird.f32 %v911
        %v917 = vsel %vm916, %v911, %v915
        %v918 = vmul.f32 %v910, %v917
        %v919 = vsub.f32 %v905, %v918
        %v920 = vmul.f32 %v919, %v919
        %v921 = vsel %vm609, %v920, 0.0
        %922 = vadd.xlane.f32.xlu0 %v921
        %v923 = vpop.xlane.xlu0 %922
        %v924 = vmul.f32 %v923, %v917
        %v925 = vadd.f32 %v924, 1e-05
        %v926 = vrsqrt.pop %v925
        %v927 = vmul.f32 %v926, %v925
        %v928 = vmul.f32 %v927, %v926
        %v929 = vmul.f32 0.5, %v928
        %v930 = vsub.f32 1.5, %v929
        %v931 = vmul.f32 %v926, %v930
        %vm932 = vweird.f32 %v925
        %vm933 = vweird.f32 %v926
        %vm934 = vmor %vm932, %vm933
        %v935 = vsel %vm934, %v926, %v931
        %v936 = vmul.f32 %v919, %v935
        %v938 = vperm.slane %v906, 0
        %v940 = vmul.f32 %v936, %v938
        %v942 = vperm.slane %v907, 0
        %v944 = vadd.f32 %v940, %v942
        %v945 = vpack.c.bf16 %v944, %v944
        %v946 = vld [vmem:[%s9] sm:$0xf]
        %v947 = vld [vmem:[%s9 + $0x4] sm:$0xf]
        %v948 = vld [vmem:[%s9 + $0x8] sm:$0xf]
        %v949 = vld [vmem:[%s9 + $0xc] sm:$0xf]
        %v950 = vld [vmem:[%s10] sm:$0x1]
        %v952 = vperm.slane %v950, 0
        %v958 = vunpack.c.l.b16 %v946
        %v959 = vunpack.c.l.b16 %v947
        %v960 = vunpack.c.l.b16 %v948
        %v961 = vunpack.c.l.b16 %v949
        %v962 = vpack.c.b16 %v959, %v958
        %v963 = vpack.c.b16 %v961, %v960
        %v967 = vsel %vm609, %v945, 0
        %969 = vmatpush.bf16.msra.mxu0 0
        %970 = vmatpush.bf16.msra.mxu0 0
        %971 = vmatpush.bf16.msra.mxu0 0
        %972 = vmatpush.bf16.msra.mxu0 0
        %973 = vmatpush.bf16.msra.mxu0 0
        %974 = vmatpush.bf16.msra.mxu0 0
        %975 = vmatpush.bf16.msra.mxu0 %v963
        %976 = vmatpush.bf16.msra.mxu0 %v962
        %977 = vmatmul.bf16.gmra.mxu0 %v967
        %v978 = vpop.f32.mrf.mxu0
        %v979 = vadd.f32 %v952, %v978
        %v980 = vpop.f32.mrf.mxu0
        %981 = vdwg.mxu0
        %v982 = vmul.f32 %v979, 0.5
        %v983 = vmul.f32 %v979, 0.044715
        %v984 = vmul.f32 %v983, %v979
        %v985 = vmul.f32 %v984, %v979
        %v986 = vadd.f32 %v979, %v985
        %v987 = vmul.f32 %v986, 0.7978846
        %v988 = vtanh.pop %v987
        %v989 = vadd.f32 %v988, 1.0
        %v990 = vmul.f32 %v982, %v989
        %v991 = vpack.c.bf16 %v990, %v990
        %v992 = vld [vmem:[%s11] sm:$0xf]
        %v993 = vld [vmem:[%s11 + $0x4] sm:$0xf]
        %v994 = vld [vmem:[%s11 + $0x8] sm:$0xf]
        %v995 = vld [vmem:[%s11 + $0xc] sm:$0xf]
        %v996 = vld [vmem:[%s11 + $0x10] sm:$0xf]
        %v997 = vld [vmem:[%s11 + $0x14] sm:$0xf]
        %v998 = vld [vmem:[%s11 + $0x18] sm:$0xf]
        %v999 = vld [vmem:[%s11 + $0x1c] sm:$0xf]
        %v1000 = vld [vmem:[%s11 + $0x20] sm:$0xf]
        %v1001 = vld [vmem:[%s11 + $0x24] sm:$0xf]
        %v1002 = vld [vmem:[%s11 + $0x28] sm:$0xf]
        %v1003 = vld [vmem:[%s11 + $0x2c] sm:$0xf]
        %v1004 = vld [vmem:[%s11 + $0x30] sm:$0xf]
        %v1005 = vld [vmem:[%s11 + $0x34] sm:$0xf]
        %v1006 = vld [vmem:[%s11 + $0x38] sm:$0xf]
        %v1007 = vld [vmem:[%s11 + $0x3c] sm:$0xf]
        %v1008 = vld [vmem:[%s12] sm:$0x1]
        %v1010 = vperm.slane %v1008, 0
        %v1028 = vunpack.c.l.b16 %v992
        %v1029 = vunpack.c.l.b16 %v993
        %v1030 = vunpack.c.l.b16 %v994
        %v1031 = vunpack.c.l.b16 %v995
        %v1032 = vunpack.c.l.b16 %v996
        %v1033 = vunpack.c.l.b16 %v997
        %v1034 = vunpack.c.l.b16 %v998
        %v1035 = vunpack.c.l.b16 %v999
        %v1036 = vunpack.c.l.b16 %v1000
        %v1037 = vunpack.c.l.b16 %v1001
        %v1038 = vunpack.c.l.b16 %v1002
        %v1039 = vunpack.c.l.b16 %v1003
        %v1040 = vunpack.c.l.b16 %v1004
        %v1041 = vunpack.c.l.b16 %v1005
        %v1042 = vunpack.c.l.b16 %v1006
        %v1043 = vunpack.c.l.b16 %v1007
        %v1044 = vpack.c.b16 %v1029, %v1028
        %v1045 = vpack.c.b16 %v1031, %v1030
        %v1046 = vpack.c.b16 %v1033, %v1032
        %v1047 = vpack.c.b16 %v1035, %v1034
        %v1048 = vpack.c.b16 %v1037, %v1036
        %v1049 = vpack.c.b16 %v1039, %v1038
        %v1050 = vpack.c.b16 %v1041, %v1040
        %v1051 = vpack.c.b16 %v1043, %v1042
        %1060 = vmatpush.bf16.msra.mxu0 %v1051
        %1061 = vmatpush.bf16.msra.mxu0 %v1050
        %1062 = vmatpush.bf16.msra.mxu0 %v1049
        %1063 = vmatpush.bf16.msra.mxu0 %v1048
        %1064 = vmatpush.bf16.msra.mxu0 %v1047
        %1065 = vmatpush.bf16.msra.mxu0 %v1046
        %1066 = vmatpush.bf16.msra.mxu0 %v1045
        %1067 = vmatpush.bf16.msra.mxu0 %v1044
        %1068 = vmatmul.bf16.gmra.mxu0 %v991
        %v1069 = vpop.f32.mrf.mxu0
        %v1070 = vadd.f32 %v1010, %v1069
        %v1071 = vpop.f32.mrf.mxu0
        %1072 = vdwg.mxu0
        %v1073 = vadd.f32 %v905, %v1070
        %v1074 = vpack.c.bf16 %v1073, %v1073
        %vm1075 = vcmask 257024
        %1076 = vst.msk [vmem:[%s478] sm:$0xf] %vm1075, %v1074
        %s1077 = sand.u32 %s332, 1
        %s1078 = scalar_lea.sflag [#allocation7], %s1077
        %s1079 = sand.u32 %s332, 1
        %s1080 = smul.addr %s1079, 4
        %s1081 = scalar_lea.vmem [#allocation6], %s1080
        %s1082 = sand.u32 %s360, 1
        %s1083 = scalar_lea.sflag [#allocation9], %s1082
        %s1084 = sand.u32 %s360, 1
        %s1085 = smul.addr %s1084, 16
        %s1086 = scalar_lea.vmem [#allocation8], %s1085
        // Predicated region
        $region77: #{tpu_custom_call.1} parent=71 // pred_check
          %p1087 = pneg %p342
        $region78: #{tpu_custom_call.1} parent=71 // pred_check_branch
          %1089 = sbr.rel (%p1087) target = $region80
        $region79: #{tpu_custom_call.1} parent=71 // pred_region
          %1091 = vsyncadd %s1078, 0
          %s1092 = sadd.s32 %s37, %s36
          %s1093 = smul.addr %s1092, 4
          %s1094 = scalar_lea.hbm %s13, %s1093
          %s1096 = sshll.u32 %s1081, 4
          %s1097 = int_to_ptr.vmem [resolvable:$true] %s1096
          %s1098 = sshll.u32 %s1094, 4
          %s1099 = int_to_ptr.hbm [resolvable:$true] %s1098
          %1101 = dma.vmem_to_hbm [thread:$0]  %s1097, 64, %s1099, %s1078
        $region80: #{tpu_custom_call.1} parent=71 // pred_fallthru
          _
        // Predicated region
        $region81: #{tpu_custom_call.1} parent=71 // pred_check
          %p1102 = pneg %p370
        $region82: #{tpu_custom_call.1} parent=71 // pred_check_branch
          %1104 = sbr.rel (%p1102) target = $region84
        $region83: #{tpu_custom_call.1} parent=71 // pred_region
          %1106 = vsyncadd %s1083, 0
          %s1107 = smul.addr %s36, 4
          %s1108 = sadd.s32 %s37, %s1107
          %s1109 = smul.addr %s1108, 4
          %s1110 = scalar_lea.hbm %s14, %s1109
          %s1111 = sshll.u32 %s1086, 4
          %s1112 = int_to_ptr.vmem [resolvable:$true] %s1111
          %s1113 = sshll.u32 %s1110, 4
          %s1114 = int_to_ptr.hbm [resolvable:$true] %s1113
          %1119 = dma.vmem_to_hbm [thread:$0]  %s1112, 256, %s1114, %s1083, 64, 64, 4
        $region84: #{tpu_custom_call.1} parent=71 // pred_fallthru
          _
      $region72: #{tpu_custom_call.1} parent=5 // pred_fallthru
        _
      %p1120 = scmp.le.s32.totalorder 2, %s27
      // Predicated region
      $region85: #{tpu_custom_call.1} parent=5 // pred_check
        %p1121 = pneg %p1120
      $region86: #{tpu_custom_call.1} parent=5 // pred_check_branch
        %1123 = sbr.rel (%p1121) target = $region88
      $region87: #{tpu_custom_call.1} parent=5 // pred_region
        %s1124 = ssub.s32 %s27, 2
        // Predicated region
        $region89: #{tpu_custom_call.1} parent=87 // pred_check
          %p1125 = pneg %p348
        $region90: #{tpu_custom_call.1} parent=87 // pred_check_branch
          %1127 = sbr.rel (%p1125) target = $region92
        $region91: #{tpu_custom_call.1} parent=87 // pred_region
          %s1128 = sand.u32 %s333, 1
          %s1129 = scalar_lea.sflag [#allocation7], %s1128
          %s1130 = sand.u32 %s333, 1
          %s1131 = smul.addr %s1130, 4
          %s1132 = scalar_lea.vmem [#allocation6], %s1131
          %1134 = dma.done %s1129, 64
        $region92: #{tpu_custom_call.1} parent=87 // pred_fallthru
          _
        // Predicated region
        $region93: #{tpu_custom_call.1} parent=87 // pred_check
          %p1135 = pneg %p376
        $region94: #{tpu_custom_call.1} parent=87 // pred_check_branch
          %1137 = sbr.rel (%p1135) target = $region96
        $region95: #{tpu_custom_call.1} parent=87 // pred_region
          %s1138 = sand.u32 %s361, 1
          %s1139 = scalar_lea.sflag [#allocation9], %s1138
          %s1140 = sand.u32 %s361, 1
          %s1141 = smul.addr %s1140, 16
          %s1142 = scalar_lea.vmem [#allocation8], %s1141
          %1144 = dma.done %s1139, 256
        $region96: #{tpu_custom_call.1} parent=87 // pred_fallthru
          _
      $region88: #{tpu_custom_call.1} parent=5 // pred_fallthru
        _
    $region6: #{tpu_custom_call.1} parent=1 // loop_footer
      %s31 = sadd.s32 1, %s27
    $region7: #{tpu_custom_call.1} parent=1 // loop_footer_branch
      %26 = sbr.rel target = $region3
    $region8: #{tpu_custom_call.1} parent=1 // loop_exit
      _
    %1145 = vsyncpa [#allocation7], 1
    %s1146 = scalar_lea.sflag [#allocation7], 1
    %1147 = vsyncpa %s1146, 1
    %1148 = vsyncpa [#allocation9], 1
    %s1149 = scalar_lea.sflag [#allocation9], 1
    %1150 = vsyncpa %s1149, 1

</llo_original>
